<compile_context>
chip_gen: v6e
topology: v6e:2x2x1
jax: 0.10.0
libtpu: 0.0.40
codegen_flags: <defaults>
</compile_context>

<pallas_src>
import functools

import jax
import jax.numpy as jnp
from jax.experimental import pallas as pl
from jax.experimental.pallas import tpu as pltpu

_LANE = 128


def _round_up(x, m):
    return (x + m - 1) // m * m


def _pad_hw1(x):
    """Zero-pad a (N, H, W, C) *value* by 1 on H and W (stays in VMEM, no HBM copy)."""
    n, h, w, c = x.shape
    zr = jnp.zeros((n, 1, w, c), x.dtype)
    x = jnp.concatenate([zr, x, zr], axis=1)
    zc = jnp.zeros((n, h + 2, 1, c), x.dtype)
    return jnp.concatenate([zc, x, zc], axis=2)


def _basic_block_kernel(*refs, stride, nb, Ho, Wo, cin_p, cout_p, has_downsample,
                        n_phases):
    """One grid step = `nb` images, fully fused BasicBlock.

    inputs : n_phases activation slabs (bf16, lane-padded channels)
             w1 (9*cin_p, cout_p) bf16   s1,b1 (1, cout_p) f32
             w2 (9*cout_p, cout_p) bf16  s2,b2 (1, cout_p) f32
             [wd (cin_p, cout_p) bf16, sd,bd (1, cout_p) f32]   (downsample path)
    output : (nb, Ho, Wo, cout_p) f32
    """
    phase_refs = refs[:n_phases]
    w1_ref, s1_ref, b1_ref, w2_ref, s2_ref, b2_ref = refs[n_phases:n_phases + 6]
    if has_downsample:
        wd_ref, sd_ref, bd_ref = refs[n_phases + 6:n_phases + 9]
    out_ref = refs[-1]

    M = nb * Ho * Wo

    # ---- conv1 taps: unit-stride windows (no strided / int ref indexing anywhere) ----
    if stride == 1:
        xp = _pad_hw1(phase_refs[0][...])            # (nb, H+2, W+2, cin_p) bf16

        def tap(kh, kw):
            return xp[:, kh:kh + Ho, kw:kw + Wo, :]
    else:  # stride == 2: four even/odd phases of the padded input (built in the wrapper)
        ph = [phase_refs[i][...] for i in range(4)]  # phase (p, q) lives at index 2*p + q

        def tap(kh, kw):
            v = ph[2 * (kh % 2) + (kw % 2)]
            return v[:, kh // 2:kh // 2 + Ho, kw // 2:kw // 2 + Wo, :]

    # ---- conv1 as a single im2col matmul: (M, 9*cin_p) x (9*cin_p, cout_p) ----
    a1 = jnp.concatenate([tap(kh, kw) for kh in range(3) for kw in range(3)], axis=-1)
    a1 = a1.reshape(M, 9 * cin_p)                    # leading-dim merge only (lane dim intact)
    y1 = jnp.dot(a1, w1_ref[...], preferred_element_type=jnp.float32)
    y1 = jnp.maximum(y1 * s1_ref[...] + b1_ref[...], 0.0)           # BN1 + ReLU (f32)

    # ---- conv2 (3x3, stride 1, pad 1) as a second im2col matmul ----
    y1p = _pad_hw1(y1.reshape(nb, Ho, Wo, cout_p).astype(jnp.bfloat16))
    a2 = jnp.concatenate([y1p[:, kh:kh + Ho, kw:kw + Wo, :]
                          for kh in range(3) for kw in range(3)], axis=-1)
    a2 = a2.reshape(M, 9 * cout_p)
    y2 = jnp.dot(a2, w2_ref[...], preferred_element_type=jnp.float32)
    y2 = y2 * s2_ref[...] + b2_ref[...]                              # BN2 (f32)

    # ---- skip path: the conv1 center tap IS x subsampled by `stride` ----
    xc = tap(1, 1).reshape(M, cin_p)
    if has_downsample:
        skip = jnp.dot(xc, wd_ref[...], preferred_element_type=jnp.float32)
        skip = skip * sd_ref[...] + bd_ref[...]
    else:  # identity: cin_p == cout_p, stride == 1
        skip = xc.astype(jnp.float32)

    out = jnp.maximum(y2 + skip, 0.0)                                # residual + ReLU (f32)
    out_ref[...] = out.reshape(nb, Ho, Wo, cout_p).astype(out_ref.dtype)


def basic_block(x_nchw, params, stride, *, images_per_step=None):
    """Pallas BasicBlock. x_nchw: (N, Cin, H, W) f32 -> (N, Cout, Ho, Wo) f32."""
    assert stride in (1, 2)
    N, Cin, H, W = x_nchw.shape
    Cout = params["w1"].shape[-1]
    Ho = (H + 2 - 3) // stride + 1
    Wo = (W + 2 - 3) // stride + 1
    has_downsample = (stride != 1) or (Cin != Cout)
    if not has_downsample:
        assert Cin == Cout and stride == 1, "identity skip requires Cin==Cout, stride==1"

    cin_p = _round_up(Cin, _LANE)
    cout_p = _round_up(Cout, _LANE)
    nb = N if images_per_step is None else images_per_step
    assert N % nb == 0
    # TODO(synk): for large UNet feature maps add a spatial grid axis (output-row tiles
    #             with a 1-row halo) so per-step VMEM fits v7x/v5e budgets.

    # NCHW -> NHWC, bf16 MXU operands, channels zero-padded to a lane-dense 128 multiple.
    x = jnp.transpose(x_nchw, (0, 2, 3, 1)).astype(jnp.bfloat16)
    x = jnp.pad(x, ((0, 0), (0, 0), (0, 0), (0, cin_p - Cin)))

    if stride == 1:
        phases = [x]        # spatial halo is built inside the kernel (value-level)
    else:
        # even/odd phase split of the zero-padded input -> all in-kernel taps are unit-stride
        xsp = jnp.pad(x, ((0, 0), (1, 1), (1, 1), (0, 0)))
        phases = [xsp[:, p::2, q::2, :] for p in (0, 1) for q in (0, 1)]

    # weights in im2col layout (K = 9*C), channel-padded, bf16; folded BN params in f32.
    def prep_w3x3(w, ci, cip, co, cop):
        w = jnp.pad(w, ((0, 0), (0, 0), (0, cip - ci), (0, cop - co)))
        return w.astype(jnp.bfloat16).reshape(9 * cip, cop)

    def prep_vec(v):
        return jnp.pad(v.astype(jnp.float32), ((0, 0), (0, cout_p - Cout)))

    args = list(phases) + [
        prep_w3x3(params["w1"], Cin, cin_p, Cout, cout_p),
        prep_vec(params["s1"]), prep_vec(params["b1"]),
        prep_w3x3(params["w2"], Cout, cout_p, Cout, cout_p),
        prep_vec(params["s2"]), prep_vec(params["b2"]),
    ]
    if has_downsample:
        wd = jnp.pad(params["wd"], ((0, cin_p - Cin), (0, cout_p - Cout)))
        args += [wd.astype(jnp.bfloat16), prep_vec(params["sd"]), prep_vec(params["bd"])]

    def const_spec(a):
        nd = a.ndim
        return pl.BlockSpec(a.shape, lambda n, _nd=nd: (0,) * _nd)

    in_specs = [pl.BlockSpec((nb,) + tuple(ph.shape[1:]), lambda n: (n, 0, 0, 0))
                for ph in phases]
    in_specs += [const_spec(a) for a in args[len(phases):]]

    kernel = functools.partial(
        _basic_block_kernel, stride=stride, nb=nb, Ho=Ho, Wo=Wo,
        cin_p=cin_p, cout_p=cout_p, has_downsample=has_downsample,
        n_phases=len(phases))

    out = pl.pallas_call(
        kernel,
        out_shape=jax.ShapeDtypeStruct((N, Ho, Wo, cout_p), jnp.float32),
        grid=(N // nb,),
        in_specs=in_specs,
        out_specs=pl.BlockSpec((nb, Ho, Wo, cout_p), lambda n: (n, 0, 0, 0)),
        compiler_params=pltpu.CompilerParams(
            dimension_semantics=("parallel",),
            vmem_limit_bytes=32 * 1024 * 1024),
    )(*args)

    out = out[..., :Cout]                      # drop lane padding
    return jnp.transpose(out, (0, 3, 1, 2))    # NHWC -> NCHW


# ----------------------- deterministic parameter init -----------------------
def init_params(key, cin, cout, stride):
    ks = jax.random.split(key, 12)
    eps = 1e-5

    def bn_fold(kg, kb, km, kv, c):
        gamma = jax.random.uniform(kg, (c,), jnp.float32, 0.5, 1.5)
        beta = 0.1 * jax.random.normal(kb, (c,), jnp.float32)
        mean = 0.1 * jax.random.normal(km, (c,), jnp.float32)
        var = jax.random.uniform(kv, (c,), jnp.float32, 0.5, 1.5)
        scale = gamma * jax.lax.rsqrt(var + eps)
        bias = beta - mean * scale
        return scale.reshape(1, c), bias.reshape(1, c)

    p = {}
    p["w1"] = 0.1 * jax.random.normal(ks[0], (3, 3, cin, cout), jnp.float32)
    p["s1"], p["b1"] = bn_fold(ks[1], ks[2], ks[3], ks[4], cout)
    p["w2"] = 0.1 * jax.random.normal(ks[5], (3, 3, cout, cout), jnp.float32)
    p["s2"], p["b2"] = bn_fold(ks[6], ks[7], ks[8], ks[9], cout)
    if stride != 1 or cin != cout:
        p["wd"] = 0.1 * jax.random.normal(ks[10], (cin, cout), jnp.float32)
        kd = jax.random.split(ks[11], 4)
        p["sd"], p["bd"] = bn_fold(kd[0], kd[1], kd[2], kd[3], cout)
    return p


# --------------------------- pure-JAX reference ------------------------------
def ref_basic_block(x_nchw, p, stride):
    """f32 conv reference with the same bf16 operand rounding as the kernel."""
    dn = ("NHWC", "HWIO", "NHWC")
    q = lambda t: t.astype(jnp.bfloat16).astype(jnp.float32)
    x = q(jnp.transpose(x_nchw, (0, 2, 3, 1)))
    y = jax.lax.conv_general_dilated(x, q(p["w1"]), (stride, stride),
                                     ((1, 1), (1, 1)), dimension_numbers=dn)
    y = jnp.maximum(y * p["s1"][0] + p["b1"][0], 0.0)
    y = q(y)
    y = jax.lax.conv_general_dilated(y, q(p["w2"]), (1, 1),
                                     ((1, 1), (1, 1)), dimension_numbers=dn)
    y = y * p["s2"][0] + p["b2"][0]
    if "wd" in p:
        cin, cout = p["wd"].shape
        s = jax.lax.conv_general_dilated(x, q(p["wd"]).reshape(1, 1, cin, cout),
                                         (stride, stride), ((0, 0), (0, 0)),
                                         dimension_numbers=dn)
        s = s * p["sd"][0] + p["bd"][0]
    else:
        s = x
    y = jnp.maximum(y + s, 0.0)
    return jnp.transpose(y, (0, 3, 1, 2))


if __name__ == "__main__":
    key = jax.random.PRNGKey(0)
    kx1, kp1, kx2, kp2 = jax.random.split(key, 4)

    # Case 1: stage-transition block (stride=2, channel change -> 1x1 downsample skip).
    x1 = jax.random.normal(kx1, (2, 4, 16, 16), jnp.float32)  # NCHW
    p1 = init_params(kp1, 4, 8, 2)
    out1 = jax.block_until_ready(basic_block(x1, p1, stride=2))
    ref1 = ref_basic_block(x1, p1, stride=2)
    assert out1.shape == (2, 8, 8, 8), out1.shape
    assert jnp.allclose(out1, ref1, atol=2e-3, rtol=2e-3), \
        float(jnp.max(jnp.abs(out1 - ref1)))

    # Case 2: identity-skip block (stride=1, same channels).
    x2 = jax.random.normal(kx2, (2, 8, 16, 16), jnp.float32)  # NCHW
    p2 = init_params(kp2, 8, 8, 1)
    out2 = jax.block_until_ready(basic_block(x2, p2, stride=1))
    ref2 = ref_basic_block(x2, p2, stride=1)
    assert out2.shape == (2, 8, 16, 16), out2.shape
    assert jnp.allclose(out2, ref2, atol=2e-3, rtol=2e-3), \
        float(jnp.max(jnp.abs(out2 - ref2)))

    print("KERNEL_OK")
</pallas_src>

<mosaic_0001>
module attributes {stable_mosaic.version = 11 : i64} {
  func.func @_basic_block_kernel(%arg0: i32, %arg1: memref<2x9x9x128xbf16, #tpu.memory_space<vmem>>, %arg2: memref<2x9x9x128xbf16, #tpu.memory_space<vmem>>, %arg3: memref<2x9x9x128xbf16, #tpu.memory_space<vmem>>, %arg4: memref<2x9x9x128xbf16, #tpu.memory_space<vmem>>, %arg5: memref<1152x128xbf16, #tpu.memory_space<vmem>>, %arg6: memref<1x128xf32, #tpu.memory_space<vmem>>, %arg7: memref<1x128xf32, #tpu.memory_space<vmem>>, %arg8: memref<1152x128xbf16, #tpu.memory_space<vmem>>, %arg9: memref<1x128xf32, #tpu.memory_space<vmem>>, %arg10: memref<1x128xf32, #tpu.memory_space<vmem>>, %arg11: memref<128x128xbf16, #tpu.memory_space<vmem>>, %arg12: memref<1x128xf32, #tpu.memory_space<vmem>>, %arg13: memref<1x128xf32, #tpu.memory_space<vmem>>, %arg14: memref<2x8x8x128xf32, #tpu.memory_space<vmem>>) attributes {dimension_semantics = [#tpu.dimension_semantics<parallel>], iteration_bounds = array<i64: 1>, scalar_prefetch = 0 : i64, scratch_operands = 0 : i64, tpu.core_type = #tpu.core_type<tc>, window_params = [{transform_indices = @transform_0, window_bounds = array<i64: 2, 9, 9, 128>}, {transform_indices = @transform_1, window_bounds = array<i64: 2, 9, 9, 128>}, {transform_indices = @transform_2, window_bounds = array<i64: 2, 9, 9, 128>}, {transform_indices = @transform_3, window_bounds = array<i64: 2, 9, 9, 128>}, {pipeline_mode = #tpu.pipeline_mode<synchronous>, transform_indices = @transform_4, window_bounds = array<i64: 1152, 128>}, {pipeline_mode = #tpu.pipeline_mode<synchronous>, transform_indices = @transform_5, window_bounds = array<i64: 1, 128>}, {pipeline_mode = #tpu.pipeline_mode<synchronous>, transform_indices = @transform_6, window_bounds = array<i64: 1, 128>}, {pipeline_mode = #tpu.pipeline_mode<synchronous>, transform_indices = @transform_7, window_bounds = array<i64: 1152, 128>}, {pipeline_mode = #tpu.pipeline_mode<synchronous>, transform_indices = @transform_8, window_bounds = array<i64: 1, 128>}, {pipeline_mode = #tpu.pipeline_mode<synchronous>, transform_indices = @transform_9, window_bounds = array<i64: 1, 128>}, {pipeline_mode = #tpu.pipeline_mode<synchronous>, transform_indices = @transform_10, window_bounds = array<i64: 128, 128>}, {pipeline_mode = #tpu.pipeline_mode<synchronous>, transform_indices = @transform_11, window_bounds = array<i64: 1, 128>}, {pipeline_mode = #tpu.pipeline_mode<synchronous>, transform_indices = @transform_12, window_bounds = array<i64: 1, 128>}, {transform_indices = @transform_13, window_bounds = array<i64: 2, 8, 8, 128>}]} {
    %c0 = arith.constant 0 : index
    %c0_0 = arith.constant 0 : index
    %c0_1 = arith.constant 0 : index
    %c0_2 = arith.constant 0 : index
    %0 = vector.load %arg1[%c0, %c0_0, %c0_1, %c0_2] : memref<2x9x9x128xbf16, #tpu.memory_space<vmem>>, vector<2x9x9x128xbf16>
    %c0_3 = arith.constant 0 : index
    %c0_4 = arith.constant 0 : index
    %c0_5 = arith.constant 0 : index
    %c0_6 = arith.constant 0 : index
    %1 = vector.load %arg2[%c0_3, %c0_4, %c0_5, %c0_6] : memref<2x9x9x128xbf16, #tpu.memory_space<vmem>>, vector<2x9x9x128xbf16>
    %c0_7 = arith.constant 0 : index
    %c0_8 = arith.constant 0 : index
    %c0_9 = arith.constant 0 : index
    %c0_10 = arith.constant 0 : index
    %2 = vector.load %arg3[%c0_7, %c0_8, %c0_9, %c0_10] : memref<2x9x9x128xbf16, #tpu.memory_space<vmem>>, vector<2x9x9x128xbf16>
    %c0_11 = arith.constant 0 : index
    %c0_12 = arith.constant 0 : index
    %c0_13 = arith.constant 0 : index
    %c0_14 = arith.constant 0 : index
    %3 = vector.load %arg4[%c0_11, %c0_12, %c0_13, %c0_14] : memref<2x9x9x128xbf16, #tpu.memory_space<vmem>>, vector<2x9x9x128xbf16>
    %4 = vector.extract_strided_slice %0 {offsets = [0, 0, 0, 0], sizes = [2, 8, 8, 128], strides = [1, 1, 1, 1]} : vector<2x9x9x128xbf16> to vector<2x8x8x128xbf16>
    %5 = vector.extract_strided_slice %1 {offsets = [0, 0, 0, 0], sizes = [2, 8, 8, 128], strides = [1, 1, 1, 1]} : vector<2x9x9x128xbf16> to vector<2x8x8x128xbf16>
    %6 = vector.extract_strided_slice %0 {offsets = [0, 0, 1, 0], sizes = [2, 8, 8, 128], strides = [1, 1, 1, 1]} : vector<2x9x9x128xbf16> to vector<2x8x8x128xbf16>
    %7 = vector.extract_strided_slice %2 {offsets = [0, 0, 0, 0], sizes = [2, 8, 8, 128], strides = [1, 1, 1, 1]} : vector<2x9x9x128xbf16> to vector<2x8x8x128xbf16>
    %8 = vector.extract_strided_slice %3 {offsets = [0, 0, 0, 0], sizes = [2, 8, 8, 128], strides = [1, 1, 1, 1]} : vector<2x9x9x128xbf16> to vector<2x8x8x128xbf16>
    %9 = vector.extract_strided_slice %2 {offsets = [0, 0, 1, 0], sizes = [2, 8, 8, 128], strides = [1, 1, 1, 1]} : vector<2x9x9x128xbf16> to vector<2x8x8x128xbf16>
    %10 = vector.extract_strided_slice %0 {offsets = [0, 1, 0, 0], sizes = [2, 8, 8, 128], strides = [1, 1, 1, 1]} : vector<2x9x9x128xbf16> to vector<2x8x8x128xbf16>
    %11 = vector.extract_strided_slice %1 {offsets = [0, 1, 0, 0], sizes = [2, 8, 8, 128], strides = [1, 1, 1, 1]} : vector<2x9x9x128xbf16> to vector<2x8x8x128xbf16>
    %12 = vector.extract_strided_slice %0 {offsets = [0, 1, 1, 0], sizes = [2, 8, 8, 128], strides = [1, 1, 1, 1]} : vector<2x9x9x128xbf16> to vector<2x8x8x128xbf16>
    %13 = tpu.concatenate %4, %5, %6, %7, %8, %9, %10, %11, %12 in 3 : vector<2x8x8x128xbf16>, vector<2x8x8x128xbf16>, vector<2x8x8x128xbf16>, vector<2x8x8x128xbf16>, vector<2x8x8x128xbf16>, vector<2x8x8x128xbf16>, vector<2x8x8x128xbf16>, vector<2x8x8x128xbf16>, vector<2x8x8x128xbf16> -> vector<2x8x8x1152xbf16>
    %14 = vector.shape_cast %13 : vector<2x8x8x1152xbf16> to vector<128x1152xbf16>
    %c0_15 = arith.constant 0 : index
    %c0_16 = arith.constant 0 : index
    %15 = vector.load %arg5[%c0_15, %c0_16] : memref<1152x128xbf16, #tpu.memory_space<vmem>>, vector<1152x128xbf16>
    %cst = arith.constant dense<0.000000e+00> : vector<128x128xf32>
    %16 = tpu.matmul %14, %15, %cst {dimension_numbers = #tpu.dot_dimension_numbers<[1], [0], [0], [1], [0, 0, 1, 1], [], []>} : vector<128x1152xbf16>, vector<1152x128xbf16>, vector<128x128xf32> -> vector<128x128xf32>
    %c0_17 = arith.constant 0 : index
    %c0_18 = arith.constant 0 : index
    %17 = vector.load %arg6[%c0_17, %c0_18] : memref<1x128xf32, #tpu.memory_space<vmem>>, vector<1x128xf32>
    %18 = vector.broadcast %17 : vector<1x128xf32> to vector<128x128xf32>
    %19 = arith.mulf %16, %18 : vector<128x128xf32>
    %c0_19 = arith.constant 0 : index
    %c0_20 = arith.constant 0 : index
    %20 = vector.load %arg7[%c0_19, %c0_20] : memref<1x128xf32, #tpu.memory_space<vmem>>, vector<1x128xf32>
    %21 = vector.broadcast %20 : vector<1x128xf32> to vector<128x128xf32>
    %22 = arith.addf %19, %21 : vector<128x128xf32>
    %cst_21 = arith.constant 0.000000e+00 : f32
    %23 = vector.broadcast %cst_21 : f32 to vector<128x128xf32>
    %24 = arith.maximumf %22, %23 : vector<128x128xf32>
    %25 = vector.shape_cast %24 : vector<128x128xf32> to vector<2x8x8x128xf32>
    %26 = arith.truncf %25 : vector<2x8x8x128xf32> to vector<2x8x8x128xbf16>
    %cst_22 = arith.constant 0.000000e+00 : bf16
    %27 = vector.broadcast %cst_22 : bf16 to vector<2x1x8x128xbf16>
    %28 = tpu.concatenate %27, %26, %27 in 1 : vector<2x1x8x128xbf16>, vector<2x8x8x128xbf16>, vector<2x1x8x128xbf16> -> vector<2x10x8x128xbf16>
    %cst_23 = arith.constant 0.000000e+00 : bf16
    %29 = vector.broadcast %cst_23 : bf16 to vector<2x10x1x128xbf16>
    %30 = tpu.concatenate %29, %28, %29 in 2 : vector<2x10x1x128xbf16>, vector<2x10x8x128xbf16>, vector<2x10x1x128xbf16> -> vector<2x10x10x128xbf16>
    %31 = vector.extract_strided_slice %30 {offsets = [0, 0, 0, 0], sizes = [2, 8, 8, 128], strides = [1, 1, 1, 1]} : vector<2x10x10x128xbf16> to vector<2x8x8x128xbf16>
    %32 = vector.extract_strided_slice %30 {offsets = [0, 0, 1, 0], sizes = [2, 8, 8, 128], strides = [1, 1, 1, 1]} : vector<2x10x10x128xbf16> to vector<2x8x8x128xbf16>
    %33 = vector.extract_strided_slice %30 {offsets = [0, 0, 2, 0], sizes = [2, 8, 8, 128], strides = [1, 1, 1, 1]} : vector<2x10x10x128xbf16> to vector<2x8x8x128xbf16>
    %34 = vector.extract_strided_slice %30 {offsets = [0, 1, 0, 0], sizes = [2, 8, 8, 128], strides = [1, 1, 1, 1]} : vector<2x10x10x128xbf16> to vector<2x8x8x128xbf16>
    %35 = vector.extract_strided_slice %30 {offsets = [0, 1, 1, 0], sizes = [2, 8, 8, 128], strides = [1, 1, 1, 1]} : vector<2x10x10x128xbf16> to vector<2x8x8x128xbf16>
    %36 = vector.extract_strided_slice %30 {offsets = [0, 1, 2, 0], sizes = [2, 8, 8, 128], strides = [1, 1, 1, 1]} : vector<2x10x10x128xbf16> to vector<2x8x8x128xbf16>
    %37 = vector.extract_strided_slice %30 {offsets = [0, 2, 0, 0], sizes = [2, 8, 8, 128], strides = [1, 1, 1, 1]} : vector<2x10x10x128xbf16> to vector<2x8x8x128xbf16>
    %38 = vector.extract_strided_slice %30 {offsets = [0, 2, 1, 0], sizes = [2, 8, 8, 128], strides = [1, 1, 1, 1]} : vector<2x10x10x128xbf16> to vector<2x8x8x128xbf16>
    %39 = vector.extract_strided_slice %30 {offsets = [0, 2, 2, 0], sizes = [2, 8, 8, 128], strides = [1, 1, 1, 1]} : vector<2x10x10x128xbf16> to vector<2x8x8x128xbf16>
    %40 = tpu.concatenate %31, %32, %33, %34, %35, %36, %37, %38, %39 in 3 : vector<2x8x8x128xbf16>, vector<2x8x8x128xbf16>, vector<2x8x8x128xbf16>, vector<2x8x8x128xbf16>, vector<2x8x8x128xbf16>, vector<2x8x8x128xbf16>, vector<2x8x8x128xbf16>, vector<2x8x8x128xbf16>, vector<2x8x8x128xbf16> -> vector<2x8x8x1152xbf16>
    %41 = vector.shape_cast %40 : vector<2x8x8x1152xbf16> to vector<128x1152xbf16>
    %c0_24 = arith.constant 0 : index
    %c0_25 = arith.constant 0 : index
    %42 = vector.load %arg8[%c0_24, %c0_25] : memref<1152x128xbf16, #tpu.memory_space<vmem>>, vector<1152x128xbf16>
    %cst_26 = arith.constant dense<0.000000e+00> : vector<128x128xf32>
    %43 = tpu.matmul %41, %42, %cst_26 {dimension_numbers = #tpu.dot_dimension_numbers<[1], [0], [0], [1], [0, 0, 1, 1], [], []>} : vector<128x1152xbf16>, vector<1152x128xbf16>, vector<128x128xf32> -> vector<128x128xf32>
    %c0_27 = arith.constant 0 : index
    %c0_28 = arith.constant 0 : index
    %44 = vector.load %arg9[%c0_27, %c0_28] : memref<1x128xf32, #tpu.memory_space<vmem>>, vector<1x128xf32>
    %45 = vector.broadcast %44 : vector<1x128xf32> to vector<128x128xf32>
    %46 = arith.mulf %43, %45 : vector<128x128xf32>
    %c0_29 = arith.constant 0 : index
    %c0_30 = arith.constant 0 : index
    %47 = vector.load %arg10[%c0_29, %c0_30] : memref<1x128xf32, #tpu.memory_space<vmem>>, vector<1x128xf32>
    %48 = vector.broadcast %47 : vector<1x128xf32> to vector<128x128xf32>
    %49 = arith.addf %46, %48 : vector<128x128xf32>
    %50 = vector.extract_strided_slice %3 {offsets = [0, 0, 0, 0], sizes = [2, 8, 8, 128], strides = [1, 1, 1, 1]} : vector<2x9x9x128xbf16> to vector<2x8x8x128xbf16>
    %51 = vector.shape_cast %50 : vector<2x8x8x128xbf16> to vector<128x128xbf16>
    %c0_31 = arith.constant 0 : index
    %c0_32 = arith.constant 0 : index
    %52 = vector.load %arg11[%c0_31, %c0_32] : memref<128x128xbf16, #tpu.memory_space<vmem>>, vector<128x128xbf16>
    %cst_33 = arith.constant dense<0.000000e+00> : vector<128x128xf32>
    %53 = tpu.matmul %51, %52, %cst_33 {dimension_numbers = #tpu.dot_dimension_numbers<[1], [0], [0], [1], [0, 0, 1, 1], [], []>} : vector<128x128xbf16>, vector<128x128xbf16>, vector<128x128xf32> -> vector<128x128xf32>
    %c0_34 = arith.constant 0 : index
    %c0_35 = arith.constant 0 : index
    %54 = vector.load %arg12[%c0_34, %c0_35] : memref<1x128xf32, #tpu.memory_space<vmem>>, vector<1x128xf32>
    %55 = vector.broadcast %54 : vector<1x128xf32> to vector<128x128xf32>
    %56 = arith.mulf %53, %55 : vector<128x128xf32>
    %c0_36 = arith.constant 0 : index
    %c0_37 = arith.constant 0 : index
    %57 = vector.load %arg13[%c0_36, %c0_37] : memref<1x128xf32, #tpu.memory_space<vmem>>, vector<1x128xf32>
    %58 = vector.broadcast %57 : vector<1x128xf32> to vector<128x128xf32>
    %59 = arith.addf %56, %58 : vector<128x128xf32>
    %60 = arith.addf %49, %59 : vector<128x128xf32>
    %cst_38 = arith.constant 0.000000e+00 : f32
    %61 = vector.broadcast %cst_38 : f32 to vector<128x128xf32>
    %62 = arith.maximumf %60, %61 : vector<128x128xf32>
    %63 = vector.shape_cast %62 : vector<128x128xf32> to vector<2x8x8x128xf32>
    %c0_39 = arith.constant 0 : index
    %c0_40 = arith.constant 0 : index
    %c0_41 = arith.constant 0 : index
    %c0_42 = arith.constant 0 : index
    %64 = vector.load %arg14[%c0_39, %c0_40, %c0_41, %c0_42] : memref<2x8x8x128xf32, #tpu.memory_space<vmem>>, vector<2x8x8x128xf32>
    tpu.vector_store %arg14[%c0_39, %c0_40, %c0_41, %c0_42], %63 {strides = array<i32>} : memref<2x8x8x128xf32, #tpu.memory_space<vmem>>, vector<2x8x8x128xf32>,
    return
  }
  func.func @transform_0(%arg0: i32) -> (i32, i32, i32, i32) {
    %c0_i32 = arith.constant 0 : i32
    %c0_i32_0 = arith.constant 0 : i32
    %c0_i32_1 = arith.constant 0 : i32
    %c0_i32_2 = arith.constant 0 : i32
    return %arg0, %c0_i32, %c0_i32_0, %c0_i32_1 : i32, i32, i32, i32
  }
  func.func @transform_1(%arg0: i32) -> (i32, i32, i32, i32) {
    %c0_i32 = arith.constant 0 : i32
    %c0_i32_0 = arith.constant 0 : i32
    %c0_i32_1 = arith.constant 0 : i32
    %c0_i32_2 = arith.constant 0 : i32
    return %arg0, %c0_i32, %c0_i32_0, %c0_i32_1 : i32, i32, i32, i32
  }
  func.func @transform_2(%arg0: i32) -> (i32, i32, i32, i32) {
    %c0_i32 = arith.constant 0 : i32
    %c0_i32_0 = arith.constant 0 : i32
    %c0_i32_1 = arith.constant 0 : i32
    %c0_i32_2 = arith.constant 0 : i32
    return %arg0, %c0_i32, %c0_i32_0, %c0_i32_1 : i32, i32, i32, i32
  }
  func.func @transform_3(%arg0: i32) -> (i32, i32, i32, i32) {
    %c0_i32 = arith.constant 0 : i32
    %c0_i32_0 = arith.constant 0 : i32
    %c0_i32_1 = arith.constant 0 : i32
    %c0_i32_2 = arith.constant 0 : i32
    return %arg0, %c0_i32, %c0_i32_0, %c0_i32_1 : i32, i32, i32, i32
  }
  func.func @transform_4(%arg0: i32) -> (i32, i32) {
    %c0_i32 = arith.constant 0 : i32
    %c0_i32_0 = arith.constant 0 : i32
    %c0_i32_1 = arith.constant 0 : i32
    return %c0_i32, %c0_i32_0 : i32, i32
  }
  func.func @transform_5(%arg0: i32) -> (i32, i32) {
    %c0_i32 = arith.constant 0 : i32
    %c0_i32_0 = arith.constant 0 : i32
    %c0_i32_1 = arith.constant 0 : i32
    return %c0_i32, %c0_i32_0 : i32, i32
  }
  func.func @transform_6(%arg0: i32) -> (i32, i32) {
    %c0_i32 = arith.constant 0 : i32
    %c0_i32_0 = arith.constant 0 : i32
    %c0_i32_1 = arith.constant 0 : i32
    return %c0_i32, %c0_i32_0 : i32, i32
  }
  func.func @transform_7(%arg0: i32) -> (i32, i32) {
    %c0_i32 = arith.constant 0 : i32
    %c0_i32_0 = arith.constant 0 : i32
    %c0_i32_1 = arith.constant 0 : i32
    return %c0_i32, %c0_i32_0 : i32, i32
  }
  func.func @transform_8(%arg0: i32) -> (i32, i32) {
    %c0_i32 = arith.constant 0 : i32
    %c0_i32_0 = arith.constant 0 : i32
    %c0_i32_1 = arith.constant 0 : i32
    return %c0_i32, %c0_i32_0 : i32, i32
  }
  func.func @transform_9(%arg0: i32) -> (i32, i32) {
    %c0_i32 = arith.constant 0 : i32
    %c0_i32_0 = arith.constant 0 : i32
    %c0_i32_1 = arith.constant 0 : i32
    return %c0_i32, %c0_i32_0 : i32, i32
  }
  func.func @transform_10(%arg0: i32) -> (i32, i32) {
    %c0_i32 = arith.constant 0 : i32
    %c0_i32_0 = arith.constant 0 : i32
    %c0_i32_1 = arith.constant 0 : i32
    return %c0_i32, %c0_i32_0 : i32, i32
  }
  func.func @transform_11(%arg0: i32) -> (i32, i32) {
    %c0_i32 = arith.constant 0 : i32
    %c0_i32_0 = arith.constant 0 : i32
    %c0_i32_1 = arith.constant 0 : i32
    return %c0_i32, %c0_i32_0 : i32, i32
  }
  func.func @transform_12(%arg0: i32) -> (i32, i32) {
    %c0_i32 = arith.constant 0 : i32
    %c0_i32_0 = arith.constant 0 : i32
    %c0_i32_1 = arith.constant 0 : i32
    return %c0_i32, %c0_i32_0 : i32, i32
  }
  func.func @transform_13(%arg0: i32) -> (i32, i32, i32, i32) {
    %c0_i32 = arith.constant 0 : i32
    %c0_i32_0 = arith.constant 0 : i32
    %c0_i32_1 = arith.constant 0 : i32
    %c0_i32_2 = arith.constant 0 : i32
    return %arg0, %c0_i32, %c0_i32_0, %c0_i32_1 : i32, i32, i32, i32
  }
}

</mosaic_0001>

<llo_original>
// kernel: tpu_custom_call.1
$region0: #{tpu_custom_call.1}
  #allocation0 [shape = 'u32[]', space=smem, size = 0x4, offset = 0x4, fixed_abs, tag = 'smem constant byte address 0x4 - core index']
  #allocation1 [shape = 'u32[144,128]{1,0:T(1,128)}', space=vmem, size = 0x12000, scoped, tag = 'internal scratch']
  %s0 = inlined_call_operand.vmem [shape: bf16[2,9,9,128], index: 0, kind: input, shape index: {}]
  %s1 = inlined_call_operand.vmem [shape: bf16[2,9,9,128], index: 1, kind: input, shape index: {}]
  %s2 = inlined_call_operand.vmem [shape: bf16[2,9,9,128], index: 2, kind: input, shape index: {}]
  %s3 = inlined_call_operand.vmem [shape: bf16[2,9,9,128], index: 3, kind: input, shape index: {}]
  %s4 = inlined_call_operand.vmem [shape: bf16[1152,128], index: 4, kind: input, shape index: {}]
  %s5 = inlined_call_operand.vmem [shape: f32[1,128], index: 5, kind: input, shape index: {}]
  %s6 = inlined_call_operand.vmem [shape: f32[1,128], index: 6, kind: input, shape index: {}]
  %s7 = inlined_call_operand.hbm [shape: bf16[1152,128], index: 7, kind: input, shape index: {}]
  %s8 = inlined_call_operand.vmem [shape: f32[1,128], index: 8, kind: input, shape index: {}]
  %s9 = inlined_call_operand.vmem [shape: f32[1,128], index: 9, kind: input, shape index: {}]
  %s10 = inlined_call_operand.vmem [shape: bf16[128,128], index: 10, kind: input, shape index: {}]
  %s11 = inlined_call_operand.vmem [shape: f32[1,128], index: 11, kind: input, shape index: {}]
  %s12 = inlined_call_operand.vmem [shape: f32[1,128], index: 12, kind: input, shape index: {}]
  %s13 = inlined_call_operand.hbm [shape: f32[2,8,8,128], index: 13, kind: output, shape index: {}]
  %s14 = sld [smem:[#allocation0]]
  $region66: #{tpu_custom_call.1} parent=0
    _
  %s16 = ssub.s32 1, %s14
  %s17 = scalar_select 0, %s16, %s14
  $region1: #{tpu_custom_call.1} parent=0
    #allocation2 [shape = 'u8[294912]{0}', space=vmem, size = 0x48000, scoped, tag = 'input window, operand 7, single buffered']
    #allocation3 [shape = 's32[1]{0}', space=sflag, size = 0x4, scoped, tag = 'scoped memory for tpu_custom_call.1']
    #allocation4 [shape = 's32[1]{0}', space=sflag, size = 0x4, scoped, tag = 'scoped memory for tpu_custom_call.1']
    #allocation5 [shape = 'u8[65536]{0}', space=vmem, size = 0x10000, scoped, tag = 'output window, operand 0, single buffered']
    %18 = vsyncpa [#allocation3], 0
    %19 = vsyncpa [#allocation4], 0
    // Predicated region
    $region2: #{tpu_custom_call.1} parent=1 // pred_check
      _
    $region3: #{tpu_custom_call.1} parent=1 // pred_check_branch
      %21 = sbr.rel (0) target = $region5
    $region4: #{tpu_custom_call.1} parent=1 // pred_region
      _
    $region5: #{tpu_custom_call.1} parent=1 // pred_fallthru
      _
    // Predicated region
    $region6: #{tpu_custom_call.1} parent=1 // pred_check
      _
    $region7: #{tpu_custom_call.1} parent=1 // pred_check_branch
      %23 = sbr.rel (0) target = $region9
    $region8: #{tpu_custom_call.1} parent=1 // pred_region
      _
    $region9: #{tpu_custom_call.1} parent=1 // pred_fallthru
      _
    // Predicated region
    $region10: #{tpu_custom_call.1} parent=1 // pred_check
      _
    $region11: #{tpu_custom_call.1} parent=1 // pred_check_branch
      %25 = sbr.rel (0) target = $region13
    $region12: #{tpu_custom_call.1} parent=1 // pred_region
      _
    $region13: #{tpu_custom_call.1} parent=1 // pred_fallthru
      _
    // Predicated region
    $region14: #{tpu_custom_call.1} parent=1 // pred_check
      _
    $region15: #{tpu_custom_call.1} parent=1 // pred_check_branch
      %27 = sbr.rel (0) target = $region17
    $region16: #{tpu_custom_call.1} parent=1 // pred_region
      _
    $region17: #{tpu_custom_call.1} parent=1 // pred_fallthru
      _
    // Predicated region
    $region18: #{tpu_custom_call.1} parent=1 // pred_check
      _
    $region19: #{tpu_custom_call.1} parent=1 // pred_check_branch
      %29 = sbr.rel (0) target = $region21
    $region20: #{tpu_custom_call.1} parent=1 // pred_region
      _
    $region21: #{tpu_custom_call.1} parent=1 // pred_fallthru
      _
    // Predicated region
    $region22: #{tpu_custom_call.1} parent=1 // pred_check
      _
    $region23: #{tpu_custom_call.1} parent=1 // pred_check_branch
      %31 = sbr.rel (0) target = $region25
    $region24: #{tpu_custom_call.1} parent=1 // pred_region
      _
    $region25: #{tpu_custom_call.1} parent=1 // pred_fallthru
      _
    // Predicated region
    $region26: #{tpu_custom_call.1} parent=1 // pred_check
      _
    $region27: #{tpu_custom_call.1} parent=1 // pred_check_branch
      %33 = sbr.rel (0) target = $region29
    $region28: #{tpu_custom_call.1} parent=1 // pred_region
      _
    $region29: #{tpu_custom_call.1} parent=1 // pred_fallthru
      _
    // Predicated region
    $region30: #{tpu_custom_call.1} parent=1 // pred_check
      _
    $region31: #{tpu_custom_call.1} parent=1 // pred_check_branch
      %35 = sbr.rel (0) target = $region33
    $region32: #{tpu_custom_call.1} parent=1 // pred_region
      %s37 = ssub.s32 9216, 9216
      %38 = vsyncadd [#allocation3], %s37
      %s39 = sshll.u32 [#allocation2], 4
      %s40 = int_to_ptr.vmem [resolvable:$true] %s39
      %45 = dma.hbm_to_vmem [thread:$0]  %s7, 9216, %s40, [#allocation3], 64, 64, 4
    $region33: #{tpu_custom_call.1} parent=1 // pred_fallthru
      _
    // Predicated region
    $region34: #{tpu_custom_call.1} parent=1 // pred_check
      _
    $region35: #{tpu_custom_call.1} parent=1 // pred_check_branch
      %47 = sbr.rel (0) target = $region37
    $region36: #{tpu_custom_call.1} parent=1 // pred_region
      _
    $region37: #{tpu_custom_call.1} parent=1 // pred_fallthru
      _
    // Predicated region
    $region38: #{tpu_custom_call.1} parent=1 // pred_check
      _
    $region39: #{tpu_custom_call.1} parent=1 // pred_check_branch
      %49 = sbr.rel (0) target = $region41
    $region40: #{tpu_custom_call.1} parent=1 // pred_region
      _
    $region41: #{tpu_custom_call.1} parent=1 // pred_fallthru
      _
    // Predicated region
    $region42: #{tpu_custom_call.1} parent=1 // pred_check
      _
    $region43: #{tpu_custom_call.1} parent=1 // pred_check_branch
      %51 = sbr.rel (0) target = $region45
    $region44: #{tpu_custom_call.1} parent=1 // pred_region
      _
    $region45: #{tpu_custom_call.1} parent=1 // pred_fallthru
      _
    // Predicated region
    $region46: #{tpu_custom_call.1} parent=1 // pred_check
      _
    $region47: #{tpu_custom_call.1} parent=1 // pred_check_branch
      %53 = sbr.rel (0) target = $region49
    $region48: #{tpu_custom_call.1} parent=1 // pred_region
      _
    $region49: #{tpu_custom_call.1} parent=1 // pred_fallthru
      _
    // Predicated region
    $region50: #{tpu_custom_call.1} parent=1 // pred_check
      _
    $region51: #{tpu_custom_call.1} parent=1 // pred_check_branch
      %55 = sbr.rel (0) target = $region53
    $region52: #{tpu_custom_call.1} parent=1 // pred_region
      _
    $region53: #{tpu_custom_call.1} parent=1 // pred_fallthru
      _
    // Predicated region
    $region54: #{tpu_custom_call.1} parent=1 // pred_check
      _
    $region55: #{tpu_custom_call.1} parent=1 // pred_check_branch
      %57 = sbr.rel (0) target = $region57
    $region56: #{tpu_custom_call.1} parent=1 // pred_region
      %58 = dma.done [#allocation3], 9216
    $region57: #{tpu_custom_call.1} parent=1 // pred_fallthru
      _
    %v60 = vld [vmem:[%s0] sm:$0xf]
    %v61 = vld [vmem:[%s0 + $0x4] sm:$0x1]
    %v62 = vld [vmem:[%s0 + $0x8] sm:$0xf]
    %v63 = vld [vmem:[%s0 + $0xc] sm:$0x1]
    %v64 = vld [vmem:[%s0 + $0x10] sm:$0xf]
    %v65 = vld [vmem:[%s0 + $0x14] sm:$0x1]
    %v66 = vld [vmem:[%s0 + $0x18] sm:$0xf]
    %v67 = vld [vmem:[%s0 + $0x1c] sm:$0x1]
    %v68 = vld [vmem:[%s0 + $0x20] sm:$0xf]
    %v69 = vld [vmem:[%s0 + $0x24] sm:$0x1]
    %v70 = vld [vmem:[%s0 + $0x28] sm:$0xf]
    %v71 = vld [vmem:[%s0 + $0x2c] sm:$0x1]
    %v72 = vld [vmem:[%s0 + $0x30] sm:$0xf]
    %v73 = vld [vmem:[%s0 + $0x34] sm:$0x1]
    %v74 = vld [vmem:[%s0 + $0x38] sm:$0xf]
    %v75 = vld [vmem:[%s0 + $0x3c] sm:$0x1]
    %v76 = vld [vmem:[%s0 + $0x40] sm:$0xf]
    %v77 = vld [vmem:[%s0 + $0x44] sm:$0x1]
    %v78 = vld [vmem:[%s0 + $0x48] sm:$0xf]
    %v79 = vld [vmem:[%s0 + $0x4c] sm:$0x1]
    %v80 = vld [vmem:[%s0 + $0x50] sm:$0xf]
    %v81 = vld [vmem:[%s0 + $0x54] sm:$0x1]
    %v82 = vld [vmem:[%s0 + $0x58] sm:$0xf]
    %v83 = vld [vmem:[%s0 + $0x5c] sm:$0x1]
    %v84 = vld [vmem:[%s0 + $0x60] sm:$0xf]
    %v85 = vld [vmem:[%s0 + $0x64] sm:$0x1]
    %v86 = vld [vmem:[%s0 + $0x68] sm:$0xf]
    %v87 = vld [vmem:[%s0 + $0x6c] sm:$0x1]
    %v88 = vld [vmem:[%s0 + $0x70] sm:$0xf]
    %v89 = vld [vmem:[%s0 + $0x74] sm:$0x1]
    %v90 = vld [vmem:[%s0 + $0x78] sm:$0xf]
    %v91 = vld [vmem:[%s0 + $0x7c] sm:$0x1]
    %v92 = vld [vmem:[%s0 + $0x80] sm:$0xf]
    %v93 = vld [vmem:[%s0 + $0x84] sm:$0x1]
    %v94 = vld [vmem:[%s0 + $0x88] sm:$0xf]
    %v95 = vld [vmem:[%s0 + $0x8c] sm:$0x1]
    %v96 = vld [vmem:[%s1] sm:$0xf]
    %v97 = vld [vmem:[%s1 + $0x8] sm:$0xf]
    %v98 = vld [vmem:[%s1 + $0x10] sm:$0xf]
    %v99 = vld [vmem:[%s1 + $0x18] sm:$0xf]
    %v100 = vld [vmem:[%s1 + $0x20] sm:$0xf]
    %v101 = vld [vmem:[%s1 + $0x28] sm:$0xf]
    %v102 = vld [vmem:[%s1 + $0x30] sm:$0xf]
    %v103 = vld [vmem:[%s1 + $0x38] sm:$0xf]
    %v104 = vld [vmem:[%s1 + $0x40] sm:$0xf]
    %v105 = vld [vmem:[%s1 + $0x48] sm:$0xf]
    %v106 = vld [vmem:[%s1 + $0x50] sm:$0xf]
    %v107 = vld [vmem:[%s1 + $0x58] sm:$0xf]
    %v108 = vld [vmem:[%s1 + $0x60] sm:$0xf]
    %v109 = vld [vmem:[%s1 + $0x68] sm:$0xf]
    %v110 = vld [vmem:[%s1 + $0x70] sm:$0xf]
    %v111 = vld [vmem:[%s1 + $0x78] sm:$0xf]
    %v112 = vld [vmem:[%s1 + $0x80] sm:$0xf]
    %v113 = vld [vmem:[%s1 + $0x88] sm:$0xf]
    %v114 = vld [vmem:[%s2] sm:$0xf]
    %v115 = vld [vmem:[%s2 + $0x4] sm:$0x1]
    %v116 = vld [vmem:[%s2 + $0x8] sm:$0xf]
    %v117 = vld [vmem:[%s2 + $0xc] sm:$0x1]
    %v118 = vld [vmem:[%s2 + $0x10] sm:$0xf]
    %v119 = vld [vmem:[%s2 + $0x14] sm:$0x1]
    %v120 = vld [vmem:[%s2 + $0x18] sm:$0xf]
    %v121 = vld [vmem:[%s2 + $0x1c] sm:$0x1]
    %v122 = vld [vmem:[%s2 + $0x20] sm:$0xf]
    %v123 = vld [vmem:[%s2 + $0x24] sm:$0x1]
    %v124 = vld [vmem:[%s2 + $0x28] sm:$0xf]
    %v125 = vld [vmem:[%s2 + $0x2c] sm:$0x1]
    %v126 = vld [vmem:[%s2 + $0x30] sm:$0xf]
    %v127 = vld [vmem:[%s2 + $0x34] sm:$0x1]
    %v128 = vld [vmem:[%s2 + $0x38] sm:$0xf]
    %v129 = vld [vmem:[%s2 + $0x3c] sm:$0x1]
    %v130 = vld [vmem:[%s2 + $0x48] sm:$0xf]
    %v131 = vld [vmem:[%s2 + $0x4c] sm:$0x1]
    %v132 = vld [vmem:[%s2 + $0x50] sm:$0xf]
    %v133 = vld [vmem:[%s2 + $0x54] sm:$0x1]
    %v134 = vld [vmem:[%s2 + $0x58] sm:$0xf]
    %v135 = vld [vmem:[%s2 + $0x5c] sm:$0x1]
    %v136 = vld [vmem:[%s2 + $0x60] sm:$0xf]
    %v137 = vld [vmem:[%s2 + $0x64] sm:$0x1]
    %v138 = vld [vmem:[%s2 + $0x68] sm:$0xf]
    %v139 = vld [vmem:[%s2 + $0x6c] sm:$0x1]
    %v140 = vld [vmem:[%s2 + $0x70] sm:$0xf]
    %v141 = vld [vmem:[%s2 + $0x74] sm:$0x1]
    %v142 = vld [vmem:[%s2 + $0x78] sm:$0xf]
    %v143 = vld [vmem:[%s2 + $0x7c] sm:$0x1]
    %v144 = vld [vmem:[%s2 + $0x80] sm:$0xf]
    %v145 = vld [vmem:[%s2 + $0x84] sm:$0x1]
    %v146 = vld [vmem:[%s3] sm:$0xf]
    %v147 = vld [vmem:[%s3 + $0x8] sm:$0xf]
    %v148 = vld [vmem:[%s3 + $0x10] sm:$0xf]
    %v149 = vld [vmem:[%s3 + $0x18] sm:$0xf]
    %v150 = vld [vmem:[%s3 + $0x20] sm:$0xf]
    %v151 = vld [vmem:[%s3 + $0x28] sm:$0xf]
    %v152 = vld [vmem:[%s3 + $0x30] sm:$0xf]
    %v153 = vld [vmem:[%s3 + $0x38] sm:$0xf]
    %v154 = vld [vmem:[%s3 + $0x48] sm:$0xf]
    %v155 = vld [vmem:[%s3 + $0x50] sm:$0xf]
    %v156 = vld [vmem:[%s3 + $0x58] sm:$0xf]
    %v157 = vld [vmem:[%s3 + $0x60] sm:$0xf]
    %v158 = vld [vmem:[%s3 + $0x68] sm:$0xf]
    %v159 = vld [vmem:[%s3 + $0x70] sm:$0xf]
    %v160 = vld [vmem:[%s3 + $0x78] sm:$0xf]
    %v161 = vld [vmem:[%s3 + $0x80] sm:$0xf]
    %v194 = vunpack.c.l.b16 %v60
    %v195 = vunpack.c.l.b16 %v61
    %v196 = vunpack.c.l.b16 %v62
    %v197 = vunpack.c.l.b16 %v63
    %v198 = vunpack.c.l.b16 %v64
    %v199 = vunpack.c.l.b16 %v65
    %v200 = vunpack.c.l.b16 %v66
    %v201 = vunpack.c.l.b16 %v67
    %v202 = vunpack.c.l.b16 %v68
    %v203 = vunpack.c.l.b16 %v69
    %v204 = vunpack.c.l.b16 %v70
    %v205 = vunpack.c.l.b16 %v71
    %v206 = vunpack.c.l.b16 %v72
    %v207 = vunpack.c.l.b16 %v73
    %v208 = vunpack.c.l.b16 %v74
    %v209 = vunpack.c.l.b16 %v75
    %v210 = vunpack.c.l.b16 %v78
    %v211 = vunpack.c.l.b16 %v79
    %v212 = vunpack.c.l.b16 %v80
    %v213 = vunpack.c.l.b16 %v81
    %v214 = vunpack.c.l.b16 %v82
    %v215 = vunpack.c.l.b16 %v83
    %v216 = vunpack.c.l.b16 %v84
    %v217 = vunpack.c.l.b16 %v85
    %v218 = vunpack.c.l.b16 %v86
    %v219 = vunpack.c.l.b16 %v87
    %v220 = vunpack.c.l.b16 %v88
    %v221 = vunpack.c.l.b16 %v89
    %v222 = vunpack.c.l.b16 %v90
    %v223 = vunpack.c.l.b16 %v91
    %v224 = vunpack.c.l.b16 %v92
    %v225 = vunpack.c.l.b16 %v93
    %v226 = vpack.c.b16 %v195, %v194
    %v227 = vpack.c.b16 %v197, %v196
    %v228 = vpack.c.b16 %v199, %v198
    %v229 = vpack.c.b16 %v201, %v200
    %v230 = vpack.c.b16 %v203, %v202
    %v231 = vpack.c.b16 %v205, %v204
    %v232 = vpack.c.b16 %v207, %v206
    %v233 = vpack.c.b16 %v209, %v208
    %v234 = vpack.c.b16 %v211, %v210
    %v235 = vpack.c.b16 %v213, %v212
    %v236 = vpack.c.b16 %v215, %v214
    %v237 = vpack.c.b16 %v217, %v216
    %v238 = vpack.c.b16 %v219, %v218
    %v239 = vpack.c.b16 %v221, %v220
    %v240 = vpack.c.b16 %v223, %v222
    %v241 = vpack.c.b16 %v225, %v224
    %v243 = vshrl.u32 %v226, 16
    %v245 = vshll.u32 %v226, 16
    %v247 = vrot.slane %v245, 1
    %v248 = vor.u32 %v243, %v247
    %v250 = vshrl.u32 %v227, 16
    %v252 = vshll.u32 %v227, 16
    %v254 = vrot.slane %v252, 1
    %v255 = vor.u32 %v250, %v254
    %v257 = vshrl.u32 %v228, 16
    %v259 = vshll.u32 %v228, 16
    %v261 = vrot.slane %v259, 1
    %v262 = vor.u32 %v257, %v261
    %v264 = vshrl.u32 %v229, 16
    %v266 = vshll.u32 %v229, 16
    %v268 = vrot.slane %v266, 1
    %v269 = vor.u32 %v264, %v268
    %v271 = vshrl.u32 %v230, 16
    %v273 = vshll.u32 %v230, 16
    %v275 = vrot.slane %v273, 1
    %v276 = vor.u32 %v271, %v275
    %v278 = vshrl.u32 %v231, 16
    %v280 = vshll.u32 %v231, 16
    %v282 = vrot.slane %v280, 1
    %v283 = vor.u32 %v278, %v282
    %v285 = vshrl.u32 %v232, 16
    %v287 = vshll.u32 %v232, 16
    %v289 = vrot.slane %v287, 1
    %v290 = vor.u32 %v285, %v289
    %v292 = vshrl.u32 %v233, 16
    %v294 = vshll.u32 %v233, 16
    %v296 = vrot.slane %v294, 1
    %v297 = vor.u32 %v292, %v296
    %v299 = vshrl.u32 %v234, 16
    %v301 = vshll.u32 %v234, 16
    %v303 = vrot.slane %v301, 1
    %v304 = vor.u32 %v299, %v303
    %v306 = vshrl.u32 %v235, 16
    %v308 = vshll.u32 %v235, 16
    %v310 = vrot.slane %v308, 1
    %v311 = vor.u32 %v306, %v310
    %v313 = vshrl.u32 %v236, 16
    %v315 = vshll.u32 %v236, 16
    %v317 = vrot.slane %v315, 1
    %v318 = vor.u32 %v313, %v317
    %v320 = vshrl.u32 %v237, 16
    %v322 = vshll.u32 %v237, 16
    %v324 = vrot.slane %v322, 1
    %v325 = vor.u32 %v320, %v324
    %v327 = vshrl.u32 %v238, 16
    %v329 = vshll.u32 %v238, 16
    %v331 = vrot.slane %v329, 1
    %v332 = vor.u32 %v327, %v331
    %v334 = vshrl.u32 %v239, 16
    %v336 = vshll.u32 %v239, 16
    %v338 = vrot.slane %v336, 1
    %v339 = vor.u32 %v334, %v338
    %v341 = vshrl.u32 %v240, 16
    %v343 = vshll.u32 %v240, 16
    %v345 = vrot.slane %v343, 1
    %v346 = vor.u32 %v341, %v345
    %v348 = vshrl.u32 %v241, 16
    %v350 = vshll.u32 %v241, 16
    %v352 = vrot.slane %v350, 1
    %v353 = vor.u32 %v348, %v352
    %v386 = vunpack.c.l.b16 %v114
    %v387 = vunpack.c.l.b16 %v115
    %v388 = vunpack.c.l.b16 %v116
    %v389 = vunpack.c.l.b16 %v117
    %v390 = vunpack.c.l.b16 %v118
    %v391 = vunpack.c.l.b16 %v119
    %v392 = vunpack.c.l.b16 %v120
    %v393 = vunpack.c.l.b16 %v121
    %v394 = vunpack.c.l.b16 %v122
    %v395 = vunpack.c.l.b16 %v123
    %v396 = vunpack.c.l.b16 %v124
    %v397 = vunpack.c.l.b16 %v125
    %v398 = vunpack.c.l.b16 %v126
    %v399 = vunpack.c.l.b16 %v127
    %v400 = vunpack.c.l.b16 %v128
    %v401 = vunpack.c.l.b16 %v129
    %v402 = vunpack.c.l.b16 %v130
    %v403 = vunpack.c.l.b16 %v131
    %v404 = vunpack.c.l.b16 %v132
    %v405 = vunpack.c.l.b16 %v133
    %v406 = vunpack.c.l.b16 %v134
    %v407 = vunpack.c.l.b16 %v135
    %v408 = vunpack.c.l.b16 %v136
    %v409 = vunpack.c.l.b16 %v137
    %v410 = vunpack.c.l.b16 %v138
    %v411 = vunpack.c.l.b16 %v139
    %v412 = vunpack.c.l.b16 %v140
    %v413 = vunpack.c.l.b16 %v141
    %v414 = vunpack.c.l.b16 %v142
    %v415 = vunpack.c.l.b16 %v143
    %v416 = vunpack.c.l.b16 %v144
    %v417 = vunpack.c.l.b16 %v145
    %v418 = vpack.c.b16 %v387, %v386
    %v419 = vpack.c.b16 %v389, %v388
    %v420 = vpack.c.b16 %v391, %v390
    %v421 = vpack.c.b16 %v393, %v392
    %v422 = vpack.c.b16 %v395, %v394
    %v423 = vpack.c.b16 %v397, %v396
    %v424 = vpack.c.b16 %v399, %v398
    %v425 = vpack.c.b16 %v401, %v400
    %v426 = vpack.c.b16 %v403, %v402
    %v427 = vpack.c.b16 %v405, %v404
    %v428 = vpack.c.b16 %v407, %v406
    %v429 = vpack.c.b16 %v409, %v408
    %v430 = vpack.c.b16 %v411, %v410
    %v431 = vpack.c.b16 %v413, %v412
    %v432 = vpack.c.b16 %v415, %v414
    %v433 = vpack.c.b16 %v417, %v416
    %v435 = vshrl.u32 %v418, 16
    %v437 = vshll.u32 %v418, 16
    %v439 = vrot.slane %v437, 1
    %v440 = vor.u32 %v435, %v439
    %v442 = vshrl.u32 %v419, 16
    %v444 = vshll.u32 %v419, 16
    %v446 = vrot.slane %v444, 1
    %v447 = vor.u32 %v442, %v446
    %v449 = vshrl.u32 %v420, 16
    %v451 = vshll.u32 %v420, 16
    %v453 = vrot.slane %v451, 1
    %v454 = vor.u32 %v449, %v453
    %v456 = vshrl.u32 %v421, 16
    %v458 = vshll.u32 %v421, 16
    %v460 = vrot.slane %v458, 1
    %v461 = vor.u32 %v456, %v460
    %v463 = vshrl.u32 %v422, 16
    %v465 = vshll.u32 %v422, 16
    %v467 = vrot.slane %v465, 1
    %v468 = vor.u32 %v463, %v467
    %v470 = vshrl.u32 %v423, 16
    %v472 = vshll.u32 %v423, 16
    %v474 = vrot.slane %v472, 1
    %v475 = vor.u32 %v470, %v474
    %v477 = vshrl.u32 %v424, 16
    %v479 = vshll.u32 %v424, 16
    %v481 = vrot.slane %v479, 1
    %v482 = vor.u32 %v477, %v481
    %v484 = vshrl.u32 %v425, 16
    %v486 = vshll.u32 %v425, 16
    %v488 = vrot.slane %v486, 1
    %v489 = vor.u32 %v484, %v488
    %v491 = vshrl.u32 %v426, 16
    %v493 = vshll.u32 %v426, 16
    %v495 = vrot.slane %v493, 1
    %v496 = vor.u32 %v491, %v495
    %v498 = vshrl.u32 %v427, 16
    %v500 = vshll.u32 %v427, 16
    %v502 = vrot.slane %v500, 1
    %v503 = vor.u32 %v498, %v502
    %v505 = vshrl.u32 %v428, 16
    %v507 = vshll.u32 %v428, 16
    %v509 = vrot.slane %v507, 1
    %v510 = vor.u32 %v505, %v509
    %v512 = vshrl.u32 %v429, 16
    %v514 = vshll.u32 %v429, 16
    %v516 = vrot.slane %v514, 1
    %v517 = vor.u32 %v512, %v516
    %v519 = vshrl.u32 %v430, 16
    %v521 = vshll.u32 %v430, 16
    %v523 = vrot.slane %v521, 1
    %v524 = vor.u32 %v519, %v523
    %v526 = vshrl.u32 %v431, 16
    %v528 = vshll.u32 %v431, 16
    %v530 = vrot.slane %v528, 1
    %v531 = vor.u32 %v526, %v530
    %v533 = vshrl.u32 %v432, 16
    %v535 = vshll.u32 %v432, 16
    %v537 = vrot.slane %v535, 1
    %v538 = vor.u32 %v533, %v537
    %v540 = vshrl.u32 %v433, 16
    %v542 = vshll.u32 %v433, 16
    %v544 = vrot.slane %v542, 1
    %v545 = vor.u32 %v540, %v544
    %v550 = vunpack.c.l.b16 %v76
    %v551 = vunpack.c.l.b16 %v77
    %v552 = vunpack.c.l.b16 %v94
    %v553 = vunpack.c.l.b16 %v95
    %v554 = vpack.c.b16 %v551, %v550
    %v555 = vpack.c.b16 %v553, %v552
    %v557 = vshrl.u32 %v554, 16
    %v559 = vshll.u32 %v554, 16
    %v561 = vrot.slane %v559, 1
    %v562 = vor.u32 %v557, %v561
    %v564 = vshrl.u32 %v555, 16
    %v566 = vshll.u32 %v555, 16
    %v568 = vrot.slane %v566, 1
    %v569 = vor.u32 %v564, %v568
    %v604 = vunpack.c.l.b16 %v96
    %v605 = vunpack.c.l.b16 %v248
    %v606 = vunpack.c.l.b16 %v146
    %v607 = vunpack.c.l.b16 %v440
    %v608 = vunpack.c.l.b16 %v97
    %v609 = vunpack.c.l.b16 %v255
    %v610 = vunpack.c.l.b16 %v147
    %v611 = vunpack.c.l.b16 %v447
    %v612 = vunpack.c.l.b16 %v98
    %v613 = vunpack.c.l.b16 %v262
    %v614 = vunpack.c.l.b16 %v148
    %v615 = vunpack.c.l.b16 %v454
    %v616 = vunpack.c.l.b16 %v99
    %v617 = vunpack.c.l.b16 %v269
    %v618 = vunpack.c.l.b16 %v149
    %v619 = vunpack.c.l.b16 %v461
    %v620 = vunpack.c.l.b16 %v100
    %v621 = vunpack.c.l.b16 %v276
    %v622 = vunpack.c.l.b16 %v150
    %v623 = vunpack.c.l.b16 %v468
    %v624 = vunpack.c.l.b16 %v101
    %v625 = vunpack.c.l.b16 %v283
    %v626 = vunpack.c.l.b16 %v151
    %v627 = vunpack.c.l.b16 %v475
    %v628 = vunpack.c.l.b16 %v102
    %v629 = vunpack.c.l.b16 %v290
    %v630 = vunpack.c.l.b16 %v152
    %v631 = vunpack.c.l.b16 %v482
    %v632 = vunpack.c.l.b16 %v103
    %v633 = vunpack.c.l.b16 %v297
    %v634 = vunpack.c.l.b16 %v153
    %v635 = vunpack.c.l.b16 %v489
    %v636 = vunpack.c.l.b16 %v104
    %v637 = vunpack.c.l.b16 %v562
    %v638 = vunpack.c.l.b16 %v105
    %v639 = vunpack.c.l.b16 %v304
    %v640 = vunpack.c.l.b16 %v154
    %v641 = vunpack.c.l.b16 %v496
    %v642 = vunpack.c.l.b16 %v106
    %v643 = vunpack.c.l.b16 %v311
    %v644 = vunpack.c.l.b16 %v155
    %v645 = vunpack.c.l.b16 %v503
    %v646 = vunpack.c.l.b16 %v107
    %v647 = vunpack.c.l.b16 %v318
    %v648 = vunpack.c.l.b16 %v156
    %v649 = vunpack.c.l.b16 %v510
    %v650 = vunpack.c.l.b16 %v108
    %v651 = vunpack.c.l.b16 %v325
    %v652 = vunpack.c.l.b16 %v157
    %v653 = vunpack.c.l.b16 %v517
    %v654 = vunpack.c.l.b16 %v109
    %v655 = vunpack.c.l.b16 %v332
    %v656 = vunpack.c.l.b16 %v158
    %v657 = vunpack.c.l.b16 %v524
    %v658 = vunpack.c.l.b16 %v110
    %v659 = vunpack.c.l.b16 %v339
    %v660 = vunpack.c.l.b16 %v159
    %v661 = vunpack.c.l.b16 %v531
    %v662 = vunpack.c.l.b16 %v111
    %v663 = vunpack.c.l.b16 %v346
    %v664 = vunpack.c.l.b16 %v160
    %v665 = vunpack.c.l.b16 %v538
    %v666 = vunpack.c.l.b16 %v112
    %v667 = vunpack.c.l.b16 %v353
    %v668 = vunpack.c.l.b16 %v161
    %v669 = vunpack.c.l.b16 %v545
    %v670 = vunpack.c.l.b16 %v113
    %v671 = vunpack.c.l.b16 %v569
    %v672 = vld [vmem:[%s4] sm:$0xf]
    %v673 = vld [vmem:[%s4 + $0x4] sm:$0xf]
    %v674 = vld [vmem:[%s4 + $0x8] sm:$0xf]
    %v675 = vld [vmem:[%s4 + $0xc] sm:$0xf]
    %v676 = vld [vmem:[%s4 + $0x10] sm:$0xf]
    %v677 = vld [vmem:[%s4 + $0x14] sm:$0xf]
    %v678 = vld [vmem:[%s4 + $0x18] sm:$0xf]
    %v679 = vld [vmem:[%s4 + $0x1c] sm:$0xf]
    %v680 = vld [vmem:[%s4 + $0x20] sm:$0xf]
    %v681 = vld [vmem:[%s4 + $0x24] sm:$0xf]
    %v682 = vld [vmem:[%s4 + $0x28] sm:$0xf]
    %v683 = vld [vmem:[%s4 + $0x2c] sm:$0xf]
    %v684 = vld [vmem:[%s4 + $0x30] sm:$0xf]
    %v685 = vld [vmem:[%s4 + $0x34] sm:$0xf]
    %v686 = vld [vmem:[%s4 + $0x38] sm:$0xf]
    %v687 = vld [vmem:[%s4 + $0x3c] sm:$0xf]
    %v688 = vld [vmem:[%s4 + $0x40] sm:$0xf]
    %v689 = vld [vmem:[%s4 + $0x44] sm:$0xf]
    %v690 = vld [vmem:[%s4 + $0x48] sm:$0xf]
    %v691 = vld [vmem:[%s4 + $0x4c] sm:$0xf]
    %v692 = vld [vmem:[%s4 + $0x50] sm:$0xf]
    %v693 = vld [vmem:[%s4 + $0x54] sm:$0xf]
    %v694 = vld [vmem:[%s4 + $0x58] sm:$0xf]
    %v695 = vld [vmem:[%s4 + $0x5c] sm:$0xf]
    %v696 = vld [vmem:[%s4 + $0x60] sm:$0xf]
    %v697 = vld [vmem:[%s4 + $0x64] sm:$0xf]
    %v698 = vld [vmem:[%s4 + $0x68] sm:$0xf]
    %v699 = vld [vmem:[%s4 + $0x6c] sm:$0xf]
    %v700 = vld [vmem:[%s4 + $0x70] sm:$0xf]
    %v701 = vld [vmem:[%s4 + $0x74] sm:$0xf]
    %v702 = vld [vmem:[%s4 + $0x78] sm:$0xf]
    %v703 = vld [vmem:[%s4 + $0x7c] sm:$0xf]
    %v704 = vld [vmem:[%s4 + $0x80] sm:$0xf]
    %v705 = vld [vmem:[%s4 + $0x84] sm:$0xf]
    %v706 = vld [vmem:[%s4 + $0x88] sm:$0xf]
    %v707 = vld [vmem:[%s4 + $0x8c] sm:$0xf]
    %v708 = vld [vmem:[%s4 + $0x90] sm:$0xf]
    %v709 = vld [vmem:[%s4 + $0x94] sm:$0xf]
    %v710 = vld [vmem:[%s4 + $0x98] sm:$0xf]
    %v711 = vld [vmem:[%s4 + $0x9c] sm:$0xf]
    %v712 = vld [vmem:[%s4 + $0xa0] sm:$0xf]
    %v713 = vld [vmem:[%s4 + $0xa4] sm:$0xf]
    %v714 = vld [vmem:[%s4 + $0xa8] sm:$0xf]
    %v715 = vld [vmem:[%s4 + $0xac] sm:$0xf]
    %v716 = vld [vmem:[%s4 + $0xb0] sm:$0xf]
    %v717 = vld [vmem:[%s4 + $0xb4] sm:$0xf]
    %v718 = vld [vmem:[%s4 + $0xb8] sm:$0xf]
    %v719 = vld [vmem:[%s4 + $0xbc] sm:$0xf]
    %v720 = vld [vmem:[%s4 + $0xc0] sm:$0xf]
    %v721 = vld [vmem:[%s4 + $0xc4] sm:$0xf]
    %v722 = vld [vmem:[%s4 + $0xc8] sm:$0xf]
    %v723 = vld [vmem:[%s4 + $0xcc] sm:$0xf]
    %v724 = vld [vmem:[%s4 + $0xd0] sm:$0xf]
    %v725 = vld [vmem:[%s4 + $0xd4] sm:$0xf]
    %v726 = vld [vmem:[%s4 + $0xd8] sm:$0xf]
    %v727 = vld [vmem:[%s4 + $0xdc] sm:$0xf]
    %v728 = vld [vmem:[%s4 + $0xe0] sm:$0xf]
    %v729 = vld [vmem:[%s4 + $0xe4] sm:$0xf]
    %v730 = vld [vmem:[%s4 + $0xe8] sm:$0xf]
    %v731 = vld [vmem:[%s4 + $0xec] sm:$0xf]
    %v732 = vld [vmem:[%s4 + $0xf0] sm:$0xf]
    %v733 = vld [vmem:[%s4 + $0xf4] sm:$0xf]
    %v734 = vld [vmem:[%s4 + $0xf8] sm:$0xf]
    %v735 = vld [vmem:[%s4 + $0xfc] sm:$0xf]
    %v736 = vld [vmem:[%s4 + $0x100] sm:$0xf]
    %v737 = vld [vmem:[%s4 + $0x104] sm:$0xf]
    %v738 = vld [vmem:[%s4 + $0x108] sm:$0xf]
    %v739 = vld [vmem:[%s4 + $0x10c] sm:$0xf]
    %v740 = vld [vmem:[%s4 + $0x110] sm:$0xf]
    %v741 = vld [vmem:[%s4 + $0x114] sm:$0xf]
    %v742 = vld [vmem:[%s4 + $0x118] sm:$0xf]
    %v743 = vld [vmem:[%s4 + $0x11c] sm:$0xf]
    %v744 = vld [vmem:[%s4 + $0x120] sm:$0xf]
    %v745 = vld [vmem:[%s4 + $0x124] sm:$0xf]
    %v746 = vld [vmem:[%s4 + $0x128] sm:$0xf]
    %v747 = vld [vmem:[%s4 + $0x12c] sm:$0xf]
    %v748 = vld [vmem:[%s4 + $0x130] sm:$0xf]
    %v749 = vld [vmem:[%s4 + $0x134] sm:$0xf]
    %v750 = vld [vmem:[%s4 + $0x138] sm:$0xf]
    %v751 = vld [vmem:[%s4 + $0x13c] sm:$0xf]
    %v752 = vld [vmem:[%s4 + $0x140] sm:$0xf]
    %v753 = vld [vmem:[%s4 + $0x144] sm:$0xf]
    %v754 = vld [vmem:[%s4 + $0x148] sm:$0xf]
    %v755 = vld [vmem:[%s4 + $0x14c] sm:$0xf]
    %v756 = vld [vmem:[%s4 + $0x150] sm:$0xf]
    %v757 = vld [vmem:[%s4 + $0x154] sm:$0xf]
    %v758 = vld [vmem:[%s4 + $0x158] sm:$0xf]
    %v759 = vld [vmem:[%s4 + $0x15c] sm:$0xf]
    %v760 = vld [vmem:[%s4 + $0x160] sm:$0xf]
    %v761 = vld [vmem:[%s4 + $0x164] sm:$0xf]
    %v762 = vld [vmem:[%s4 + $0x168] sm:$0xf]
    %v763 = vld [vmem:[%s4 + $0x16c] sm:$0xf]
    %v764 = vld [vmem:[%s4 + $0x170] sm:$0xf]
    %v765 = vld [vmem:[%s4 + $0x174] sm:$0xf]
    %v766 = vld [vmem:[%s4 + $0x178] sm:$0xf]
    %v767 = vld [vmem:[%s4 + $0x17c] sm:$0xf]
    %v768 = vld [vmem:[%s4 + $0x180] sm:$0xf]
    %v769 = vld [vmem:[%s4 + $0x184] sm:$0xf]
    %v770 = vld [vmem:[%s4 + $0x188] sm:$0xf]
    %v771 = vld [vmem:[%s4 + $0x18c] sm:$0xf]
    %v772 = vld [vmem:[%s4 + $0x190] sm:$0xf]
    %v773 = vld [vmem:[%s4 + $0x194] sm:$0xf]
    %v774 = vld [vmem:[%s4 + $0x198] sm:$0xf]
    %v775 = vld [vmem:[%s4 + $0x19c] sm:$0xf]
    %v776 = vld [vmem:[%s4 + $0x1a0] sm:$0xf]
    %v777 = vld [vmem:[%s4 + $0x1a4] sm:$0xf]
    %v778 = vld [vmem:[%s4 + $0x1a8] sm:$0xf]
    %v779 = vld [vmem:[%s4 + $0x1ac] sm:$0xf]
    %v780 = vld [vmem:[%s4 + $0x1b0] sm:$0xf]
    %v781 = vld [vmem:[%s4 + $0x1b4] sm:$0xf]
    %v782 = vld [vmem:[%s4 + $0x1b8] sm:$0xf]
    %v783 = vld [vmem:[%s4 + $0x1bc] sm:$0xf]
    %v784 = vld [vmem:[%s4 + $0x1c0] sm:$0xf]
    %v785 = vld [vmem:[%s4 + $0x1c4] sm:$0xf]
    %v786 = vld [vmem:[%s4 + $0x1c8] sm:$0xf]
    %v787 = vld [vmem:[%s4 + $0x1cc] sm:$0xf]
    %v788 = vld [vmem:[%s4 + $0x1d0] sm:$0xf]
    %v789 = vld [vmem:[%s4 + $0x1d4] sm:$0xf]
    %v790 = vld [vmem:[%s4 + $0x1d8] sm:$0xf]
    %v791 = vld [vmem:[%s4 + $0x1dc] sm:$0xf]
    %v792 = vld [vmem:[%s4 + $0x1e0] sm:$0xf]
    %v793 = vld [vmem:[%s4 + $0x1e4] sm:$0xf]
    %v794 = vld [vmem:[%s4 + $0x1e8] sm:$0xf]
    %v795 = vld [vmem:[%s4 + $0x1ec] sm:$0xf]
    %v796 = vld [vmem:[%s4 + $0x1f0] sm:$0xf]
    %v797 = vld [vmem:[%s4 + $0x1f4] sm:$0xf]
    %v798 = vld [vmem:[%s4 + $0x1f8] sm:$0xf]
    %v799 = vld [vmem:[%s4 + $0x1fc] sm:$0xf]
    %v800 = vld [vmem:[%s4 + $0x200] sm:$0xf]
    %v801 = vld [vmem:[%s4 + $0x204] sm:$0xf]
    %v802 = vld [vmem:[%s4 + $0x208] sm:$0xf]
    %v803 = vld [vmem:[%s4 + $0x20c] sm:$0xf]
    %v804 = vld [vmem:[%s4 + $0x210] sm:$0xf]
    %v805 = vld [vmem:[%s4 + $0x214] sm:$0xf]
    %v806 = vld [vmem:[%s4 + $0x218] sm:$0xf]
    %v807 = vld [vmem:[%s4 + $0x21c] sm:$0xf]
    %v808 = vld [vmem:[%s4 + $0x220] sm:$0xf]
    %v809 = vld [vmem:[%s4 + $0x224] sm:$0xf]
    %v810 = vld [vmem:[%s4 + $0x228] sm:$0xf]
    %v811 = vld [vmem:[%s4 + $0x22c] sm:$0xf]
    %v812 = vld [vmem:[%s4 + $0x230] sm:$0xf]
    %v813 = vld [vmem:[%s4 + $0x234] sm:$0xf]
    %v814 = vld [vmem:[%s4 + $0x238] sm:$0xf]
    %v815 = vld [vmem:[%s4 + $0x23c] sm:$0xf]
    %v816 = vpack.c.b16 %v196, %v194
    %v817 = vpack.c.b16 %v608, %v604
    %v818 = vpack.c.b16 %v609, %v605
    %v819 = vpack.c.b16 %v388, %v386
    %v820 = vpack.c.b16 %v610, %v606
    %v821 = vpack.c.b16 %v611, %v607
    %v822 = vpack.c.b16 %v198, %v196
    %v823 = vpack.c.b16 %v612, %v608
    %v824 = vpack.c.b16 %v613, %v609
    %v825 = vpack.c.b16 %v200, %v198
    %v826 = vpack.c.b16 %v616, %v612
    %v827 = vpack.c.b16 %v617, %v613
    %v828 = vpack.c.b16 %v392, %v390
    %v829 = vpack.c.b16 %v618, %v614
    %v830 = vpack.c.b16 %v619, %v615
    %v831 = vpack.c.b16 %v202, %v200
    %v832 = vpack.c.b16 %v620, %v616
    %v833 = vpack.c.b16 %v621, %v617
    %v834 = vpack.c.b16 %v204, %v202
    %v835 = vpack.c.b16 %v624, %v620
    %v836 = vpack.c.b16 %v625, %v621
    %v837 = vpack.c.b16 %v396, %v394
    %v838 = vpack.c.b16 %v626, %v622
    %v839 = vpack.c.b16 %v627, %v623
    %v840 = vpack.c.b16 %v206, %v204
    %v841 = vpack.c.b16 %v628, %v624
    %v842 = vpack.c.b16 %v629, %v625
    %v843 = vpack.c.b16 %v208, %v206
    %v844 = vpack.c.b16 %v632, %v628
    %v845 = vpack.c.b16 %v633, %v629
    %v846 = vpack.c.b16 %v400, %v398
    %v847 = vpack.c.b16 %v634, %v630
    %v848 = vpack.c.b16 %v635, %v631
    %v849 = vpack.c.b16 %v550, %v208
    %v850 = vpack.c.b16 %v636, %v632
    %v851 = vpack.c.b16 %v637, %v633
    %v852 = vpack.c.b16 %v212, %v210
    %v853 = vpack.c.b16 %v642, %v638
    %v854 = vpack.c.b16 %v643, %v639
    %v855 = vpack.c.b16 %v404, %v402
    %v856 = vpack.c.b16 %v644, %v640
    %v857 = vpack.c.b16 %v645, %v641
    %v858 = vpack.c.b16 %v214, %v212
    %v859 = vpack.c.b16 %v646, %v642
    %v860 = vpack.c.b16 %v647, %v643
    %v861 = vpack.c.b16 %v216, %v214
    %v862 = vpack.c.b16 %v650, %v646
    %v863 = vpack.c.b16 %v651, %v647
    %v864 = vpack.c.b16 %v408, %v406
    %v865 = vpack.c.b16 %v652, %v648
    %v866 = vpack.c.b16 %v653, %v649
    %v867 = vpack.c.b16 %v218, %v216
    %v868 = vpack.c.b16 %v654, %v650
    %v869 = vpack.c.b16 %v655, %v651
    %v870 = vpack.c.b16 %v220, %v218
    %v871 = vpack.c.b16 %v658, %v654
    %v872 = vpack.c.b16 %v659, %v655
    %v873 = vpack.c.b16 %v412, %v410
    %v874 = vpack.c.b16 %v660, %v656
    %v875 = vpack.c.b16 %v661, %v657
    %v876 = vpack.c.b16 %v222, %v220
    %v877 = vpack.c.b16 %v662, %v658
    %v878 = vpack.c.b16 %v663, %v659
    %v879 = vpack.c.b16 %v224, %v222
    %v880 = vpack.c.b16 %v666, %v662
    %v881 = vpack.c.b16 %v667, %v663
    %v882 = vpack.c.b16 %v416, %v414
    %v883 = vpack.c.b16 %v668, %v664
    %v884 = vpack.c.b16 %v669, %v665
    %v885 = vpack.c.b16 %v552, %v224
    %v886 = vpack.c.b16 %v670, %v666
    %v887 = vpack.c.b16 %v671, %v667
    %v1104 = vunpack.c.l.b16 %v672
    %v1105 = vunpack.c.l.b16 %v673
    %v1106 = vunpack.c.l.b16 %v674
    %v1107 = vunpack.c.l.b16 %v675
    %v1108 = vunpack.c.l.b16 %v676
    %v1109 = vunpack.c.l.b16 %v677
    %v1110 = vunpack.c.l.b16 %v678
    %v1111 = vunpack.c.l.b16 %v679
    %v1112 = vunpack.c.l.b16 %v680
    %v1113 = vunpack.c.l.b16 %v681
    %v1114 = vunpack.c.l.b16 %v682
    %v1115 = vunpack.c.l.b16 %v683
    %v1116 = vunpack.c.l.b16 %v684
    %v1117 = vunpack.c.l.b16 %v685
    %v1118 = vunpack.c.l.b16 %v686
    %v1119 = vunpack.c.l.b16 %v687
    %v1120 = vunpack.c.l.b16 %v688
    %v1121 = vunpack.c.l.b16 %v689
    %v1122 = vunpack.c.l.b16 %v690
    %v1123 = vunpack.c.l.b16 %v691
    %v1124 = vunpack.c.l.b16 %v692
    %v1125 = vunpack.c.l.b16 %v693
    %v1126 = vunpack.c.l.b16 %v694
    %v1127 = vunpack.c.l.b16 %v695
    %v1128 = vunpack.c.l.b16 %v696
    %v1129 = vunpack.c.l.b16 %v697
    %v1130 = vunpack.c.l.b16 %v698
    %v1131 = vunpack.c.l.b16 %v699
    %v1132 = vunpack.c.l.b16 %v700
    %v1133 = vunpack.c.l.b16 %v701
    %v1134 = vunpack.c.l.b16 %v702
    %v1135 = vunpack.c.l.b16 %v703
    %v1136 = vunpack.c.l.b16 %v704
    %v1137 = vunpack.c.l.b16 %v705
    %v1138 = vunpack.c.l.b16 %v706
    %v1139 = vunpack.c.l.b16 %v707
    %v1140 = vunpack.c.l.b16 %v708
    %v1141 = vunpack.c.l.b16 %v709
    %v1142 = vunpack.c.l.b16 %v710
    %v1143 = vunpack.c.l.b16 %v711
    %v1144 = vunpack.c.l.b16 %v712
    %v1145 = vunpack.c.l.b16 %v713
    %v1146 = vunpack.c.l.b16 %v714
    %v1147 = vunpack.c.l.b16 %v715
    %v1148 = vunpack.c.l.b16 %v716
    %v1149 = vunpack.c.l.b16 %v717
    %v1150 = vunpack.c.l.b16 %v718
    %v1151 = vunpack.c.l.b16 %v719
    %v1152 = vunpack.c.l.b16 %v720
    %v1153 = vunpack.c.l.b16 %v721
    %v1154 = vunpack.c.l.b16 %v722
    %v1155 = vunpack.c.l.b16 %v723
    %v1156 = vunpack.c.l.b16 %v724
    %v1157 = vunpack.c.l.b16 %v725
    %v1158 = vunpack.c.l.b16 %v726
    %v1159 = vunpack.c.l.b16 %v727
    %v1160 = vunpack.c.l.b16 %v728
    %v1161 = vunpack.c.l.b16 %v729
    %v1162 = vunpack.c.l.b16 %v730
    %v1163 = vunpack.c.l.b16 %v731
    %v1164 = vunpack.c.l.b16 %v732
    %v1165 = vunpack.c.l.b16 %v733
    %v1166 = vunpack.c.l.b16 %v734
    %v1167 = vunpack.c.l.b16 %v735
    %v1168 = vunpack.c.l.b16 %v736
    %v1169 = vunpack.c.l.b16 %v737
    %v1170 = vunpack.c.l.b16 %v738
    %v1171 = vunpack.c.l.b16 %v739
    %v1172 = vunpack.c.l.b16 %v740
    %v1173 = vunpack.c.l.b16 %v741
    %v1174 = vunpack.c.l.b16 %v742
    %v1175 = vunpack.c.l.b16 %v743
    %v1176 = vunpack.c.l.b16 %v744
    %v1177 = vunpack.c.l.b16 %v745
    %v1178 = vunpack.c.l.b16 %v746
    %v1179 = vunpack.c.l.b16 %v747
    %v1180 = vunpack.c.l.b16 %v748
    %v1181 = vunpack.c.l.b16 %v749
    %v1182 = vunpack.c.l.b16 %v750
    %v1183 = vunpack.c.l.b16 %v751
    %v1184 = vunpack.c.l.b16 %v752
    %v1185 = vunpack.c.l.b16 %v753
    %v1186 = vunpack.c.l.b16 %v754
    %v1187 = vunpack.c.l.b16 %v755
    %v1188 = vunpack.c.l.b16 %v756
    %v1189 = vunpack.c.l.b16 %v757
    %v1190 = vunpack.c.l.b16 %v758
    %v1191 = vunpack.c.l.b16 %v759
    %v1192 = vunpack.c.l.b16 %v760
    %v1193 = vunpack.c.l.b16 %v761
    %v1194 = vunpack.c.l.b16 %v762
    %v1195 = vunpack.c.l.b16 %v763
    %v1196 = vunpack.c.l.b16 %v764
    %v1197 = vunpack.c.l.b16 %v765
    %v1198 = vunpack.c.l.b16 %v766
    %v1199 = vunpack.c.l.b16 %v767
    %v1200 = vunpack.c.l.b16 %v768
    %v1201 = vunpack.c.l.b16 %v769
    %v1202 = vunpack.c.l.b16 %v770
    %v1203 = vunpack.c.l.b16 %v771
    %v1204 = vunpack.c.l.b16 %v772
    %v1205 = vunpack.c.l.b16 %v773
    %v1206 = vunpack.c.l.b16 %v774
    %v1207 = vunpack.c.l.b16 %v775
    %v1208 = vunpack.c.l.b16 %v776
    %v1209 = vunpack.c.l.b16 %v777
    %v1210 = vunpack.c.l.b16 %v778
    %v1211 = vunpack.c.l.b16 %v779
    %v1212 = vunpack.c.l.b16 %v780
    %v1213 = vunpack.c.l.b16 %v781
    %v1214 = vunpack.c.l.b16 %v782
    %v1215 = vunpack.c.l.b16 %v783
    %v1216 = vunpack.c.l.b16 %v784
    %v1217 = vunpack.c.l.b16 %v785
    %v1218 = vunpack.c.l.b16 %v786
    %v1219 = vunpack.c.l.b16 %v787
    %v1220 = vunpack.c.l.b16 %v788
    %v1221 = vunpack.c.l.b16 %v789
    %v1222 = vunpack.c.l.b16 %v790
    %v1223 = vunpack.c.l.b16 %v791
    %v1224 = vunpack.c.l.b16 %v792
    %v1225 = vunpack.c.l.b16 %v793
    %v1226 = vunpack.c.l.b16 %v794
    %v1227 = vunpack.c.l.b16 %v795
    %v1228 = vunpack.c.l.b16 %v796
    %v1229 = vunpack.c.l.b16 %v797
    %v1230 = vunpack.c.l.b16 %v798
    %v1231 = vunpack.c.l.b16 %v799
    %v1232 = vunpack.c.l.b16 %v800
    %v1233 = vunpack.c.l.b16 %v801
    %v1234 = vunpack.c.l.b16 %v802
    %v1235 = vunpack.c.l.b16 %v803
    %v1236 = vunpack.c.l.b16 %v804
    %v1237 = vunpack.c.l.b16 %v805
    %v1238 = vunpack.c.l.b16 %v806
    %v1239 = vunpack.c.l.b16 %v807
    %v1240 = vunpack.c.l.b16 %v808
    %v1241 = vunpack.c.l.b16 %v809
    %v1242 = vunpack.c.l.b16 %v810
    %v1243 = vunpack.c.l.b16 %v811
    %v1244 = vunpack.c.l.b16 %v812
    %v1245 = vunpack.c.l.b16 %v813
    %v1246 = vunpack.c.l.b16 %v814
    %v1247 = vunpack.c.l.b16 %v815
    %v1248 = vpack.c.b16 %v1105, %v1104
    %v1249 = vpack.c.b16 %v1107, %v1106
    %v1250 = vpack.c.b16 %v1109, %v1108
    %v1251 = vpack.c.b16 %v1111, %v1110
    %v1252 = vpack.c.b16 %v1113, %v1112
    %v1253 = vpack.c.b16 %v1115, %v1114
    %v1254 = vpack.c.b16 %v1117, %v1116
    %v1255 = vpack.c.b16 %v1119, %v1118
    %v1256 = vpack.c.b16 %v1121, %v1120
    %v1257 = vpack.c.b16 %v1123, %v1122
    %v1258 = vpack.c.b16 %v1125, %v1124
    %v1259 = vpack.c.b16 %v1127, %v1126
    %v1260 = vpack.c.b16 %v1129, %v1128
    %v1261 = vpack.c.b16 %v1131, %v1130
    %v1262 = vpack.c.b16 %v1133, %v1132
    %v1263 = vpack.c.b16 %v1135, %v1134
    %v1264 = vpack.c.b16 %v1137, %v1136
    %v1265 = vpack.c.b16 %v1139, %v1138
    %v1266 = vpack.c.b16 %v1141, %v1140
    %v1267 = vpack.c.b16 %v1143, %v1142
    %v1268 = vpack.c.b16 %v1145, %v1144
    %v1269 = vpack.c.b16 %v1147, %v1146
    %v1270 = vpack.c.b16 %v1149, %v1148
    %v1271 = vpack.c.b16 %v1151, %v1150
    %v1272 = vpack.c.b16 %v1153, %v1152
    %v1273 = vpack.c.b16 %v1155, %v1154
    %v1274 = vpack.c.b16 %v1157, %v1156
    %v1275 = vpack.c.b16 %v1159, %v1158
    %v1276 = vpack.c.b16 %v1161, %v1160
    %v1277 = vpack.c.b16 %v1163, %v1162
    %v1278 = vpack.c.b16 %v1165, %v1164
    %v1279 = vpack.c.b16 %v1167, %v1166
    %v1280 = vpack.c.b16 %v1169, %v1168
    %v1281 = vpack.c.b16 %v1171, %v1170
    %v1282 = vpack.c.b16 %v1173, %v1172
    %v1283 = vpack.c.b16 %v1175, %v1174
    %v1284 = vpack.c.b16 %v1177, %v1176
    %v1285 = vpack.c.b16 %v1179, %v1178
    %v1286 = vpack.c.b16 %v1181, %v1180
    %v1287 = vpack.c.b16 %v1183, %v1182
    %v1288 = vpack.c.b16 %v1185, %v1184
    %v1289 = vpack.c.b16 %v1187, %v1186
    %v1290 = vpack.c.b16 %v1189, %v1188
    %v1291 = vpack.c.b16 %v1191, %v1190
    %v1292 = vpack.c.b16 %v1193, %v1192
    %v1293 = vpack.c.b16 %v1195, %v1194
    %v1294 = vpack.c.b16 %v1197, %v1196
    %v1295 = vpack.c.b16 %v1199, %v1198
    %v1296 = vpack.c.b16 %v1201, %v1200
    %v1297 = vpack.c.b16 %v1203, %v1202
    %v1298 = vpack.c.b16 %v1205, %v1204
    %v1299 = vpack.c.b16 %v1207, %v1206
    %v1300 = vpack.c.b16 %v1209, %v1208
    %v1301 = vpack.c.b16 %v1211, %v1210
    %v1302 = vpack.c.b16 %v1213, %v1212
    %v1303 = vpack.c.b16 %v1215, %v1214
    %v1304 = vpack.c.b16 %v1217, %v1216
    %v1305 = vpack.c.b16 %v1219, %v1218
    %v1306 = vpack.c.b16 %v1221, %v1220
    %v1307 = vpack.c.b16 %v1223, %v1222
    %v1308 = vpack.c.b16 %v1225, %v1224
    %v1309 = vpack.c.b16 %v1227, %v1226
    %v1310 = vpack.c.b16 %v1229, %v1228
    %v1311 = vpack.c.b16 %v1231, %v1230
    %v1312 = vpack.c.b16 %v1233, %v1232
    %v1313 = vpack.c.b16 %v1235, %v1234
    %v1314 = vpack.c.b16 %v1237, %v1236
    %v1315 = vpack.c.b16 %v1239, %v1238
    %v1316 = vpack.c.b16 %v1241, %v1240
    %v1317 = vpack.c.b16 %v1243, %v1242
    %v1318 = vpack.c.b16 %v1245, %v1244
    %v1319 = vpack.c.b16 %v1247, %v1246
    %1392 = vmatprep.subr.bf16.mxu0 0
    %1393 = vmatpush1.bf16.msra.mxu0 %v1255
    %1394 = vmatprep.subr.bf16.mxu0 0
    %1395 = vmatpush1.bf16.msra.mxu0 %v1254
    %1396 = vmatprep.subr.bf16.mxu0 0
    %1397 = vmatpush1.bf16.msra.mxu0 %v1253
    %1398 = vmatprep.subr.bf16.mxu0 0
    %1399 = vmatpush1.bf16.msra.mxu0 %v1252
    %1400 = vmatprep.subr.bf16.mxu0 0
    %1401 = vmatpush1.bf16.msra.mxu0 %v1251
    %1402 = vmatprep.subr.bf16.mxu0 0
    %1403 = vmatpush1.bf16.msra.mxu0 %v1250
    %1404 = vmatprep.subr.bf16.mxu0 0
    %1405 = vmatpush1.bf16.msra.mxu0 %v1249
    %1406 = vmatprep.subr.bf16.mxu0 0
    %1407 = vmatpush1.bf16.msra.mxu0 %v1248
    %1408 = vmatprep.subr.bf16.mxu0 0
    %1409 = vmatpush2.bf16.msra.mxu0 %v1263
    %1410 = vmatprep.subr.bf16.mxu0 0
    %1411 = vmatpush2.bf16.msra.mxu0 %v1262
    %1412 = vmatprep.subr.bf16.mxu0 0
    %1413 = vmatpush2.bf16.msra.mxu0 %v1261
    %1414 = vmatprep.subr.bf16.mxu0 0
    %1415 = vmatpush2.bf16.msra.mxu0 %v1260
    %1416 = vmatprep.subr.bf16.mxu0 0
    %1417 = vmatpush2.bf16.msra.mxu0 %v1259
    %1418 = vmatprep.subr.bf16.mxu0 0
    %1419 = vmatpush2.bf16.msra.mxu0 %v1258
    %1420 = vmatprep.subr.bf16.mxu0 0
    %1421 = vmatpush2.bf16.msra.mxu0 %v1257
    %1422 = vmatprep.subr.bf16.mxu0 0
    %1423 = vmatpush2.bf16.msra.mxu0 %v1256
    %1424 = vmatprep.mubr.bf16.mxu0 %v817
    %1425 = vmatmul.mubr.bf16.gmra.mxu0 %v816
    %v1426 = vpop.f32.mrf.mxu0
    %v1427 = vadd.f32 0.0, %v1426
    %v1428 = vpop.f32.mrf.mxu0
    %v1429 = vpop.f32.mrf.mxu0
    %v1430 = vadd.f32 0.0, %v1429
    %v1431 = vpop.f32.mrf.mxu0
    %1432 = vmatprep.mubr.bf16.mxu0 %v826
    %1433 = vmatmul.mubr.bf16.gmra.mxu0 %v825
    %v1434 = vpop.f32.mrf.mxu0
    %v1435 = vadd.f32 0.0, %v1434
    %v1436 = vpop.f32.mrf.mxu0
    %v1437 = vpop.f32.mrf.mxu0
    %v1438 = vadd.f32 0.0, %v1437
    %v1439 = vpop.f32.mrf.mxu0
    %1440 = vmatprep.mubr.bf16.mxu0 %v835
    %1441 = vmatmul.mubr.bf16.gmra.mxu0 %v834
    %v1442 = vpop.f32.mrf.mxu0
    %v1443 = vadd.f32 0.0, %v1442
    %v1444 = vpop.f32.mrf.mxu0
    %v1445 = vpop.f32.mrf.mxu0
    %v1446 = vadd.f32 0.0, %v1445
    %v1447 = vpop.f32.mrf.mxu0
    %1448 = vmatprep.mubr.bf16.mxu0 %v844
    %1449 = vmatmul.mubr.bf16.gmra.mxu0 %v843
    %v1450 = vpop.f32.mrf.mxu0
    %v1451 = vadd.f32 0.0, %v1450
    %v1452 = vpop.f32.mrf.mxu0
    %v1453 = vpop.f32.mrf.mxu0
    %v1454 = vadd.f32 0.0, %v1453
    %v1455 = vpop.f32.mrf.mxu0
    %1456 = vmatprep.mubr.bf16.mxu0 %v853
    %1457 = vmatmul.mubr.bf16.gmra.mxu0 %v852
    %v1458 = vpop.f32.mrf.mxu0
    %v1459 = vadd.f32 0.0, %v1458
    %v1460 = vpop.f32.mrf.mxu0
    %v1461 = vpop.f32.mrf.mxu0
    %v1462 = vadd.f32 0.0, %v1461
    %v1463 = vpop.f32.mrf.mxu0
    %1464 = vmatprep.mubr.bf16.mxu0 %v862
    %1465 = vmatmul.mubr.bf16.gmra.mxu0 %v861
    %v1466 = vpop.f32.mrf.mxu0
    %v1467 = vadd.f32 0.0, %v1466
    %v1468 = vpop.f32.mrf.mxu0
    %v1469 = vpop.f32.mrf.mxu0
    %v1470 = vadd.f32 0.0, %v1469
    %v1471 = vpop.f32.mrf.mxu0
    %1472 = vmatprep.mubr.bf16.mxu0 %v871
    %1473 = vmatmul.mubr.bf16.gmra.mxu0 %v870
    %v1474 = vpop.f32.mrf.mxu0
    %v1475 = vadd.f32 0.0, %v1474
    %v1476 = vpop.f32.mrf.mxu0
    %v1477 = vpop.f32.mrf.mxu0
    %v1478 = vadd.f32 0.0, %v1477
    %v1479 = vpop.f32.mrf.mxu0
    %1480 = vmatprep.mubr.bf16.mxu0 %v880
    %1481 = vmatmul.mubr.bf16.gmra.mxu0 %v879
    %v1482 = vpop.f32.mrf.mxu0
    %v1483 = vadd.f32 0.0, %v1482
    %v1484 = vpop.f32.mrf.mxu0
    %v1485 = vpop.f32.mrf.mxu0
    %v1486 = vadd.f32 0.0, %v1485
    %v1487 = vpop.f32.mrf.mxu0
    %1488 = vdwg.mxu0
    %1489 = vmatprep.subr.bf16.mxu0 0
    %1490 = vmatpush1.bf16.msra.mxu0 %v1271
    %1491 = vmatprep.subr.bf16.mxu0 0
    %1492 = vmatpush1.bf16.msra.mxu0 %v1270
    %1493 = vmatprep.subr.bf16.mxu0 0
    %1494 = vmatpush1.bf16.msra.mxu0 %v1269
    %1495 = vmatprep.subr.bf16.mxu0 0
    %1496 = vmatpush1.bf16.msra.mxu0 %v1268
    %1497 = vmatprep.subr.bf16.mxu0 0
    %1498 = vmatpush1.bf16.msra.mxu0 %v1267
    %1499 = vmatprep.subr.bf16.mxu0 0
    %1500 = vmatpush1.bf16.msra.mxu0 %v1266
    %1501 = vmatprep.subr.bf16.mxu0 0
    %1502 = vmatpush1.bf16.msra.mxu0 %v1265
    %1503 = vmatprep.subr.bf16.mxu0 0
    %1504 = vmatpush1.bf16.msra.mxu0 %v1264
    %1505 = vmatprep.subr.bf16.mxu0 0
    %1506 = vmatpush2.bf16.msra.mxu0 %v1279
    %1507 = vmatprep.subr.bf16.mxu0 0
    %1508 = vmatpush2.bf16.msra.mxu0 %v1278
    %1509 = vmatprep.subr.bf16.mxu0 0
    %1510 = vmatpush2.bf16.msra.mxu0 %v1277
    %1511 = vmatprep.subr.bf16.mxu0 0
    %1512 = vmatpush2.bf16.msra.mxu0 %v1276
    %1513 = vmatprep.subr.bf16.mxu0 0
    %1514 = vmatpush2.bf16.msra.mxu0 %v1275
    %1515 = vmatprep.subr.bf16.mxu0 0
    %1516 = vmatpush2.bf16.msra.mxu0 %v1274
    %1517 = vmatprep.subr.bf16.mxu0 0
    %1518 = vmatpush2.bf16.msra.mxu0 %v1273
    %1519 = vmatprep.subr.bf16.mxu0 0
    %1520 = vmatpush2.bf16.msra.mxu0 %v1272
    %1521 = vmatprep.mubr.bf16.mxu0 %v819
    %1522 = vmatmul.mubr.bf16.gmra.mxu0 %v818
    %v1523 = vpop.f32.mrf.mxu0
    %v1524 = vadd.f32 %v1427, %v1523
    %v1525 = vpop.f32.mrf.mxu0
    %v1526 = vpop.f32.mrf.mxu0
    %v1527 = vadd.f32 %v1430, %v1526
    %v1528 = vpop.f32.mrf.mxu0
    %1529 = vmatprep.mubr.bf16.mxu0 %v828
    %1530 = vmatmul.mubr.bf16.gmra.mxu0 %v827
    %v1531 = vpop.f32.mrf.mxu0
    %v1532 = vadd.f32 %v1435, %v1531
    %v1533 = vpop.f32.mrf.mxu0
    %v1534 = vpop.f32.mrf.mxu0
    %v1535 = vadd.f32 %v1438, %v1534
    %v1536 = vpop.f32.mrf.mxu0
    %1537 = vmatprep.mubr.bf16.mxu0 %v837
    %1538 = vmatmul.mubr.bf16.gmra.mxu0 %v836
    %v1539 = vpop.f32.mrf.mxu0
    %v1540 = vadd.f32 %v1443, %v1539
    %v1541 = vpop.f32.mrf.mxu0
    %v1542 = vpop.f32.mrf.mxu0
    %v1543 = vadd.f32 %v1446, %v1542
    %v1544 = vpop.f32.mrf.mxu0
    %1545 = vmatprep.mubr.bf16.mxu0 %v846
    %1546 = vmatmul.mubr.bf16.gmra.mxu0 %v845
    %v1547 = vpop.f32.mrf.mxu0
    %v1548 = vadd.f32 %v1451, %v1547
    %v1549 = vpop.f32.mrf.mxu0
    %v1550 = vpop.f32.mrf.mxu0
    %v1551 = vadd.f32 %v1454, %v1550
    %v1552 = vpop.f32.mrf.mxu0
    %1553 = vmatprep.mubr.bf16.mxu0 %v855
    %1554 = vmatmul.mubr.bf16.gmra.mxu0 %v854
    %v1555 = vpop.f32.mrf.mxu0
    %v1556 = vadd.f32 %v1459, %v1555
    %v1557 = vpop.f32.mrf.mxu0
    %v1558 = vpop.f32.mrf.mxu0
    %v1559 = vadd.f32 %v1462, %v1558
    %v1560 = vpop.f32.mrf.mxu0
    %1561 = vmatprep.mubr.bf16.mxu0 %v864
    %1562 = vmatmul.mubr.bf16.gmra.mxu0 %v863
    %v1563 = vpop.f32.mrf.mxu0
    %v1564 = vadd.f32 %v1467, %v1563
    %v1565 = vpop.f32.mrf.mxu0
    %v1566 = vpop.f32.mrf.mxu0
    %v1567 = vadd.f32 %v1470, %v1566
    %v1568 = vpop.f32.mrf.mxu0
    %1569 = vmatprep.mubr.bf16.mxu0 %v873
    %1570 = vmatmul.mubr.bf16.gmra.mxu0 %v872
    %v1571 = vpop.f32.mrf.mxu0
    %v1572 = vadd.f32 %v1475, %v1571
    %v1573 = vpop.f32.mrf.mxu0
    %v1574 = vpop.f32.mrf.mxu0
    %v1575 = vadd.f32 %v1478, %v1574
    %v1576 = vpop.f32.mrf.mxu0
    %1577 = vmatprep.mubr.bf16.mxu0 %v882
    %1578 = vmatmul.mubr.bf16.gmra.mxu0 %v881
    %v1579 = vpop.f32.mrf.mxu0
    %v1580 = vadd.f32 %v1483, %v1579
    %v1581 = vpop.f32.mrf.mxu0
    %v1582 = vpop.f32.mrf.mxu0
    %v1583 = vadd.f32 %v1486, %v1582
    %v1584 = vpop.f32.mrf.mxu0
    %1585 = vdwg.mxu0
    %1586 = vmatprep.subr.bf16.mxu0 0
    %1587 = vmatpush1.bf16.msra.mxu0 %v1287
    %1588 = vmatprep.subr.bf16.mxu0 0
    %1589 = vmatpush1.bf16.msra.mxu0 %v1286
    %1590 = vmatprep.subr.bf16.mxu0 0
    %1591 = vmatpush1.bf16.msra.mxu0 %v1285
    %1592 = vmatprep.subr.bf16.mxu0 0
    %1593 = vmatpush1.bf16.msra.mxu0 %v1284
    %1594 = vmatprep.subr.bf16.mxu0 0
    %1595 = vmatpush1.bf16.msra.mxu0 %v1283
    %1596 = vmatprep.subr.bf16.mxu0 0
    %1597 = vmatpush1.bf16.msra.mxu0 %v1282
    %1598 = vmatprep.subr.bf16.mxu0 0
    %1599 = vmatpush1.bf16.msra.mxu0 %v1281
    %1600 = vmatprep.subr.bf16.mxu0 0
    %1601 = vmatpush1.bf16.msra.mxu0 %v1280
    %1602 = vmatprep.subr.bf16.mxu0 0
    %1603 = vmatpush2.bf16.msra.mxu0 %v1295
    %1604 = vmatprep.subr.bf16.mxu0 0
    %1605 = vmatpush2.bf16.msra.mxu0 %v1294
    %1606 = vmatprep.subr.bf16.mxu0 0
    %1607 = vmatpush2.bf16.msra.mxu0 %v1293
    %1608 = vmatprep.subr.bf16.mxu0 0
    %1609 = vmatpush2.bf16.msra.mxu0 %v1292
    %1610 = vmatprep.subr.bf16.mxu0 0
    %1611 = vmatpush2.bf16.msra.mxu0 %v1291
    %1612 = vmatprep.subr.bf16.mxu0 0
    %1613 = vmatpush2.bf16.msra.mxu0 %v1290
    %1614 = vmatprep.subr.bf16.mxu0 0
    %1615 = vmatpush2.bf16.msra.mxu0 %v1289
    %1616 = vmatprep.subr.bf16.mxu0 0
    %1617 = vmatpush2.bf16.msra.mxu0 %v1288
    %1618 = vmatprep.mubr.bf16.mxu0 %v821
    %1619 = vmatmul.mubr.bf16.gmra.mxu0 %v820
    %v1620 = vpop.f32.mrf.mxu0
    %v1621 = vadd.f32 %v1524, %v1620
    %v1622 = vpop.f32.mrf.mxu0
    %v1623 = vpop.f32.mrf.mxu0
    %v1624 = vadd.f32 %v1527, %v1623
    %v1625 = vpop.f32.mrf.mxu0
    %1626 = vmatprep.mubr.bf16.mxu0 %v830
    %1627 = vmatmul.mubr.bf16.gmra.mxu0 %v829
    %v1628 = vpop.f32.mrf.mxu0
    %v1629 = vadd.f32 %v1532, %v1628
    %v1630 = vpop.f32.mrf.mxu0
    %v1631 = vpop.f32.mrf.mxu0
    %v1632 = vadd.f32 %v1535, %v1631
    %v1633 = vpop.f32.mrf.mxu0
    %1634 = vmatprep.mubr.bf16.mxu0 %v839
    %1635 = vmatmul.mubr.bf16.gmra.mxu0 %v838
    %v1636 = vpop.f32.mrf.mxu0
    %v1637 = vadd.f32 %v1540, %v1636
    %v1638 = vpop.f32.mrf.mxu0
    %v1639 = vpop.f32.mrf.mxu0
    %v1640 = vadd.f32 %v1543, %v1639
    %v1641 = vpop.f32.mrf.mxu0
    %1642 = vmatprep.mubr.bf16.mxu0 %v848
    %1643 = vmatmul.mubr.bf16.gmra.mxu0 %v847
    %v1644 = vpop.f32.mrf.mxu0
    %v1645 = vadd.f32 %v1548, %v1644
    %v1646 = vpop.f32.mrf.mxu0
    %v1647 = vpop.f32.mrf.mxu0
    %v1648 = vadd.f32 %v1551, %v1647
    %v1649 = vpop.f32.mrf.mxu0
    %1650 = vmatprep.mubr.bf16.mxu0 %v857
    %1651 = vmatmul.mubr.bf16.gmra.mxu0 %v856
    %v1652 = vpop.f32.mrf.mxu0
    %v1653 = vadd.f32 %v1556, %v1652
    %v1654 = vpop.f32.mrf.mxu0
    %v1655 = vpop.f32.mrf.mxu0
    %v1656 = vadd.f32 %v1559, %v1655
    %v1657 = vpop.f32.mrf.mxu0
    %1658 = vmatprep.mubr.bf16.mxu0 %v866
    %1659 = vmatmul.mubr.bf16.gmra.mxu0 %v865
    %v1660 = vpop.f32.mrf.mxu0
    %v1661 = vadd.f32 %v1564, %v1660
    %v1662 = vpop.f32.mrf.mxu0
    %v1663 = vpop.f32.mrf.mxu0
    %v1664 = vadd.f32 %v1567, %v1663
    %v1665 = vpop.f32.mrf.mxu0
    %1666 = vmatprep.mubr.bf16.mxu0 %v875
    %1667 = vmatmul.mubr.bf16.gmra.mxu0 %v874
    %v1668 = vpop.f32.mrf.mxu0
    %v1669 = vadd.f32 %v1572, %v1668
    %v1670 = vpop.f32.mrf.mxu0
    %v1671 = vpop.f32.mrf.mxu0
    %v1672 = vadd.f32 %v1575, %v1671
    %v1673 = vpop.f32.mrf.mxu0
    %1674 = vmatprep.mubr.bf16.mxu0 %v884
    %1675 = vmatmul.mubr.bf16.gmra.mxu0 %v883
    %v1676 = vpop.f32.mrf.mxu0
    %v1677 = vadd.f32 %v1580, %v1676
    %v1678 = vpop.f32.mrf.mxu0
    %v1679 = vpop.f32.mrf.mxu0
    %v1680 = vadd.f32 %v1583, %v1679
    %v1681 = vpop.f32.mrf.mxu0
    %1682 = vdwg.mxu0
    %1683 = vmatprep.subr.bf16.mxu0 0
    %1684 = vmatpush1.bf16.msra.mxu0 %v1303
    %1685 = vmatprep.subr.bf16.mxu0 0
    %1686 = vmatpush1.bf16.msra.mxu0 %v1302
    %1687 = vmatprep.subr.bf16.mxu0 0
    %1688 = vmatpush1.bf16.msra.mxu0 %v1301
    %1689 = vmatprep.subr.bf16.mxu0 0
    %1690 = vmatpush1.bf16.msra.mxu0 %v1300
    %1691 = vmatprep.subr.bf16.mxu0 0
    %1692 = vmatpush1.bf16.msra.mxu0 %v1299
    %1693 = vmatprep.subr.bf16.mxu0 0
    %1694 = vmatpush1.bf16.msra.mxu0 %v1298
    %1695 = vmatprep.subr.bf16.mxu0 0
    %1696 = vmatpush1.bf16.msra.mxu0 %v1297
    %1697 = vmatprep.subr.bf16.mxu0 0
    %1698 = vmatpush1.bf16.msra.mxu0 %v1296
    %1699 = vmatprep.subr.bf16.mxu0 0
    %1700 = vmatpush2.bf16.msra.mxu0 %v1311
    %1701 = vmatprep.subr.bf16.mxu0 0
    %1702 = vmatpush2.bf16.msra.mxu0 %v1310
    %1703 = vmatprep.subr.bf16.mxu0 0
    %1704 = vmatpush2.bf16.msra.mxu0 %v1309
    %1705 = vmatprep.subr.bf16.mxu0 0
    %1706 = vmatpush2.bf16.msra.mxu0 %v1308
    %1707 = vmatprep.subr.bf16.mxu0 0
    %1708 = vmatpush2.bf16.msra.mxu0 %v1307
    %1709 = vmatprep.subr.bf16.mxu0 0
    %1710 = vmatpush2.bf16.msra.mxu0 %v1306
    %1711 = vmatprep.subr.bf16.mxu0 0
    %1712 = vmatpush2.bf16.msra.mxu0 %v1305
    %1713 = vmatprep.subr.bf16.mxu0 0
    %1714 = vmatpush2.bf16.msra.mxu0 %v1304
    %1715 = vmatprep.mubr.bf16.mxu0 %v823
    %1716 = vmatmul.mubr.bf16.gmra.mxu0 %v822
    %v1717 = vpop.f32.mrf.mxu0
    %v1718 = vadd.f32 %v1621, %v1717
    %v1719 = vpop.f32.mrf.mxu0
    %v1720 = vpop.f32.mrf.mxu0
    %v1721 = vadd.f32 %v1624, %v1720
    %v1722 = vpop.f32.mrf.mxu0
    %1723 = vmatprep.mubr.bf16.mxu0 %v832
    %1724 = vmatmul.mubr.bf16.gmra.mxu0 %v831
    %v1725 = vpop.f32.mrf.mxu0
    %v1726 = vadd.f32 %v1629, %v1725
    %v1727 = vpop.f32.mrf.mxu0
    %v1728 = vpop.f32.mrf.mxu0
    %v1729 = vadd.f32 %v1632, %v1728
    %v1730 = vpop.f32.mrf.mxu0
    %1731 = vmatprep.mubr.bf16.mxu0 %v841
    %1732 = vmatmul.mubr.bf16.gmra.mxu0 %v840
    %v1733 = vpop.f32.mrf.mxu0
    %v1734 = vadd.f32 %v1637, %v1733
    %v1735 = vpop.f32.mrf.mxu0
    %v1736 = vpop.f32.mrf.mxu0
    %v1737 = vadd.f32 %v1640, %v1736
    %v1738 = vpop.f32.mrf.mxu0
    %1739 = vmatprep.mubr.bf16.mxu0 %v850
    %1740 = vmatmul.mubr.bf16.gmra.mxu0 %v849
    %v1741 = vpop.f32.mrf.mxu0
    %v1742 = vadd.f32 %v1645, %v1741
    %v1743 = vpop.f32.mrf.mxu0
    %v1744 = vpop.f32.mrf.mxu0
    %v1745 = vadd.f32 %v1648, %v1744
    %v1746 = vpop.f32.mrf.mxu0
    %1747 = vmatprep.mubr.bf16.mxu0 %v859
    %1748 = vmatmul.mubr.bf16.gmra.mxu0 %v858
    %v1749 = vpop.f32.mrf.mxu0
    %v1750 = vadd.f32 %v1653, %v1749
    %v1751 = vpop.f32.mrf.mxu0
    %v1752 = vpop.f32.mrf.mxu0
    %v1753 = vadd.f32 %v1656, %v1752
    %v1754 = vpop.f32.mrf.mxu0
    %1755 = vmatprep.mubr.bf16.mxu0 %v868
    %1756 = vmatmul.mubr.bf16.gmra.mxu0 %v867
    %v1757 = vpop.f32.mrf.mxu0
    %v1758 = vadd.f32 %v1661, %v1757
    %v1759 = vpop.f32.mrf.mxu0
    %v1760 = vpop.f32.mrf.mxu0
    %v1761 = vadd.f32 %v1664, %v1760
    %v1762 = vpop.f32.mrf.mxu0
    %1763 = vmatprep.mubr.bf16.mxu0 %v877
    %1764 = vmatmul.mubr.bf16.gmra.mxu0 %v876
    %v1765 = vpop.f32.mrf.mxu0
    %v1766 = vadd.f32 %v1669, %v1765
    %v1767 = vpop.f32.mrf.mxu0
    %v1768 = vpop.f32.mrf.mxu0
    %v1769 = vadd.f32 %v1672, %v1768
    %v1770 = vpop.f32.mrf.mxu0
    %1771 = vmatprep.mubr.bf16.mxu0 %v886
    %1772 = vmatmul.mubr.bf16.gmra.mxu0 %v885
    %v1773 = vpop.f32.mrf.mxu0
    %v1774 = vadd.f32 %v1677, %v1773
    %v1775 = vpop.f32.mrf.mxu0
    %v1776 = vpop.f32.mrf.mxu0
    %v1777 = vadd.f32 %v1680, %v1776
    %v1778 = vpop.f32.mrf.mxu0
    %1779 = vdwg.mxu0
    %1780 = vmatprep.subr.bf16.mxu0 0
    %1781 = vmatpush1.bf16.msra.mxu0 %v1319
    %1782 = vmatprep.subr.bf16.mxu0 0
    %1783 = vmatpush1.bf16.msra.mxu0 %v1318
    %1784 = vmatprep.subr.bf16.mxu0 0
    %1785 = vmatpush1.bf16.msra.mxu0 %v1317
    %1786 = vmatprep.subr.bf16.mxu0 0
    %1787 = vmatpush1.bf16.msra.mxu0 %v1316
    %1788 = vmatprep.subr.bf16.mxu0 0
    %1789 = vmatpush1.bf16.msra.mxu0 %v1315
    %1790 = vmatprep.subr.bf16.mxu0 0
    %1791 = vmatpush1.bf16.msra.mxu0 %v1314
    %1792 = vmatprep.subr.bf16.mxu0 0
    %1793 = vmatpush1.bf16.msra.mxu0 %v1313
    %1794 = vmatprep.subr.bf16.mxu0 0
    %1795 = vmatpush1.bf16.msra.mxu0 %v1312
    %1796 = vmatprep.subr.bf16.mxu0 0
    %1797 = vmatpush2.bf16.msra.mxu0 0
    %1798 = vmatprep.subr.bf16.mxu0 0
    %1799 = vmatpush2.bf16.msra.mxu0 0
    %1800 = vmatprep.subr.bf16.mxu0 0
    %1801 = vmatpush2.bf16.msra.mxu0 0
    %1802 = vmatprep.subr.bf16.mxu0 0
    %1803 = vmatpush2.bf16.msra.mxu0 0
    %1804 = vmatprep.subr.bf16.mxu0 0
    %1805 = vmatpush2.bf16.msra.mxu0 0
    %1806 = vmatprep.subr.bf16.mxu0 0
    %1807 = vmatpush2.bf16.msra.mxu0 0
    %1808 = vmatprep.subr.bf16.mxu0 0
    %1809 = vmatpush2.bf16.msra.mxu0 0
    %1810 = vmatprep.subr.bf16.mxu0 0
    %1811 = vmatpush2.bf16.msra.mxu0 0
    %1812 = vmatprep.mubr.bf16.mxu0 0
    %1813 = vmatmul.mubr.bf16.gmra.mxu0 %v824
    %v1814 = vpop.f32.mrf.mxu0
    %v1815 = vadd.f32 %v1718, %v1814
    %v1816 = vpop.f32.mrf.mxu0
    %v1817 = vpop.f32.mrf.mxu0
    %v1818 = vadd.f32 %v1721, %v1817
    %v1819 = vpop.f32.mrf.mxu0
    %1820 = vmatprep.mubr.bf16.mxu0 0
    %1821 = vmatmul.mubr.bf16.gmra.mxu0 %v833
    %v1822 = vpop.f32.mrf.mxu0
    %v1823 = vadd.f32 %v1726, %v1822
    %v1824 = vpop.f32.mrf.mxu0
    %v1825 = vpop.f32.mrf.mxu0
    %v1826 = vadd.f32 %v1729, %v1825
    %v1827 = vpop.f32.mrf.mxu0
    %1828 = vmatprep.mubr.bf16.mxu0 0
    %1829 = vmatmul.mubr.bf16.gmra.mxu0 %v842
    %v1830 = vpop.f32.mrf.mxu0
    %v1831 = vadd.f32 %v1734, %v1830
    %v1832 = vpop.f32.mrf.mxu0
    %v1833 = vpop.f32.mrf.mxu0
    %v1834 = vadd.f32 %v1737, %v1833
    %v1835 = vpop.f32.mrf.mxu0
    %1836 = vmatprep.mubr.bf16.mxu0 0
    %1837 = vmatmul.mubr.bf16.gmra.mxu0 %v851
    %v1838 = vpop.f32.mrf.mxu0
    %v1839 = vadd.f32 %v1742, %v1838
    %v1840 = vpop.f32.mrf.mxu0
    %v1841 = vpop.f32.mrf.mxu0
    %v1842 = vadd.f32 %v1745, %v1841
    %v1843 = vpop.f32.mrf.mxu0
    %1844 = vmatprep.mubr.bf16.mxu0 0
    %1845 = vmatmul.mubr.bf16.gmra.mxu0 %v860
    %v1846 = vpop.f32.mrf.mxu0
    %v1847 = vadd.f32 %v1750, %v1846
    %v1848 = vpop.f32.mrf.mxu0
    %v1849 = vpop.f32.mrf.mxu0
    %v1850 = vadd.f32 %v1753, %v1849
    %v1851 = vpop.f32.mrf.mxu0
    %1852 = vmatprep.mubr.bf16.mxu0 0
    %1853 = vmatmul.mubr.bf16.gmra.mxu0 %v869
    %v1854 = vpop.f32.mrf.mxu0
    %v1855 = vadd.f32 %v1758, %v1854
    %v1856 = vpop.f32.mrf.mxu0
    %v1857 = vpop.f32.mrf.mxu0
    %v1858 = vadd.f32 %v1761, %v1857
    %v1859 = vpop.f32.mrf.mxu0
    %1860 = vmatprep.mubr.bf16.mxu0 0
    %1861 = vmatmul.mubr.bf16.gmra.mxu0 %v878
    %v1862 = vpop.f32.mrf.mxu0
    %v1863 = vadd.f32 %v1766, %v1862
    %v1864 = vpop.f32.mrf.mxu0
    %v1865 = vpop.f32.mrf.mxu0
    %v1866 = vadd.f32 %v1769, %v1865
    %v1867 = vpop.f32.mrf.mxu0
    %1868 = vmatprep.mubr.bf16.mxu0 0
    %1869 = vmatmul.mubr.bf16.gmra.mxu0 %v887
    %v1870 = vpop.f32.mrf.mxu0
    %v1871 = vadd.f32 %v1774, %v1870
    %v1872 = vpop.f32.mrf.mxu0
    %v1873 = vpop.f32.mrf.mxu0
    %v1874 = vadd.f32 %v1777, %v1873
    %v1875 = vpop.f32.mrf.mxu0
    %1876 = vdwg.mxu0
    %v1877 = vld [vmem:[%s5] sm:$0x1]
    %v1879 = vlaneseq
    %v1880 = vshrl.u32 %v1879, 7
    %v1881 = vsub.s32 0, %v1880
    %v1882 = vrot.slane %v1877, %v1881
    %v1884 = vmul.f32 %v1815, %v1882
    %v1885 = vmul.f32 %v1818, %v1882
    %v1886 = vmul.f32 %v1823, %v1882
    %v1887 = vmul.f32 %v1826, %v1882
    %v1888 = vmul.f32 %v1831, %v1882
    %v1889 = vmul.f32 %v1834, %v1882
    %v1890 = vmul.f32 %v1839, %v1882
    %v1891 = vmul.f32 %v1842, %v1882
    %v1892 = vmul.f32 %v1847, %v1882
    %v1893 = vmul.f32 %v1850, %v1882
    %v1894 = vmul.f32 %v1855, %v1882
    %v1895 = vmul.f32 %v1858, %v1882
    %v1896 = vmul.f32 %v1863, %v1882
    %v1897 = vmul.f32 %v1866, %v1882
    %v1898 = vmul.f32 %v1871, %v1882
    %v1899 = vmul.f32 %v1874, %v1882
    %v1900 = vld [vmem:[%s6] sm:$0x1]
    %v1902 = vlaneseq
    %v1903 = vshrl.u32 %v1902, 7
    %v1904 = vsub.s32 0, %v1903
    %v1905 = vrot.slane %v1900, %v1904
    %v1907 = vadd.f32 %v1884, %v1905
    %v1908 = vadd.f32 %v1885, %v1905
    %v1909 = vadd.f32 %v1886, %v1905
    %v1910 = vadd.f32 %v1887, %v1905
    %v1911 = vadd.f32 %v1888, %v1905
    %v1912 = vadd.f32 %v1889, %v1905
    %v1913 = vadd.f32 %v1890, %v1905
    %v1914 = vadd.f32 %v1891, %v1905
    %v1915 = vadd.f32 %v1892, %v1905
    %v1916 = vadd.f32 %v1893, %v1905
    %v1917 = vadd.f32 %v1894, %v1905
    %v1918 = vadd.f32 %v1895, %v1905
    %v1919 = vadd.f32 %v1896, %v1905
    %v1920 = vadd.f32 %v1897, %v1905
    %v1921 = vadd.f32 %v1898, %v1905
    %v1922 = vadd.f32 %v1899, %v1905
    %v1923 = vmax.f32 %v1907, 0.0
    %v1924 = vmax.f32 %v1908, 0.0
    %v1925 = vmax.f32 %v1909, 0.0
    %v1926 = vmax.f32 %v1910, 0.0
    %v1927 = vmax.f32 %v1911, 0.0
    %v1928 = vmax.f32 %v1912, 0.0
    %v1929 = vmax.f32 %v1913, 0.0
    %v1930 = vmax.f32 %v1914, 0.0
    %v1931 = vmax.f32 %v1915, 0.0
    %v1932 = vmax.f32 %v1916, 0.0
    %v1933 = vmax.f32 %v1917, 0.0
    %v1934 = vmax.f32 %v1918, 0.0
    %v1935 = vmax.f32 %v1919, 0.0
    %v1936 = vmax.f32 %v1920, 0.0
    %v1937 = vmax.f32 %v1921, 0.0
    %v1938 = vmax.f32 %v1922, 0.0
    %v1939 = vpack.c.bf16 %v1923, %v1923
    %v1940 = vpack.c.bf16 %v1924, %v1924
    %v1941 = vpack.c.bf16 %v1925, %v1925
    %v1942 = vpack.c.bf16 %v1926, %v1926
    %v1943 = vpack.c.bf16 %v1927, %v1927
    %v1944 = vpack.c.bf16 %v1928, %v1928
    %v1945 = vpack.c.bf16 %v1929, %v1929
    %v1946 = vpack.c.bf16 %v1930, %v1930
    %v1947 = vpack.c.bf16 %v1931, %v1931
    %v1948 = vpack.c.bf16 %v1932, %v1932
    %v1949 = vpack.c.bf16 %v1933, %v1933
    %v1950 = vpack.c.bf16 %v1934, %v1934
    %v1951 = vpack.c.bf16 %v1935, %v1935
    %v1952 = vpack.c.bf16 %v1936, %v1936
    %v1953 = vpack.c.bf16 %v1937, %v1937
    %v1954 = vpack.c.bf16 %v1938, %v1938
    %v1956 = vshrl.u32 0, 16
    %v1958 = vrot.slane %v1956, 7
    %v1959 = vshll.u32 0, 16
    %v1961 = vor.u32 %v1958, %v1959
    %v1963 = vshrl.u32 %v1939, 16
    %v1965 = vrot.slane %v1963, 7
    %v1966 = vshll.u32 %v1939, 16
    %v1968 = vor.u32 %v1965, %v1966
    %v1970 = vshrl.u32 %v1940, 16
    %v1972 = vrot.slane %v1970, 7
    %v1973 = vshll.u32 %v1940, 16
    %v1975 = vor.u32 %v1972, %v1973
    %v1977 = vshrl.u32 %v1941, 16
    %v1979 = vrot.slane %v1977, 7
    %v1980 = vshll.u32 %v1941, 16
    %v1982 = vor.u32 %v1979, %v1980
    %v1984 = vshrl.u32 %v1942, 16
    %v1986 = vrot.slane %v1984, 7
    %v1987 = vshll.u32 %v1942, 16
    %v1989 = vor.u32 %v1986, %v1987
    %v1991 = vshrl.u32 %v1943, 16
    %v1993 = vrot.slane %v1991, 7
    %v1994 = vshll.u32 %v1943, 16
    %v1996 = vor.u32 %v1993, %v1994
    %v1998 = vshrl.u32 %v1944, 16
    %v2000 = vrot.slane %v1998, 7
    %v2001 = vshll.u32 %v1944, 16
    %v2003 = vor.u32 %v2000, %v2001
    %v2005 = vshrl.u32 %v1945, 16
    %v2007 = vrot.slane %v2005, 7
    %v2008 = vshll.u32 %v1945, 16
    %v2010 = vor.u32 %v2007, %v2008
    %v2012 = vshrl.u32 %v1946, 16
    %v2014 = vrot.slane %v2012, 7
    %v2015 = vshll.u32 %v1946, 16
    %v2017 = vor.u32 %v2014, %v2015
    %v2019 = vshrl.u32 %v1947, 16
    %v2021 = vrot.slane %v2019, 7
    %v2022 = vshll.u32 %v1947, 16
    %v2024 = vor.u32 %v2021, %v2022
    %v2026 = vshrl.u32 %v1948, 16
    %v2028 = vrot.slane %v2026, 7
    %v2029 = vshll.u32 %v1948, 16
    %v2031 = vor.u32 %v2028, %v2029
    %v2033 = vshrl.u32 %v1949, 16
    %v2035 = vrot.slane %v2033, 7
    %v2036 = vshll.u32 %v1949, 16
    %v2038 = vor.u32 %v2035, %v2036
    %v2040 = vshrl.u32 %v1950, 16
    %v2042 = vrot.slane %v2040, 7
    %v2043 = vshll.u32 %v1950, 16
    %v2045 = vor.u32 %v2042, %v2043
    %v2047 = vshrl.u32 %v1951, 16
    %v2049 = vrot.slane %v2047, 7
    %v2050 = vshll.u32 %v1951, 16
    %v2052 = vor.u32 %v2049, %v2050
    %v2054 = vshrl.u32 %v1952, 16
    %v2056 = vrot.slane %v2054, 7
    %v2057 = vshll.u32 %v1952, 16
    %v2059 = vor.u32 %v2056, %v2057
    %v2061 = vshrl.u32 %v1953, 16
    %v2063 = vrot.slane %v2061, 7
    %v2064 = vshll.u32 %v1953, 16
    %v2066 = vor.u32 %v2063, %v2064
    %v2068 = vshrl.u32 %v1954, 16
    %v2070 = vrot.slane %v2068, 7
    %v2071 = vshll.u32 %v1954, 16
    %v2073 = vor.u32 %v2070, %v2071
    %vm2091 = vcmask 1040384
    %vm2092 = vsmask.f32 256
    %vm2093 = vmand %vm2091, %vm2092
    %v2094 = vsel %vm2093, 0, %v1961
    %v2095 = vsel %vm2093, 0, %v1968
    %v2096 = vsel %vm2093, 0, %v1975
    %v2097 = vsel %vm2093, 0, %v1982
    %v2098 = vsel %vm2093, 0, %v1989
    %v2099 = vsel %vm2093, 0, %v1996
    %v2100 = vsel %vm2093, 0, %v2003
    %v2101 = vsel %vm2093, 0, %v2010
    %v2102 = vsel %vm2093, 0, %v2017
    %v2103 = vsel %vm2093, 0, %v2024
    %v2104 = vsel %vm2093, 0, %v2031
    %v2105 = vsel %vm2093, 0, %v2038
    %v2106 = vsel %vm2093, 0, %v2045
    %v2107 = vsel %vm2093, 0, %v2052
    %v2108 = vsel %vm2093, 0, %v2059
    %v2109 = vsel %vm2093, 0, %v2066
    %v2110 = vsel %vm2093, 0, %v2073
    %vm2111 = vcmask 1044480
    %vm2112 = vsmask.f32 4352
    %vm2113 = vmand %vm2111, %vm2112
    %v2114 = vsel %vm2113, %v2094, 0
    %v2115 = vsel %vm2113, %v2095, 0
    %v2116 = vsel %vm2113, %v2096, 0
    %v2117 = vsel %vm2113, %v2097, 0
    %v2118 = vsel %vm2113, %v2098, 0
    %v2119 = vsel %vm2113, %v2099, 0
    %v2120 = vsel %vm2113, %v2100, 0
    %v2121 = vsel %vm2113, %v2101, 0
    %v2122 = vsel %vm2113, %v2102, 0
    %v2123 = vsel %vm2113, %v2103, 0
    %v2124 = vsel %vm2113, %v2104, 0
    %v2125 = vsel %vm2113, %v2105, 0
    %v2126 = vsel %vm2113, %v2106, 0
    %v2127 = vsel %vm2113, %v2107, 0
    %v2128 = vsel %vm2113, %v2108, 0
    %v2129 = vsel %vm2113, %v2109, 0
    %v2130 = vsel %vm2113, %v2110, 0
    %v2132 = vshrl.u32 %v2114, 16
    %v2134 = vshll.u32 %v2114, 16
    %v2136 = vrot.slane %v2134, 1
    %v2137 = vor.u32 %v2132, %v2136
    %v2139 = vshrl.u32 %v2115, 16
    %v2141 = vshll.u32 %v2115, 16
    %v2143 = vrot.slane %v2141, 1
    %v2144 = vor.u32 %v2139, %v2143
    %v2146 = vshrl.u32 %v2116, 16
    %v2148 = vshll.u32 %v2116, 16
    %v2150 = vrot.slane %v2148, 1
    %v2151 = vor.u32 %v2146, %v2150
    %v2153 = vshrl.u32 %v2117, 16
    %v2155 = vshll.u32 %v2117, 16
    %v2157 = vrot.slane %v2155, 1
    %v2158 = vor.u32 %v2153, %v2157
    %v2160 = vshrl.u32 %v2118, 16
    %v2162 = vshll.u32 %v2118, 16
    %v2164 = vrot.slane %v2162, 1
    %v2165 = vor.u32 %v2160, %v2164
    %v2167 = vshrl.u32 %v2119, 16
    %v2169 = vshll.u32 %v2119, 16
    %v2171 = vrot.slane %v2169, 1
    %v2172 = vor.u32 %v2167, %v2171
    %v2174 = vshrl.u32 %v2120, 16
    %v2176 = vshll.u32 %v2120, 16
    %v2178 = vrot.slane %v2176, 1
    %v2179 = vor.u32 %v2174, %v2178
    %v2181 = vshrl.u32 %v2121, 16
    %v2183 = vshll.u32 %v2121, 16
    %v2185 = vrot.slane %v2183, 1
    %v2186 = vor.u32 %v2181, %v2185
    %v2188 = vshrl.u32 %v2123, 16
    %v2190 = vshll.u32 %v2123, 16
    %v2192 = vrot.slane %v2190, 1
    %v2193 = vor.u32 %v2188, %v2192
    %v2195 = vshrl.u32 %v2124, 16
    %v2197 = vshll.u32 %v2124, 16
    %v2199 = vrot.slane %v2197, 1
    %v2200 = vor.u32 %v2195, %v2199
    %v2202 = vshrl.u32 %v2125, 16
    %v2204 = vshll.u32 %v2125, 16
    %v2206 = vrot.slane %v2204, 1
    %v2207 = vor.u32 %v2202, %v2206
    %v2209 = vshrl.u32 %v2126, 16
    %v2211 = vshll.u32 %v2126, 16
    %v2213 = vrot.slane %v2211, 1
    %v2214 = vor.u32 %v2209, %v2213
    %v2216 = vshrl.u32 %v2127, 16
    %v2218 = vshll.u32 %v2127, 16
    %v2220 = vrot.slane %v2218, 1
    %v2221 = vor.u32 %v2216, %v2220
    %v2223 = vshrl.u32 %v2128, 16
    %v2225 = vshll.u32 %v2128, 16
    %v2227 = vrot.slane %v2225, 1
    %v2228 = vor.u32 %v2223, %v2227
    %v2230 = vshrl.u32 %v2129, 16
    %v2232 = vshll.u32 %v2129, 16
    %v2234 = vrot.slane %v2232, 1
    %v2235 = vor.u32 %v2230, %v2234
    %v2251 = vrot.slane %v2114, 1
    %v2252 = vrot.slane %v2115, 1
    %v2253 = vrot.slane %v2116, 1
    %v2254 = vrot.slane %v2117, 1
    %v2255 = vrot.slane %v2118, 1
    %v2256 = vrot.slane %v2119, 1
    %v2257 = vrot.slane %v2120, 1
    %v2258 = vrot.slane %v2121, 1
    %v2259 = vrot.slane %v2123, 1
    %v2260 = vrot.slane %v2124, 1
    %v2261 = vrot.slane %v2125, 1
    %v2262 = vrot.slane %v2126, 1
    %v2263 = vrot.slane %v2127, 1
    %v2264 = vrot.slane %v2128, 1
    %v2265 = vrot.slane %v2129, 1
    %v2267 = vshrl.u32 %v2122, 16
    %v2269 = vshll.u32 %v2122, 16
    %v2271 = vrot.slane %v2269, 1
    %v2272 = vor.u32 %v2267, %v2271
    %v2274 = vshrl.u32 %v2130, 16
    %v2276 = vshll.u32 %v2130, 16
    %v2278 = vrot.slane %v2276, 1
    %v2279 = vor.u32 %v2274, %v2278
    %v2282 = vrot.slane %v2122, 1
    %v2283 = vrot.slane %v2130, 1
    %v2284 = vunpack.c.l.b16 %v2114
    %v2285 = vunpack.c.l.b16 %v2137
    %v2286 = vunpack.c.l.b16 %v2251
    %v2287 = vunpack.c.l.b16 %v2115
    %v2288 = vunpack.c.l.b16 %v2144
    %v2289 = vunpack.c.l.b16 %v2252
    %v2290 = vunpack.c.l.b16 %v2116
    %v2291 = vunpack.c.l.b16 %v2151
    %v2292 = vunpack.c.l.b16 %v2253
    %v2293 = vunpack.c.l.b16 %v2117
    %v2294 = vunpack.c.l.b16 %v2158
    %v2295 = vunpack.c.l.b16 %v2254
    %v2296 = vunpack.c.l.b16 %v2118
    %v2297 = vunpack.c.l.b16 %v2165
    %v2298 = vunpack.c.l.b16 %v2255
    %v2299 = vunpack.c.l.b16 %v2119
    %v2300 = vunpack.c.l.b16 %v2172
    %v2301 = vunpack.c.l.b16 %v2256
    %v2302 = vunpack.c.l.b16 %v2120
    %v2303 = vunpack.c.l.b16 %v2179
    %v2304 = vunpack.c.l.b16 %v2257
    %v2305 = vunpack.c.l.b16 %v2121
    %v2306 = vunpack.c.l.b16 %v2186
    %v2307 = vunpack.c.l.b16 %v2258
    %v2308 = vunpack.c.l.b16 %v2122
    %v2309 = vunpack.c.l.b16 %v2272
    %v2310 = vunpack.c.l.b16 %v2282
    %v2311 = vunpack.c.l.b16 %v2123
    %v2312 = vunpack.c.l.b16 %v2193
    %v2313 = vunpack.c.l.b16 %v2259
    %v2314 = vunpack.c.l.b16 %v2124
    %v2315 = vunpack.c.l.b16 %v2200
    %v2316 = vunpack.c.l.b16 %v2260
    %v2317 = vunpack.c.l.b16 %v2125
    %v2318 = vunpack.c.l.b16 %v2207
    %v2319 = vunpack.c.l.b16 %v2261
    %v2320 = vunpack.c.l.b16 %v2126
    %v2321 = vunpack.c.l.b16 %v2214
    %v2322 = vunpack.c.l.b16 %v2262
    %v2323 = vunpack.c.l.b16 %v2127
    %v2324 = vunpack.c.l.b16 %v2221
    %v2325 = vunpack.c.l.b16 %v2263
    %v2326 = vunpack.c.l.b16 %v2128
    %v2327 = vunpack.c.l.b16 %v2228
    %v2328 = vunpack.c.l.b16 %v2264
    %v2329 = vunpack.c.l.b16 %v2129
    %v2330 = vunpack.c.l.b16 %v2235
    %v2331 = vunpack.c.l.b16 %v2265
    %v2332 = vunpack.c.l.b16 %v2130
    %v2333 = vunpack.c.l.b16 %v2279
    %v2334 = vunpack.c.l.b16 %v2283
    %v2335 = vld [vmem:[#allocation2] sm:$0xf]
    %v2336 = vld [vmem:[#allocation2 + $0x4] sm:$0xf]
    %v2337 = vld [vmem:[#allocation2 + $0x8] sm:$0xf]
    %v2338 = vld [vmem:[#allocation2 + $0xc] sm:$0xf]
    %v2339 = vld [vmem:[#allocation2 + $0x10] sm:$0xf]
    %v2340 = vld [vmem:[#allocation2 + $0x14] sm:$0xf]
    %v2341 = vld [vmem:[#allocation2 + $0x18] sm:$0xf]
    %v2342 = vld [vmem:[#allocation2 + $0x1c] sm:$0xf]
    %v2343 = vld [vmem:[#allocation2 + $0x20] sm:$0xf]
    %v2344 = vld [vmem:[#allocation2 + $0x24] sm:$0xf]
    %v2345 = vld [vmem:[#allocation2 + $0x28] sm:$0xf]
    %v2346 = vld [vmem:[#allocation2 + $0x2c] sm:$0xf]
    %v2347 = vld [vmem:[#allocation2 + $0x30] sm:$0xf]
    %v2348 = vld [vmem:[#allocation2 + $0x34] sm:$0xf]
    %v2349 = vld [vmem:[#allocation2 + $0x38] sm:$0xf]
    %v2350 = vld [vmem:[#allocation2 + $0x3c] sm:$0xf]
    %v2351 = vld [vmem:[#allocation2 + $0x40] sm:$0xf]
    %v2352 = vld [vmem:[#allocation2 + $0x44] sm:$0xf]
    %v2353 = vld [vmem:[#allocation2 + $0x48] sm:$0xf]
    %v2354 = vld [vmem:[#allocation2 + $0x4c] sm:$0xf]
    %v2355 = vld [vmem:[#allocation2 + $0x50] sm:$0xf]
    %v2356 = vld [vmem:[#allocation2 + $0x54] sm:$0xf]
    %v2357 = vld [vmem:[#allocation2 + $0x58] sm:$0xf]
    %v2358 = vld [vmem:[#allocation2 + $0x5c] sm:$0xf]
    %v2359 = vld [vmem:[#allocation2 + $0x60] sm:$0xf]
    %v2360 = vld [vmem:[#allocation2 + $0x64] sm:$0xf]
    %v2361 = vld [vmem:[#allocation2 + $0x68] sm:$0xf]
    %v2362 = vld [vmem:[#allocation2 + $0x6c] sm:$0xf]
    %v2363 = vld [vmem:[#allocation2 + $0x70] sm:$0xf]
    %v2364 = vld [vmem:[#allocation2 + $0x74] sm:$0xf]
    %v2365 = vld [vmem:[#allocation2 + $0x78] sm:$0xf]
    %v2366 = vld [vmem:[#allocation2 + $0x7c] sm:$0xf]
    %v2367 = vld [vmem:[#allocation2 + $0x80] sm:$0xf]
    %v2368 = vld [vmem:[#allocation2 + $0x84] sm:$0xf]
    %v2369 = vld [vmem:[#allocation2 + $0x88] sm:$0xf]
    %v2370 = vld [vmem:[#allocation2 + $0x8c] sm:$0xf]
    %v2371 = vld [vmem:[#allocation2 + $0x90] sm:$0xf]
    %v2372 = vld [vmem:[#allocation2 + $0x94] sm:$0xf]
    %v2373 = vld [vmem:[#allocation2 + $0x98] sm:$0xf]
    %v2374 = vld [vmem:[#allocation2 + $0x9c] sm:$0xf]
    %v2375 = vld [vmem:[#allocation2 + $0xa0] sm:$0xf]
    %v2376 = vld [vmem:[#allocation2 + $0xa4] sm:$0xf]
    %v2377 = vld [vmem:[#allocation2 + $0xa8] sm:$0xf]
    %v2378 = vld [vmem:[#allocation2 + $0xac] sm:$0xf]
    %v2379 = vld [vmem:[#allocation2 + $0xb0] sm:$0xf]
    %v2380 = vld [vmem:[#allocation2 + $0xb4] sm:$0xf]
    %v2381 = vld [vmem:[#allocation2 + $0xb8] sm:$0xf]
    %v2382 = vld [vmem:[#allocation2 + $0xbc] sm:$0xf]
    %v2383 = vld [vmem:[#allocation2 + $0xc0] sm:$0xf]
    %v2384 = vld [vmem:[#allocation2 + $0xc4] sm:$0xf]
    %v2385 = vld [vmem:[#allocation2 + $0xc8] sm:$0xf]
    %v2386 = vld [vmem:[#allocation2 + $0xcc] sm:$0xf]
    %v2387 = vld [vmem:[#allocation2 + $0xd0] sm:$0xf]
    %v2388 = vld [vmem:[#allocation2 + $0xd4] sm:$0xf]
    %v2389 = vld [vmem:[#allocation2 + $0xd8] sm:$0xf]
    %v2390 = vld [vmem:[#allocation2 + $0xdc] sm:$0xf]
    %v2391 = vld [vmem:[#allocation2 + $0xe0] sm:$0xf]
    %v2392 = vld [vmem:[#allocation2 + $0xe4] sm:$0xf]
    %v2393 = vld [vmem:[#allocation2 + $0xe8] sm:$0xf]
    %v2394 = vld [vmem:[#allocation2 + $0xec] sm:$0xf]
    %v2395 = vld [vmem:[#allocation2 + $0xf0] sm:$0xf]
    %v2396 = vld [vmem:[#allocation2 + $0xf4] sm:$0xf]
    %v2397 = vld [vmem:[#allocation2 + $0xf8] sm:$0xf]
    %v2398 = vld [vmem:[#allocation2 + $0xfc] sm:$0xf]
    %v2399 = vld [vmem:[#allocation2 + $0x100] sm:$0xf]
    %v2400 = vld [vmem:[#allocation2 + $0x104] sm:$0xf]
    %v2401 = vld [vmem:[#allocation2 + $0x108] sm:$0xf]
    %v2402 = vld [vmem:[#allocation2 + $0x10c] sm:$0xf]
    %v2403 = vld [vmem:[#allocation2 + $0x110] sm:$0xf]
    %v2404 = vld [vmem:[#allocation2 + $0x114] sm:$0xf]
    %v2405 = vld [vmem:[#allocation2 + $0x118] sm:$0xf]
    %v2406 = vld [vmem:[#allocation2 + $0x11c] sm:$0xf]
    %v2407 = vld [vmem:[#allocation2 + $0x120] sm:$0xf]
    %v2408 = vld [vmem:[#allocation2 + $0x124] sm:$0xf]
    %v2409 = vld [vmem:[#allocation2 + $0x128] sm:$0xf]
    %v2410 = vld [vmem:[#allocation2 + $0x12c] sm:$0xf]
    %v2411 = vld [vmem:[#allocation2 + $0x130] sm:$0xf]
    %v2412 = vld [vmem:[#allocation2 + $0x134] sm:$0xf]
    %v2413 = vld [vmem:[#allocation2 + $0x138] sm:$0xf]
    %v2414 = vld [vmem:[#allocation2 + $0x13c] sm:$0xf]
    %v2415 = vld [vmem:[#allocation2 + $0x140] sm:$0xf]
    %v2416 = vld [vmem:[#allocation2 + $0x144] sm:$0xf]
    %v2417 = vld [vmem:[#allocation2 + $0x148] sm:$0xf]
    %v2418 = vld [vmem:[#allocation2 + $0x14c] sm:$0xf]
    %v2419 = vld [vmem:[#allocation2 + $0x150] sm:$0xf]
    %v2420 = vld [vmem:[#allocation2 + $0x154] sm:$0xf]
    %v2421 = vld [vmem:[#allocation2 + $0x158] sm:$0xf]
    %v2422 = vld [vmem:[#allocation2 + $0x15c] sm:$0xf]
    %v2423 = vld [vmem:[#allocation2 + $0x160] sm:$0xf]
    %v2424 = vld [vmem:[#allocation2 + $0x164] sm:$0xf]
    %v2425 = vld [vmem:[#allocation2 + $0x168] sm:$0xf]
    %v2426 = vld [vmem:[#allocation2 + $0x16c] sm:$0xf]
    %v2427 = vld [vmem:[#allocation2 + $0x170] sm:$0xf]
    %v2428 = vld [vmem:[#allocation2 + $0x174] sm:$0xf]
    %v2429 = vld [vmem:[#allocation2 + $0x178] sm:$0xf]
    %v2430 = vld [vmem:[#allocation2 + $0x17c] sm:$0xf]
    %v2431 = vld [vmem:[#allocation2 + $0x180] sm:$0xf]
    %v2432 = vld [vmem:[#allocation2 + $0x184] sm:$0xf]
    %v2433 = vld [vmem:[#allocation2 + $0x188] sm:$0xf]
    %v2434 = vld [vmem:[#allocation2 + $0x18c] sm:$0xf]
    %v2435 = vld [vmem:[#allocation2 + $0x190] sm:$0xf]
    %v2436 = vld [vmem:[#allocation2 + $0x194] sm:$0xf]
    %v2437 = vld [vmem:[#allocation2 + $0x198] sm:$0xf]
    %v2438 = vld [vmem:[#allocation2 + $0x19c] sm:$0xf]
    %v2439 = vld [vmem:[#allocation2 + $0x1a0] sm:$0xf]
    %v2440 = vld [vmem:[#allocation2 + $0x1a4] sm:$0xf]
    %v2441 = vld [vmem:[#allocation2 + $0x1a8] sm:$0xf]
    %v2442 = vld [vmem:[#allocation2 + $0x1ac] sm:$0xf]
    %v2443 = vld [vmem:[#allocation2 + $0x1b0] sm:$0xf]
    %v2444 = vld [vmem:[#allocation2 + $0x1b4] sm:$0xf]
    %v2445 = vld [vmem:[#allocation2 + $0x1b8] sm:$0xf]
    %v2446 = vld [vmem:[#allocation2 + $0x1bc] sm:$0xf]
    %v2447 = vld [vmem:[#allocation2 + $0x1c0] sm:$0xf]
    %v2448 = vld [vmem:[#allocation2 + $0x1c4] sm:$0xf]
    %v2449 = vld [vmem:[#allocation2 + $0x1c8] sm:$0xf]
    %v2450 = vld [vmem:[#allocation2 + $0x1cc] sm:$0xf]
    %v2451 = vld [vmem:[#allocation2 + $0x1d0] sm:$0xf]
    %v2452 = vld [vmem:[#allocation2 + $0x1d4] sm:$0xf]
    %v2453 = vld [vmem:[#allocation2 + $0x1d8] sm:$0xf]
    %v2454 = vld [vmem:[#allocation2 + $0x1dc] sm:$0xf]
    %v2455 = vld [vmem:[#allocation2 + $0x1e0] sm:$0xf]
    %v2456 = vld [vmem:[#allocation2 + $0x1e4] sm:$0xf]
    %v2457 = vld [vmem:[#allocation2 + $0x1e8] sm:$0xf]
    %v2458 = vld [vmem:[#allocation2 + $0x1ec] sm:$0xf]
    %v2459 = vld [vmem:[#allocation2 + $0x1f0] sm:$0xf]
    %v2460 = vld [vmem:[#allocation2 + $0x1f4] sm:$0xf]
    %v2461 = vld [vmem:[#allocation2 + $0x1f8] sm:$0xf]
    %v2462 = vld [vmem:[#allocation2 + $0x1fc] sm:$0xf]
    %v2463 = vld [vmem:[#allocation2 + $0x200] sm:$0xf]
    %v2464 = vld [vmem:[#allocation2 + $0x204] sm:$0xf]
    %v2465 = vld [vmem:[#allocation2 + $0x208] sm:$0xf]
    %v2466 = vld [vmem:[#allocation2 + $0x20c] sm:$0xf]
    %v2467 = vld [vmem:[#allocation2 + $0x210] sm:$0xf]
    %v2468 = vld [vmem:[#allocation2 + $0x214] sm:$0xf]
    %v2469 = vld [vmem:[#allocation2 + $0x218] sm:$0xf]
    %v2470 = vld [vmem:[#allocation2 + $0x21c] sm:$0xf]
    %v2471 = vld [vmem:[#allocation2 + $0x220] sm:$0xf]
    %v2472 = vld [vmem:[#allocation2 + $0x224] sm:$0xf]
    %v2473 = vld [vmem:[#allocation2 + $0x228] sm:$0xf]
    %v2474 = vld [vmem:[#allocation2 + $0x22c] sm:$0xf]
    %v2475 = vld [vmem:[#allocation2 + $0x230] sm:$0xf]
    %v2476 = vld [vmem:[#allocation2 + $0x234] sm:$0xf]
    %v2477 = vld [vmem:[#allocation2 + $0x238] sm:$0xf]
    %v2478 = vld [vmem:[#allocation2 + $0x23c] sm:$0xf]
    %v2479 = vpack.c.b16 %v2287, %v2284
    %v2480 = vpack.c.b16 %v2288, %v2285
    %v2481 = vpack.c.b16 %v2289, %v2286
    %v2482 = vpack.c.b16 %v2290, %v2287
    %v2483 = vpack.c.b16 %v2291, %v2288
    %v2484 = vpack.c.b16 %v2292, %v2289
    %v2485 = vpack.c.b16 %v2293, %v2290
    %v2486 = vpack.c.b16 %v2294, %v2291
    %v2487 = vpack.c.b16 %v2295, %v2292
    %v2488 = vpack.c.b16 %v2296, %v2293
    %v2489 = vpack.c.b16 %v2297, %v2294
    %v2490 = vpack.c.b16 %v2298, %v2295
    %v2491 = vpack.c.b16 %v2299, %v2296
    %v2492 = vpack.c.b16 %v2300, %v2297
    %v2493 = vpack.c.b16 %v2301, %v2298
    %v2494 = vpack.c.b16 %v2302, %v2299
    %v2495 = vpack.c.b16 %v2303, %v2300
    %v2496 = vpack.c.b16 %v2304, %v2301
    %v2497 = vpack.c.b16 %v2305, %v2302
    %v2498 = vpack.c.b16 %v2306, %v2303
    %v2499 = vpack.c.b16 %v2307, %v2304
    %v2500 = vpack.c.b16 %v2308, %v2305
    %v2501 = vpack.c.b16 %v2309, %v2306
    %v2502 = vpack.c.b16 %v2310, %v2307
    %v2503 = vpack.c.b16 %v2284, %v2308
    %v2504 = vpack.c.b16 %v2285, %v2309
    %v2505 = vpack.c.b16 %v2286, %v2310
    %v2506 = vpack.c.b16 %v2311, %v2284
    %v2507 = vpack.c.b16 %v2312, %v2285
    %v2508 = vpack.c.b16 %v2313, %v2286
    %v2509 = vpack.c.b16 %v2314, %v2311
    %v2510 = vpack.c.b16 %v2315, %v2312
    %v2511 = vpack.c.b16 %v2316, %v2313
    %v2512 = vpack.c.b16 %v2317, %v2314
    %v2513 = vpack.c.b16 %v2318, %v2315
    %v2514 = vpack.c.b16 %v2319, %v2316
    %v2515 = vpack.c.b16 %v2320, %v2317
    %v2516 = vpack.c.b16 %v2321, %v2318
    %v2517 = vpack.c.b16 %v2322, %v2319
    %v2518 = vpack.c.b16 %v2323, %v2320
    %v2519 = vpack.c.b16 %v2324, %v2321
    %v2520 = vpack.c.b16 %v2325, %v2322
    %v2521 = vpack.c.b16 %v2326, %v2323
    %v2522 = vpack.c.b16 %v2327, %v2324
    %v2523 = vpack.c.b16 %v2328, %v2325
    %v2524 = vpack.c.b16 %v2329, %v2326
    %v2525 = vpack.c.b16 %v2330, %v2327
    %v2526 = vpack.c.b16 %v2331, %v2328
    %v2527 = vpack.c.b16 %v2332, %v2329
    %v2528 = vpack.c.b16 %v2333, %v2330
    %v2529 = vpack.c.b16 %v2334, %v2331
    %v2530 = vpack.c.b16 %v2284, %v2332
    %v2531 = vpack.c.b16 %v2285, %v2333
    %v2532 = vpack.c.b16 %v2286, %v2334
    %v2731 = vunpack.c.l.b16 %v2335
    %v2732 = vunpack.c.l.b16 %v2336
    %v2733 = vunpack.c.l.b16 %v2337
    %v2734 = vunpack.c.l.b16 %v2338
    %v2735 = vunpack.c.l.b16 %v2339
    %v2736 = vunpack.c.l.b16 %v2340
    %v2737 = vunpack.c.l.b16 %v2341
    %v2738 = vunpack.c.l.b16 %v2342
    %v2739 = vunpack.c.l.b16 %v2343
    %v2740 = vunpack.c.l.b16 %v2344
    %v2741 = vunpack.c.l.b16 %v2345
    %v2742 = vunpack.c.l.b16 %v2346
    %v2743 = vunpack.c.l.b16 %v2347
    %v2744 = vunpack.c.l.b16 %v2348
    %v2745 = vunpack.c.l.b16 %v2349
    %v2746 = vunpack.c.l.b16 %v2350
    %v2747 = vunpack.c.l.b16 %v2351
    %v2748 = vunpack.c.l.b16 %v2352
    %v2749 = vunpack.c.l.b16 %v2353
    %v2750 = vunpack.c.l.b16 %v2354
    %v2751 = vunpack.c.l.b16 %v2355
    %v2752 = vunpack.c.l.b16 %v2356
    %v2753 = vunpack.c.l.b16 %v2357
    %v2754 = vunpack.c.l.b16 %v2358
    %v2755 = vunpack.c.l.b16 %v2359
    %v2756 = vunpack.c.l.b16 %v2360
    %v2757 = vunpack.c.l.b16 %v2361
    %v2758 = vunpack.c.l.b16 %v2362
    %v2759 = vunpack.c.l.b16 %v2363
    %v2760 = vunpack.c.l.b16 %v2364
    %v2761 = vunpack.c.l.b16 %v2365
    %v2762 = vunpack.c.l.b16 %v2366
    %v2763 = vunpack.c.l.b16 %v2367
    %v2764 = vunpack.c.l.b16 %v2368
    %v2765 = vunpack.c.l.b16 %v2369
    %v2766 = vunpack.c.l.b16 %v2370
    %v2767 = vunpack.c.l.b16 %v2371
    %v2768 = vunpack.c.l.b16 %v2372
    %v2769 = vunpack.c.l.b16 %v2373
    %v2770 = vunpack.c.l.b16 %v2374
    %v2771 = vunpack.c.l.b16 %v2375
    %v2772 = vunpack.c.l.b16 %v2376
    %v2773 = vunpack.c.l.b16 %v2377
    %v2774 = vunpack.c.l.b16 %v2378
    %v2775 = vunpack.c.l.b16 %v2379
    %v2776 = vunpack.c.l.b16 %v2380
    %v2777 = vunpack.c.l.b16 %v2381
    %v2778 = vunpack.c.l.b16 %v2382
    %v2779 = vunpack.c.l.b16 %v2383
    %v2780 = vunpack.c.l.b16 %v2384
    %v2781 = vunpack.c.l.b16 %v2385
    %v2782 = vunpack.c.l.b16 %v2386
    %v2783 = vunpack.c.l.b16 %v2387
    %v2784 = vunpack.c.l.b16 %v2388
    %v2785 = vunpack.c.l.b16 %v2389
    %v2786 = vunpack.c.l.b16 %v2390
    %v2787 = vunpack.c.l.b16 %v2391
    %v2788 = vunpack.c.l.b16 %v2392
    %v2789 = vunpack.c.l.b16 %v2393
    %v2790 = vunpack.c.l.b16 %v2394
    %v2791 = vunpack.c.l.b16 %v2395
    %v2792 = vunpack.c.l.b16 %v2396
    %v2793 = vunpack.c.l.b16 %v2397
    %v2794 = vunpack.c.l.b16 %v2398
    %v2795 = vunpack.c.l.b16 %v2399
    %v2796 = vunpack.c.l.b16 %v2400
    %v2797 = vunpack.c.l.b16 %v2401
    %v2798 = vunpack.c.l.b16 %v2402
    %v2799 = vunpack.c.l.b16 %v2403
    %v2800 = vunpack.c.l.b16 %v2404
    %v2801 = vunpack.c.l.b16 %v2405
    %v2802 = vunpack.c.l.b16 %v2406
    %v2803 = vunpack.c.l.b16 %v2407
    %v2804 = vunpack.c.l.b16 %v2408
    %v2805 = vunpack.c.l.b16 %v2409
    %v2806 = vunpack.c.l.b16 %v2410
    %v2807 = vunpack.c.l.b16 %v2411
    %v2808 = vunpack.c.l.b16 %v2412
    %v2809 = vunpack.c.l.b16 %v2413
    %v2810 = vunpack.c.l.b16 %v2414
    %v2811 = vunpack.c.l.b16 %v2415
    %v2812 = vunpack.c.l.b16 %v2416
    %v2813 = vunpack.c.l.b16 %v2417
    %v2814 = vunpack.c.l.b16 %v2418
    %v2815 = vunpack.c.l.b16 %v2419
    %v2816 = vunpack.c.l.b16 %v2420
    %v2817 = vunpack.c.l.b16 %v2421
    %v2818 = vunpack.c.l.b16 %v2422
    %v2819 = vunpack.c.l.b16 %v2423
    %v2820 = vunpack.c.l.b16 %v2424
    %v2821 = vunpack.c.l.b16 %v2425
    %v2822 = vunpack.c.l.b16 %v2426
    %v2823 = vunpack.c.l.b16 %v2427
    %v2824 = vunpack.c.l.b16 %v2428
    %v2825 = vunpack.c.l.b16 %v2429
    %v2826 = vunpack.c.l.b16 %v2430
    %v2827 = vunpack.c.l.b16 %v2431
    %v2828 = vunpack.c.l.b16 %v2432
    %v2829 = vunpack.c.l.b16 %v2433
    %v2830 = vunpack.c.l.b16 %v2434
    %v2831 = vunpack.c.l.b16 %v2435
    %v2832 = vunpack.c.l.b16 %v2436
    %v2833 = vunpack.c.l.b16 %v2437
    %v2834 = vunpack.c.l.b16 %v2438
    %v2835 = vunpack.c.l.b16 %v2439
    %v2836 = vunpack.c.l.b16 %v2440
    %v2837 = vunpack.c.l.b16 %v2441
    %v2838 = vunpack.c.l.b16 %v2442
    %v2839 = vunpack.c.l.b16 %v2443
    %v2840 = vunpack.c.l.b16 %v2444
    %v2841 = vunpack.c.l.b16 %v2445
    %v2842 = vunpack.c.l.b16 %v2446
    %v2843 = vunpack.c.l.b16 %v2447
    %v2844 = vunpack.c.l.b16 %v2448
    %v2845 = vunpack.c.l.b16 %v2449
    %v2846 = vunpack.c.l.b16 %v2450
    %v2847 = vunpack.c.l.b16 %v2451
    %v2848 = vunpack.c.l.b16 %v2452
    %v2849 = vunpack.c.l.b16 %v2453
    %v2850 = vunpack.c.l.b16 %v2454
    %v2851 = vunpack.c.l.b16 %v2455
    %v2852 = vunpack.c.l.b16 %v2456
    %v2853 = vunpack.c.l.b16 %v2457
    %v2854 = vunpack.c.l.b16 %v2458
    %v2855 = vunpack.c.l.b16 %v2459
    %v2856 = vunpack.c.l.b16 %v2460
    %v2857 = vunpack.c.l.b16 %v2461
    %v2858 = vunpack.c.l.b16 %v2462
    %v2859 = vunpack.c.l.b16 %v2463
    %v2860 = vunpack.c.l.b16 %v2464
    %v2861 = vunpack.c.l.b16 %v2465
    %v2862 = vunpack.c.l.b16 %v2466
    %v2863 = vunpack.c.l.b16 %v2467
    %v2864 = vunpack.c.l.b16 %v2468
    %v2865 = vunpack.c.l.b16 %v2469
    %v2866 = vunpack.c.l.b16 %v2470
    %v2867 = vunpack.c.l.b16 %v2471
    %v2868 = vunpack.c.l.b16 %v2472
    %v2869 = vunpack.c.l.b16 %v2473
    %v2870 = vunpack.c.l.b16 %v2474
    %v2871 = vunpack.c.l.b16 %v2475
    %v2872 = vunpack.c.l.b16 %v2476
    %v2873 = vunpack.c.l.b16 %v2477
    %v2874 = vunpack.c.l.b16 %v2478
    %v2875 = vpack.c.b16 %v2732, %v2731
    %v2876 = vpack.c.b16 %v2734, %v2733
    %v2877 = vpack.c.b16 %v2736, %v2735
    %v2878 = vpack.c.b16 %v2738, %v2737
    %v2879 = vpack.c.b16 %v2740, %v2739
    %v2880 = vpack.c.b16 %v2742, %v2741
    %v2881 = vpack.c.b16 %v2744, %v2743
    %v2882 = vpack.c.b16 %v2746, %v2745
    %v2883 = vpack.c.b16 %v2748, %v2747
    %v2884 = vpack.c.b16 %v2750, %v2749
    %v2885 = vpack.c.b16 %v2752, %v2751
    %v2886 = vpack.c.b16 %v2754, %v2753
    %v2887 = vpack.c.b16 %v2756, %v2755
    %v2888 = vpack.c.b16 %v2758, %v2757
    %v2889 = vpack.c.b16 %v2760, %v2759
    %v2890 = vpack.c.b16 %v2762, %v2761
    %v2891 = vpack.c.b16 %v2764, %v2763
    %v2892 = vpack.c.b16 %v2766, %v2765
    %v2893 = vpack.c.b16 %v2768, %v2767
    %v2894 = vpack.c.b16 %v2770, %v2769
    %v2895 = vpack.c.b16 %v2772, %v2771
    %v2896 = vpack.c.b16 %v2774, %v2773
    %v2897 = vpack.c.b16 %v2776, %v2775
    %v2898 = vpack.c.b16 %v2778, %v2777
    %v2899 = vpack.c.b16 %v2780, %v2779
    %v2900 = vpack.c.b16 %v2782, %v2781
    %v2901 = vpack.c.b16 %v2784, %v2783
    %v2902 = vpack.c.b16 %v2786, %v2785
    %v2903 = vpack.c.b16 %v2788, %v2787
    %v2904 = vpack.c.b16 %v2790, %v2789
    %v2905 = vpack.c.b16 %v2792, %v2791
    %v2906 = vpack.c.b16 %v2794, %v2793
    %v2907 = vpack.c.b16 %v2796, %v2795
    %v2908 = vpack.c.b16 %v2798, %v2797
    %v2909 = vpack.c.b16 %v2800, %v2799
    %v2910 = vpack.c.b16 %v2802, %v2801
    %v2911 = vpack.c.b16 %v2804, %v2803
    %v2912 = vpack.c.b16 %v2806, %v2805
    %v2913 = vpack.c.b16 %v2808, %v2807
    %v2914 = vpack.c.b16 %v2810, %v2809
    %v2915 = vpack.c.b16 %v2812, %v2811
    %v2916 = vpack.c.b16 %v2814, %v2813
    %v2917 = vpack.c.b16 %v2816, %v2815
    %v2918 = vpack.c.b16 %v2818, %v2817
    %v2919 = vpack.c.b16 %v2820, %v2819
    %v2920 = vpack.c.b16 %v2822, %v2821
    %v2921 = vpack.c.b16 %v2824, %v2823
    %v2922 = vpack.c.b16 %v2826, %v2825
    %v2923 = vpack.c.b16 %v2828, %v2827
    %v2924 = vpack.c.b16 %v2830, %v2829
    %v2925 = vpack.c.b16 %v2832, %v2831
    %v2926 = vpack.c.b16 %v2834, %v2833
    %v2927 = vpack.c.b16 %v2836, %v2835
    %v2928 = vpack.c.b16 %v2838, %v2837
    %v2929 = vpack.c.b16 %v2840, %v2839
    %v2930 = vpack.c.b16 %v2842, %v2841
    %v2931 = vpack.c.b16 %v2844, %v2843
    %v2932 = vpack.c.b16 %v2846, %v2845
    %v2933 = vpack.c.b16 %v2848, %v2847
    %v2934 = vpack.c.b16 %v2850, %v2849
    %v2935 = vpack.c.b16 %v2852, %v2851
    %v2936 = vpack.c.b16 %v2854, %v2853
    %v2937 = vpack.c.b16 %v2856, %v2855
    %v2938 = vpack.c.b16 %v2858, %v2857
    %v2939 = vpack.c.b16 %v2860, %v2859
    %v2940 = vpack.c.b16 %v2862, %v2861
    %v2941 = vpack.c.b16 %v2864, %v2863
    %v2942 = vpack.c.b16 %v2866, %v2865
    %v2943 = vpack.c.b16 %v2868, %v2867
    %v2944 = vpack.c.b16 %v2870, %v2869
    %v2945 = vpack.c.b16 %v2872, %v2871
    %v2946 = vpack.c.b16 %v2874, %v2873
    %3019 = vmatprep.subr.bf16.mxu0 0
    %3020 = vmatpush1.bf16.msra.mxu0 %v2882
    %3021 = vmatprep.subr.bf16.mxu0 0
    %3022 = vmatpush1.bf16.msra.mxu0 %v2881
    %3023 = vmatprep.subr.bf16.mxu0 0
    %3024 = vmatpush1.bf16.msra.mxu0 %v2880
    %3025 = vmatprep.subr.bf16.mxu0 0
    %3026 = vmatpush1.bf16.msra.mxu0 %v2879
    %3027 = vmatprep.subr.bf16.mxu0 0
    %3028 = vmatpush1.bf16.msra.mxu0 %v2878
    %3029 = vmatprep.subr.bf16.mxu0 0
    %3030 = vmatpush1.bf16.msra.mxu0 %v2877
    %3031 = vmatprep.subr.bf16.mxu0 0
    %3032 = vmatpush1.bf16.msra.mxu0 %v2876
    %3033 = vmatprep.subr.bf16.mxu0 0
    %3034 = vmatpush1.bf16.msra.mxu0 %v2875
    %3035 = vmatprep.subr.bf16.mxu0 0
    %3036 = vmatpush2.bf16.msra.mxu0 %v2890
    %3037 = vmatprep.subr.bf16.mxu0 0
    %3038 = vmatpush2.bf16.msra.mxu0 %v2889
    %3039 = vmatprep.subr.bf16.mxu0 0
    %3040 = vmatpush2.bf16.msra.mxu0 %v2888
    %3041 = vmatprep.subr.bf16.mxu0 0
    %3042 = vmatpush2.bf16.msra.mxu0 %v2887
    %3043 = vmatprep.subr.bf16.mxu0 0
    %3044 = vmatpush2.bf16.msra.mxu0 %v2886
    %3045 = vmatprep.subr.bf16.mxu0 0
    %3046 = vmatpush2.bf16.msra.mxu0 %v2885
    %3047 = vmatprep.subr.bf16.mxu0 0
    %3048 = vmatpush2.bf16.msra.mxu0 %v2884
    %3049 = vmatprep.subr.bf16.mxu0 0
    %3050 = vmatpush2.bf16.msra.mxu0 %v2883
    %3051 = vmatprep.mubr.bf16.mxu0 %v2480
    %3052 = vmatmul.mubr.bf16.gmra.mxu0 %v2479
    %v3053 = vpop.f32.mrf.mxu0
    %v3054 = vadd.f32 0.0, %v3053
    %v3055 = vpop.f32.mrf.mxu0
    %v3056 = vpop.f32.mrf.mxu0
    %v3057 = vadd.f32 0.0, %v3056
    %v3058 = vpop.f32.mrf.mxu0
    %3059 = vmatprep.mubr.bf16.mxu0 %v2486
    %3060 = vmatmul.mubr.bf16.gmra.mxu0 %v2485
    %v3061 = vpop.f32.mrf.mxu0
    %v3062 = vadd.f32 0.0, %v3061
    %v3063 = vpop.f32.mrf.mxu0
    %v3064 = vpop.f32.mrf.mxu0
    %v3065 = vadd.f32 0.0, %v3064
    %v3066 = vpop.f32.mrf.mxu0
    %3067 = vmatprep.mubr.bf16.mxu0 %v2492
    %3068 = vmatmul.mubr.bf16.gmra.mxu0 %v2491
    %v3069 = vpop.f32.mrf.mxu0
    %v3070 = vadd.f32 0.0, %v3069
    %v3071 = vpop.f32.mrf.mxu0
    %v3072 = vpop.f32.mrf.mxu0
    %v3073 = vadd.f32 0.0, %v3072
    %v3074 = vpop.f32.mrf.mxu0
    %3075 = vmatprep.mubr.bf16.mxu0 %v2498
    %3076 = vmatmul.mubr.bf16.gmra.mxu0 %v2497
    %v3077 = vpop.f32.mrf.mxu0
    %v3078 = vadd.f32 0.0, %v3077
    %v3079 = vpop.f32.mrf.mxu0
    %v3080 = vpop.f32.mrf.mxu0
    %v3081 = vadd.f32 0.0, %v3080
    %v3082 = vpop.f32.mrf.mxu0
    %3083 = vmatprep.mubr.bf16.mxu0 %v2507
    %3084 = vmatmul.mubr.bf16.gmra.mxu0 %v2506
    %v3085 = vpop.f32.mrf.mxu0
    %v3086 = vadd.f32 0.0, %v3085
    %v3087 = vpop.f32.mrf.mxu0
    %v3088 = vpop.f32.mrf.mxu0
    %v3089 = vadd.f32 0.0, %v3088
    %v3090 = vpop.f32.mrf.mxu0
    %3091 = vmatprep.mubr.bf16.mxu0 %v2513
    %3092 = vmatmul.mubr.bf16.gmra.mxu0 %v2512
    %v3093 = vpop.f32.mrf.mxu0
    %v3094 = vadd.f32 0.0, %v3093
    %v3095 = vpop.f32.mrf.mxu0
    %v3096 = vpop.f32.mrf.mxu0
    %v3097 = vadd.f32 0.0, %v3096
    %v3098 = vpop.f32.mrf.mxu0
    %3099 = vmatprep.mubr.bf16.mxu0 %v2519
    %3100 = vmatmul.mubr.bf16.gmra.mxu0 %v2518
    %v3101 = vpop.f32.mrf.mxu0
    %v3102 = vadd.f32 0.0, %v3101
    %v3103 = vpop.f32.mrf.mxu0
    %v3104 = vpop.f32.mrf.mxu0
    %v3105 = vadd.f32 0.0, %v3104
    %v3106 = vpop.f32.mrf.mxu0
    %3107 = vmatprep.mubr.bf16.mxu0 %v2525
    %3108 = vmatmul.mubr.bf16.gmra.mxu0 %v2524
    %v3109 = vpop.f32.mrf.mxu0
    %v3110 = vadd.f32 0.0, %v3109
    %v3111 = vpop.f32.mrf.mxu0
    %v3112 = vpop.f32.mrf.mxu0
    %v3113 = vadd.f32 0.0, %v3112
    %v3114 = vpop.f32.mrf.mxu0
    %3115 = vdwg.mxu0
    %3116 = vmatprep.subr.bf16.mxu0 0
    %3117 = vmatpush1.bf16.msra.mxu0 %v2898
    %3118 = vmatprep.subr.bf16.mxu0 0
    %3119 = vmatpush1.bf16.msra.mxu0 %v2897
    %3120 = vmatprep.subr.bf16.mxu0 0
    %3121 = vmatpush1.bf16.msra.mxu0 %v2896
    %3122 = vmatprep.subr.bf16.mxu0 0
    %3123 = vmatpush1.bf16.msra.mxu0 %v2895
    %3124 = vmatprep.subr.bf16.mxu0 0
    %3125 = vmatpush1.bf16.msra.mxu0 %v2894
    %3126 = vmatprep.subr.bf16.mxu0 0
    %3127 = vmatpush1.bf16.msra.mxu0 %v2893
    %3128 = vmatprep.subr.bf16.mxu0 0
    %3129 = vmatpush1.bf16.msra.mxu0 %v2892
    %3130 = vmatprep.subr.bf16.mxu0 0
    %3131 = vmatpush1.bf16.msra.mxu0 %v2891
    %3132 = vmatprep.subr.bf16.mxu0 0
    %3133 = vmatpush2.bf16.msra.mxu0 %v2906
    %3134 = vmatprep.subr.bf16.mxu0 0
    %3135 = vmatpush2.bf16.msra.mxu0 %v2905
    %3136 = vmatprep.subr.bf16.mxu0 0
    %3137 = vmatpush2.bf16.msra.mxu0 %v2904
    %3138 = vmatprep.subr.bf16.mxu0 0
    %3139 = vmatpush2.bf16.msra.mxu0 %v2903
    %3140 = vmatprep.subr.bf16.mxu0 0
    %3141 = vmatpush2.bf16.msra.mxu0 %v2902
    %3142 = vmatprep.subr.bf16.mxu0 0
    %3143 = vmatpush2.bf16.msra.mxu0 %v2901
    %3144 = vmatprep.subr.bf16.mxu0 0
    %3145 = vmatpush2.bf16.msra.mxu0 %v2900
    %3146 = vmatprep.subr.bf16.mxu0 0
    %3147 = vmatpush2.bf16.msra.mxu0 %v2899
    %3148 = vmatprep.mubr.bf16.mxu0 %v2482
    %3149 = vmatmul.mubr.bf16.gmra.mxu0 %v2481
    %v3150 = vpop.f32.mrf.mxu0
    %v3151 = vadd.f32 %v3054, %v3150
    %v3152 = vpop.f32.mrf.mxu0
    %v3153 = vpop.f32.mrf.mxu0
    %v3154 = vadd.f32 %v3057, %v3153
    %v3155 = vpop.f32.mrf.mxu0
    %3156 = vmatprep.mubr.bf16.mxu0 %v2488
    %3157 = vmatmul.mubr.bf16.gmra.mxu0 %v2487
    %v3158 = vpop.f32.mrf.mxu0
    %v3159 = vadd.f32 %v3062, %v3158
    %v3160 = vpop.f32.mrf.mxu0
    %v3161 = vpop.f32.mrf.mxu0
    %v3162 = vadd.f32 %v3065, %v3161
    %v3163 = vpop.f32.mrf.mxu0
    %3164 = vmatprep.mubr.bf16.mxu0 %v2494
    %3165 = vmatmul.mubr.bf16.gmra.mxu0 %v2493
    %v3166 = vpop.f32.mrf.mxu0
    %v3167 = vadd.f32 %v3070, %v3166
    %v3168 = vpop.f32.mrf.mxu0
    %v3169 = vpop.f32.mrf.mxu0
    %v3170 = vadd.f32 %v3073, %v3169
    %v3171 = vpop.f32.mrf.mxu0
    %3172 = vmatprep.mubr.bf16.mxu0 %v2500
    %3173 = vmatmul.mubr.bf16.gmra.mxu0 %v2499
    %v3174 = vpop.f32.mrf.mxu0
    %v3175 = vadd.f32 %v3078, %v3174
    %v3176 = vpop.f32.mrf.mxu0
    %v3177 = vpop.f32.mrf.mxu0
    %v3178 = vadd.f32 %v3081, %v3177
    %v3179 = vpop.f32.mrf.mxu0
    %3180 = vmatprep.mubr.bf16.mxu0 %v2509
    %3181 = vmatmul.mubr.bf16.gmra.mxu0 %v2508
    %v3182 = vpop.f32.mrf.mxu0
    %v3183 = vadd.f32 %v3086, %v3182
    %v3184 = vpop.f32.mrf.mxu0
    %v3185 = vpop.f32.mrf.mxu0
    %v3186 = vadd.f32 %v3089, %v3185
    %v3187 = vpop.f32.mrf.mxu0
    %3188 = vmatprep.mubr.bf16.mxu0 %v2515
    %3189 = vmatmul.mubr.bf16.gmra.mxu0 %v2514
    %v3190 = vpop.f32.mrf.mxu0
    %v3191 = vadd.f32 %v3094, %v3190
    %v3192 = vpop.f32.mrf.mxu0
    %v3193 = vpop.f32.mrf.mxu0
    %v3194 = vadd.f32 %v3097, %v3193
    %v3195 = vpop.f32.mrf.mxu0
    %3196 = vmatprep.mubr.bf16.mxu0 %v2521
    %3197 = vmatmul.mubr.bf16.gmra.mxu0 %v2520
    %v3198 = vpop.f32.mrf.mxu0
    %v3199 = vadd.f32 %v3102, %v3198
    %v3200 = vpop.f32.mrf.mxu0
    %v3201 = vpop.f32.mrf.mxu0
    %v3202 = vadd.f32 %v3105, %v3201
    %v3203 = vpop.f32.mrf.mxu0
    %3204 = vmatprep.mubr.bf16.mxu0 %v2527
    %3205 = vmatmul.mubr.bf16.gmra.mxu0 %v2526
    %v3206 = vpop.f32.mrf.mxu0
    %v3207 = vadd.f32 %v3110, %v3206
    %v3208 = vpop.f32.mrf.mxu0
    %v3209 = vpop.f32.mrf.mxu0
    %v3210 = vadd.f32 %v3113, %v3209
    %v3211 = vpop.f32.mrf.mxu0
    %3212 = vdwg.mxu0
    %3213 = vmatprep.subr.bf16.mxu0 0
    %3214 = vmatpush1.bf16.msra.mxu0 %v2914
    %3215 = vmatprep.subr.bf16.mxu0 0
    %3216 = vmatpush1.bf16.msra.mxu0 %v2913
    %3217 = vmatprep.subr.bf16.mxu0 0
    %3218 = vmatpush1.bf16.msra.mxu0 %v2912
    %3219 = vmatprep.subr.bf16.mxu0 0
    %3220 = vmatpush1.bf16.msra.mxu0 %v2911
    %3221 = vmatprep.subr.bf16.mxu0 0
    %3222 = vmatpush1.bf16.msra.mxu0 %v2910
    %3223 = vmatprep.subr.bf16.mxu0 0
    %3224 = vmatpush1.bf16.msra.mxu0 %v2909
    %3225 = vmatprep.subr.bf16.mxu0 0
    %3226 = vmatpush1.bf16.msra.mxu0 %v2908
    %3227 = vmatprep.subr.bf16.mxu0 0
    %3228 = vmatpush1.bf16.msra.mxu0 %v2907
    %3229 = vmatprep.subr.bf16.mxu0 0
    %3230 = vmatpush2.bf16.msra.mxu0 %v2922
    %3231 = vmatprep.subr.bf16.mxu0 0
    %3232 = vmatpush2.bf16.msra.mxu0 %v2921
    %3233 = vmatprep.subr.bf16.mxu0 0
    %3234 = vmatpush2.bf16.msra.mxu0 %v2920
    %3235 = vmatprep.subr.bf16.mxu0 0
    %3236 = vmatpush2.bf16.msra.mxu0 %v2919
    %3237 = vmatprep.subr.bf16.mxu0 0
    %3238 = vmatpush2.bf16.msra.mxu0 %v2918
    %3239 = vmatprep.subr.bf16.mxu0 0
    %3240 = vmatpush2.bf16.msra.mxu0 %v2917
    %3241 = vmatprep.subr.bf16.mxu0 0
    %3242 = vmatpush2.bf16.msra.mxu0 %v2916
    %3243 = vmatprep.subr.bf16.mxu0 0
    %3244 = vmatpush2.bf16.msra.mxu0 %v2915
    %3245 = vmatprep.mubr.bf16.mxu0 %v2484
    %3246 = vmatmul.mubr.bf16.gmra.mxu0 %v2483
    %v3247 = vpop.f32.mrf.mxu0
    %v3248 = vadd.f32 %v3151, %v3247
    %v3249 = vpop.f32.mrf.mxu0
    %v3250 = vpop.f32.mrf.mxu0
    %v3251 = vadd.f32 %v3154, %v3250
    %v3252 = vpop.f32.mrf.mxu0
    %3253 = vmatprep.mubr.bf16.mxu0 %v2490
    %3254 = vmatmul.mubr.bf16.gmra.mxu0 %v2489
    %v3255 = vpop.f32.mrf.mxu0
    %v3256 = vadd.f32 %v3159, %v3255
    %v3257 = vpop.f32.mrf.mxu0
    %v3258 = vpop.f32.mrf.mxu0
    %v3259 = vadd.f32 %v3162, %v3258
    %v3260 = vpop.f32.mrf.mxu0
    %3261 = vmatprep.mubr.bf16.mxu0 %v2496
    %3262 = vmatmul.mubr.bf16.gmra.mxu0 %v2495
    %v3263 = vpop.f32.mrf.mxu0
    %v3264 = vadd.f32 %v3167, %v3263
    %v3265 = vpop.f32.mrf.mxu0
    %v3266 = vpop.f32.mrf.mxu0
    %v3267 = vadd.f32 %v3170, %v3266
    %v3268 = vpop.f32.mrf.mxu0
    %3269 = vmatprep.mubr.bf16.mxu0 %v2502
    %3270 = vmatmul.mubr.bf16.gmra.mxu0 %v2501
    %v3271 = vpop.f32.mrf.mxu0
    %v3272 = vadd.f32 %v3175, %v3271
    %v3273 = vpop.f32.mrf.mxu0
    %v3274 = vpop.f32.mrf.mxu0
    %v3275 = vadd.f32 %v3178, %v3274
    %v3276 = vpop.f32.mrf.mxu0
    %3277 = vmatprep.mubr.bf16.mxu0 %v2511
    %3278 = vmatmul.mubr.bf16.gmra.mxu0 %v2510
    %v3279 = vpop.f32.mrf.mxu0
    %v3280 = vadd.f32 %v3183, %v3279
    %v3281 = vpop.f32.mrf.mxu0
    %v3282 = vpop.f32.mrf.mxu0
    %v3283 = vadd.f32 %v3186, %v3282
    %v3284 = vpop.f32.mrf.mxu0
    %3285 = vmatprep.mubr.bf16.mxu0 %v2517
    %3286 = vmatmul.mubr.bf16.gmra.mxu0 %v2516
    %v3287 = vpop.f32.mrf.mxu0
    %v3288 = vadd.f32 %v3191, %v3287
    %v3289 = vpop.f32.mrf.mxu0
    %v3290 = vpop.f32.mrf.mxu0
    %v3291 = vadd.f32 %v3194, %v3290
    %v3292 = vpop.f32.mrf.mxu0
    %3293 = vmatprep.mubr.bf16.mxu0 %v2523
    %3294 = vmatmul.mubr.bf16.gmra.mxu0 %v2522
    %v3295 = vpop.f32.mrf.mxu0
    %v3296 = vadd.f32 %v3199, %v3295
    %v3297 = vpop.f32.mrf.mxu0
    %v3298 = vpop.f32.mrf.mxu0
    %v3299 = vadd.f32 %v3202, %v3298
    %v3300 = vpop.f32.mrf.mxu0
    %3301 = vmatprep.mubr.bf16.mxu0 %v2529
    %3302 = vmatmul.mubr.bf16.gmra.mxu0 %v2528
    %v3303 = vpop.f32.mrf.mxu0
    %v3304 = vadd.f32 %v3207, %v3303
    %v3305 = vpop.f32.mrf.mxu0
    %v3306 = vpop.f32.mrf.mxu0
    %v3307 = vadd.f32 %v3210, %v3306
    %v3308 = vpop.f32.mrf.mxu0
    %3309 = vdwg.mxu0
    %3310 = vmatprep.subr.bf16.mxu0 0
    %3311 = vmatpush1.bf16.msra.mxu0 %v2930
    %3312 = vmatprep.subr.bf16.mxu0 0
    %3313 = vmatpush1.bf16.msra.mxu0 %v2929
    %3314 = vmatprep.subr.bf16.mxu0 0
    %3315 = vmatpush1.bf16.msra.mxu0 %v2928
    %3316 = vmatprep.subr.bf16.mxu0 0
    %3317 = vmatpush1.bf16.msra.mxu0 %v2927
    %3318 = vmatprep.subr.bf16.mxu0 0
    %3319 = vmatpush1.bf16.msra.mxu0 %v2926
    %3320 = vmatprep.subr.bf16.mxu0 0
    %3321 = vmatpush1.bf16.msra.mxu0 %v2925
    %3322 = vmatprep.subr.bf16.mxu0 0
    %3323 = vmatpush1.bf16.msra.mxu0 %v2924
    %3324 = vmatprep.subr.bf16.mxu0 0
    %3325 = vmatpush1.bf16.msra.mxu0 %v2923
    %3326 = vmatprep.subr.bf16.mxu0 0
    %3327 = vmatpush2.bf16.msra.mxu0 %v2938
    %3328 = vmatprep.subr.bf16.mxu0 0
    %3329 = vmatpush2.bf16.msra.mxu0 %v2937
    %3330 = vmatprep.subr.bf16.mxu0 0
    %3331 = vmatpush2.bf16.msra.mxu0 %v2936
    %3332 = vmatprep.subr.bf16.mxu0 0
    %3333 = vmatpush2.bf16.msra.mxu0 %v2935
    %3334 = vmatprep.subr.bf16.mxu0 0
    %3335 = vmatpush2.bf16.msra.mxu0 %v2934
    %3336 = vmatprep.subr.bf16.mxu0 0
    %3337 = vmatpush2.bf16.msra.mxu0 %v2933
    %3338 = vmatprep.subr.bf16.mxu0 0
    %3339 = vmatpush2.bf16.msra.mxu0 %v2932
    %3340 = vmatprep.subr.bf16.mxu0 0
    %3341 = vmatpush2.bf16.msra.mxu0 %v2931
    %3342 = vmatprep.mubr.bf16.mxu0 %v2486
    %3343 = vmatmul.mubr.bf16.gmra.mxu0 %v2485
    %v3344 = vpop.f32.mrf.mxu0
    %v3345 = vadd.f32 %v3248, %v3344
    %v3346 = vpop.f32.mrf.mxu0
    %v3347 = vpop.f32.mrf.mxu0
    %v3348 = vadd.f32 %v3251, %v3347
    %v3349 = vpop.f32.mrf.mxu0
    %3350 = vmatprep.mubr.bf16.mxu0 %v2492
    %3351 = vmatmul.mubr.bf16.gmra.mxu0 %v2491
    %v3352 = vpop.f32.mrf.mxu0
    %v3353 = vadd.f32 %v3256, %v3352
    %v3354 = vpop.f32.mrf.mxu0
    %v3355 = vpop.f32.mrf.mxu0
    %v3356 = vadd.f32 %v3259, %v3355
    %v3357 = vpop.f32.mrf.mxu0
    %3358 = vmatprep.mubr.bf16.mxu0 %v2498
    %3359 = vmatmul.mubr.bf16.gmra.mxu0 %v2497
    %v3360 = vpop.f32.mrf.mxu0
    %v3361 = vadd.f32 %v3264, %v3360
    %v3362 = vpop.f32.mrf.mxu0
    %v3363 = vpop.f32.mrf.mxu0
    %v3364 = vadd.f32 %v3267, %v3363
    %v3365 = vpop.f32.mrf.mxu0
    %3366 = vmatprep.mubr.bf16.mxu0 %v2504
    %3367 = vmatmul.mubr.bf16.gmra.mxu0 %v2503
    %v3368 = vpop.f32.mrf.mxu0
    %v3369 = vadd.f32 %v3272, %v3368
    %v3370 = vpop.f32.mrf.mxu0
    %v3371 = vpop.f32.mrf.mxu0
    %v3372 = vadd.f32 %v3275, %v3371
    %v3373 = vpop.f32.mrf.mxu0
    %3374 = vmatprep.mubr.bf16.mxu0 %v2513
    %3375 = vmatmul.mubr.bf16.gmra.mxu0 %v2512
    %v3376 = vpop.f32.mrf.mxu0
    %v3377 = vadd.f32 %v3280, %v3376
    %v3378 = vpop.f32.mrf.mxu0
    %v3379 = vpop.f32.mrf.mxu0
    %v3380 = vadd.f32 %v3283, %v3379
    %v3381 = vpop.f32.mrf.mxu0
    %3382 = vmatprep.mubr.bf16.mxu0 %v2519
    %3383 = vmatmul.mubr.bf16.gmra.mxu0 %v2518
    %v3384 = vpop.f32.mrf.mxu0
    %v3385 = vadd.f32 %v3288, %v3384
    %v3386 = vpop.f32.mrf.mxu0
    %v3387 = vpop.f32.mrf.mxu0
    %v3388 = vadd.f32 %v3291, %v3387
    %v3389 = vpop.f32.mrf.mxu0
    %3390 = vmatprep.mubr.bf16.mxu0 %v2525
    %3391 = vmatmul.mubr.bf16.gmra.mxu0 %v2524
    %v3392 = vpop.f32.mrf.mxu0
    %v3393 = vadd.f32 %v3296, %v3392
    %v3394 = vpop.f32.mrf.mxu0
    %v3395 = vpop.f32.mrf.mxu0
    %v3396 = vadd.f32 %v3299, %v3395
    %v3397 = vpop.f32.mrf.mxu0
    %3398 = vmatprep.mubr.bf16.mxu0 %v2531
    %3399 = vmatmul.mubr.bf16.gmra.mxu0 %v2530
    %v3400 = vpop.f32.mrf.mxu0
    %v3401 = vadd.f32 %v3304, %v3400
    %v3402 = vpop.f32.mrf.mxu0
    %v3403 = vpop.f32.mrf.mxu0
    %v3404 = vadd.f32 %v3307, %v3403
    %v3405 = vpop.f32.mrf.mxu0
    %3406 = vdwg.mxu0
    %3407 = vmatprep.subr.bf16.mxu0 0
    %3408 = vmatpush1.bf16.msra.mxu0 %v2946
    %3409 = vmatprep.subr.bf16.mxu0 0
    %3410 = vmatpush1.bf16.msra.mxu0 %v2945
    %3411 = vmatprep.subr.bf16.mxu0 0
    %3412 = vmatpush1.bf16.msra.mxu0 %v2944
    %3413 = vmatprep.subr.bf16.mxu0 0
    %3414 = vmatpush1.bf16.msra.mxu0 %v2943
    %3415 = vmatprep.subr.bf16.mxu0 0
    %3416 = vmatpush1.bf16.msra.mxu0 %v2942
    %3417 = vmatprep.subr.bf16.mxu0 0
    %3418 = vmatpush1.bf16.msra.mxu0 %v2941
    %3419 = vmatprep.subr.bf16.mxu0 0
    %3420 = vmatpush1.bf16.msra.mxu0 %v2940
    %3421 = vmatprep.subr.bf16.mxu0 0
    %3422 = vmatpush1.bf16.msra.mxu0 %v2939
    %3423 = vmatprep.subr.bf16.mxu0 0
    %3424 = vmatpush2.bf16.msra.mxu0 0
    %3425 = vmatprep.subr.bf16.mxu0 0
    %3426 = vmatpush2.bf16.msra.mxu0 0
    %3427 = vmatprep.subr.bf16.mxu0 0
    %3428 = vmatpush2.bf16.msra.mxu0 0
    %3429 = vmatprep.subr.bf16.mxu0 0
    %3430 = vmatpush2.bf16.msra.mxu0 0
    %3431 = vmatprep.subr.bf16.mxu0 0
    %3432 = vmatpush2.bf16.msra.mxu0 0
    %3433 = vmatprep.subr.bf16.mxu0 0
    %3434 = vmatpush2.bf16.msra.mxu0 0
    %3435 = vmatprep.subr.bf16.mxu0 0
    %3436 = vmatpush2.bf16.msra.mxu0 0
    %3437 = vmatprep.subr.bf16.mxu0 0
    %3438 = vmatpush2.bf16.msra.mxu0 0
    %3439 = vmatprep.mubr.bf16.mxu0 0
    %3440 = vmatmul.mubr.bf16.gmra.mxu0 %v2487
    %v3441 = vpop.f32.mrf.mxu0
    %v3442 = vadd.f32 %v3345, %v3441
    %v3443 = vpop.f32.mrf.mxu0
    %v3444 = vpop.f32.mrf.mxu0
    %v3445 = vadd.f32 %v3348, %v3444
    %v3446 = vpop.f32.mrf.mxu0
    %3447 = vmatprep.mubr.bf16.mxu0 0
    %3448 = vmatmul.mubr.bf16.gmra.mxu0 %v2493
    %v3449 = vpop.f32.mrf.mxu0
    %v3450 = vadd.f32 %v3353, %v3449
    %v3451 = vpop.f32.mrf.mxu0
    %v3452 = vpop.f32.mrf.mxu0
    %v3453 = vadd.f32 %v3356, %v3452
    %v3454 = vpop.f32.mrf.mxu0
    %3455 = vmatprep.mubr.bf16.mxu0 0
    %3456 = vmatmul.mubr.bf16.gmra.mxu0 %v2499
    %v3457 = vpop.f32.mrf.mxu0
    %v3458 = vadd.f32 %v3361, %v3457
    %v3459 = vpop.f32.mrf.mxu0
    %v3460 = vpop.f32.mrf.mxu0
    %v3461 = vadd.f32 %v3364, %v3460
    %v3462 = vpop.f32.mrf.mxu0
    %3463 = vmatprep.mubr.bf16.mxu0 0
    %3464 = vmatmul.mubr.bf16.gmra.mxu0 %v2505
    %v3465 = vpop.f32.mrf.mxu0
    %v3466 = vadd.f32 %v3369, %v3465
    %v3467 = vpop.f32.mrf.mxu0
    %v3468 = vpop.f32.mrf.mxu0
    %v3469 = vadd.f32 %v3372, %v3468
    %v3470 = vpop.f32.mrf.mxu0
    %3471 = vmatprep.mubr.bf16.mxu0 0
    %3472 = vmatmul.mubr.bf16.gmra.mxu0 %v2514
    %v3473 = vpop.f32.mrf.mxu0
    %v3474 = vadd.f32 %v3377, %v3473
    %v3475 = vpop.f32.mrf.mxu0
    %v3476 = vpop.f32.mrf.mxu0
    %v3477 = vadd.f32 %v3380, %v3476
    %v3478 = vpop.f32.mrf.mxu0
    %3479 = vmatprep.mubr.bf16.mxu0 0
    %3480 = vmatmul.mubr.bf16.gmra.mxu0 %v2520
    %v3481 = vpop.f32.mrf.mxu0
    %v3482 = vadd.f32 %v3385, %v3481
    %v3483 = vpop.f32.mrf.mxu0
    %v3484 = vpop.f32.mrf.mxu0
    %v3485 = vadd.f32 %v3388, %v3484
    %v3486 = vpop.f32.mrf.mxu0
    %3487 = vmatprep.mubr.bf16.mxu0 0
    %3488 = vmatmul.mubr.bf16.gmra.mxu0 %v2526
    %v3489 = vpop.f32.mrf.mxu0
    %v3490 = vadd.f32 %v3393, %v3489
    %v3491 = vpop.f32.mrf.mxu0
    %v3492 = vpop.f32.mrf.mxu0
    %v3493 = vadd.f32 %v3396, %v3492
    %v3494 = vpop.f32.mrf.mxu0
    %3495 = vmatprep.mubr.bf16.mxu0 0
    %3496 = vmatmul.mubr.bf16.gmra.mxu0 %v2532
    %v3497 = vpop.f32.mrf.mxu0
    %v3498 = vadd.f32 %v3401, %v3497
    %v3499 = vpop.f32.mrf.mxu0
    %v3500 = vpop.f32.mrf.mxu0
    %v3501 = vadd.f32 %v3404, %v3500
    %v3502 = vpop.f32.mrf.mxu0
    %3503 = vdwg.mxu0
    %v3504 = vld [vmem:[%s8] sm:$0x1]
    %v3506 = vlaneseq
    %v3507 = vshrl.u32 %v3506, 7
    %v3508 = vsub.s32 0, %v3507
    %v3509 = vrot.slane %v3504, %v3508
    %v3511 = vmul.f32 %v3442, %v3509
    %v3512 = vmul.f32 %v3445, %v3509
    %v3513 = vmul.f32 %v3450, %v3509
    %v3514 = vmul.f32 %v3453, %v3509
    %v3515 = vmul.f32 %v3458, %v3509
    %v3516 = vmul.f32 %v3461, %v3509
    %v3517 = vmul.f32 %v3466, %v3509
    %v3518 = vmul.f32 %v3469, %v3509
    %v3519 = vmul.f32 %v3474, %v3509
    %v3520 = vmul.f32 %v3477, %v3509
    %v3521 = vmul.f32 %v3482, %v3509
    %v3522 = vmul.f32 %v3485, %v3509
    %v3523 = vmul.f32 %v3490, %v3509
    %v3524 = vmul.f32 %v3493, %v3509
    %v3525 = vmul.f32 %v3498, %v3509
    %v3526 = vmul.f32 %v3501, %v3509
    %v3527 = vld [vmem:[%s9] sm:$0x1]
    %v3529 = vlaneseq
    %v3530 = vshrl.u32 %v3529, 7
    %v3531 = vsub.s32 0, %v3530
    %v3532 = vrot.slane %v3527, %v3531
    %v3534 = vadd.f32 %v3511, %v3532
    %v3535 = vadd.f32 %v3512, %v3532
    %v3536 = vadd.f32 %v3513, %v3532
    %v3537 = vadd.f32 %v3514, %v3532
    %v3538 = vadd.f32 %v3515, %v3532
    %v3539 = vadd.f32 %v3516, %v3532
    %v3540 = vadd.f32 %v3517, %v3532
    %v3541 = vadd.f32 %v3518, %v3532
    %v3542 = vadd.f32 %v3519, %v3532
    %v3543 = vadd.f32 %v3520, %v3532
    %v3544 = vadd.f32 %v3521, %v3532
    %v3545 = vadd.f32 %v3522, %v3532
    %v3546 = vadd.f32 %v3523, %v3532
    %v3547 = vadd.f32 %v3524, %v3532
    %v3548 = vadd.f32 %v3525, %v3532
    %v3549 = vadd.f32 %v3526, %v3532
    %v3550 = vld [vmem:[%s10] sm:$0xf]
    %v3551 = vld [vmem:[%s10 + $0x4] sm:$0xf]
    %v3552 = vld [vmem:[%s10 + $0x8] sm:$0xf]
    %v3553 = vld [vmem:[%s10 + $0xc] sm:$0xf]
    %v3554 = vld [vmem:[%s10 + $0x10] sm:$0xf]
    %v3555 = vld [vmem:[%s10 + $0x14] sm:$0xf]
    %v3556 = vld [vmem:[%s10 + $0x18] sm:$0xf]
    %v3557 = vld [vmem:[%s10 + $0x1c] sm:$0xf]
    %v3558 = vld [vmem:[%s10 + $0x20] sm:$0xf]
    %v3559 = vld [vmem:[%s10 + $0x24] sm:$0xf]
    %v3560 = vld [vmem:[%s10 + $0x28] sm:$0xf]
    %v3561 = vld [vmem:[%s10 + $0x2c] sm:$0xf]
    %v3562 = vld [vmem:[%s10 + $0x30] sm:$0xf]
    %v3563 = vld [vmem:[%s10 + $0x34] sm:$0xf]
    %v3564 = vld [vmem:[%s10 + $0x38] sm:$0xf]
    %v3565 = vld [vmem:[%s10 + $0x3c] sm:$0xf]
    %v3582 = vunpack.c.l.b16 %v3550
    %v3583 = vunpack.c.l.b16 %v3551
    %v3584 = vunpack.c.l.b16 %v3552
    %v3585 = vunpack.c.l.b16 %v3553
    %v3586 = vunpack.c.l.b16 %v3554
    %v3587 = vunpack.c.l.b16 %v3555
    %v3588 = vunpack.c.l.b16 %v3556
    %v3589 = vunpack.c.l.b16 %v3557
    %v3590 = vunpack.c.l.b16 %v3558
    %v3591 = vunpack.c.l.b16 %v3559
    %v3592 = vunpack.c.l.b16 %v3560
    %v3593 = vunpack.c.l.b16 %v3561
    %v3594 = vunpack.c.l.b16 %v3562
    %v3595 = vunpack.c.l.b16 %v3563
    %v3596 = vunpack.c.l.b16 %v3564
    %v3597 = vunpack.c.l.b16 %v3565
    %v3598 = vpack.c.b16 %v3583, %v3582
    %v3599 = vpack.c.b16 %v3585, %v3584
    %v3600 = vpack.c.b16 %v3587, %v3586
    %v3601 = vpack.c.b16 %v3589, %v3588
    %v3602 = vpack.c.b16 %v3591, %v3590
    %v3603 = vpack.c.b16 %v3593, %v3592
    %v3604 = vpack.c.b16 %v3595, %v3594
    %v3605 = vpack.c.b16 %v3597, %v3596
    %3614 = vmatprep.subr.bf16.mxu0 0
    %3615 = vmatpush1.bf16.msra.mxu0 %v3605
    %3616 = vmatprep.subr.bf16.mxu0 0
    %3617 = vmatpush1.bf16.msra.mxu0 %v3604
    %3618 = vmatprep.subr.bf16.mxu0 0
    %3619 = vmatpush1.bf16.msra.mxu0 %v3603
    %3620 = vmatprep.subr.bf16.mxu0 0
    %3621 = vmatpush1.bf16.msra.mxu0 %v3602
    %3622 = vmatprep.subr.bf16.mxu0 0
    %3623 = vmatpush1.bf16.msra.mxu0 %v3601
    %3624 = vmatprep.subr.bf16.mxu0 0
    %3625 = vmatpush1.bf16.msra.mxu0 %v3600
    %3626 = vmatprep.subr.bf16.mxu0 0
    %3627 = vmatpush1.bf16.msra.mxu0 %v3599
    %3628 = vmatprep.subr.bf16.mxu0 0
    %3629 = vmatpush1.bf16.msra.mxu0 %v3598
    %3630 = vmatprep.subr.bf16.mxu0 0
    %3631 = vmatpush2.bf16.msra.mxu0 0
    %3632 = vmatprep.subr.bf16.mxu0 0
    %3633 = vmatpush2.bf16.msra.mxu0 0
    %3634 = vmatprep.subr.bf16.mxu0 0
    %3635 = vmatpush2.bf16.msra.mxu0 0
    %3636 = vmatprep.subr.bf16.mxu0 0
    %3637 = vmatpush2.bf16.msra.mxu0 0
    %3638 = vmatprep.subr.bf16.mxu0 0
    %3639 = vmatpush2.bf16.msra.mxu0 0
    %3640 = vmatprep.subr.bf16.mxu0 0
    %3641 = vmatpush2.bf16.msra.mxu0 0
    %3642 = vmatprep.subr.bf16.mxu0 0
    %3643 = vmatpush2.bf16.msra.mxu0 0
    %3644 = vmatprep.subr.bf16.mxu0 0
    %3645 = vmatpush2.bf16.msra.mxu0 0
    %3646 = vmatprep.mubr.bf16.mxu0 0
    %3647 = vmatmul.mubr.bf16.gmra.mxu0 %v820
    %v3648 = vpop.f32.mrf.mxu0
    %v3649 = vadd.f32 0.0, %v3648
    %v3650 = vpop.f32.mrf.mxu0
    %v3651 = vpop.f32.mrf.mxu0
    %v3652 = vadd.f32 0.0, %v3651
    %v3653 = vpop.f32.mrf.mxu0
    %3654 = vmatprep.mubr.bf16.mxu0 0
    %3655 = vmatmul.mubr.bf16.gmra.mxu0 %v829
    %v3656 = vpop.f32.mrf.mxu0
    %v3657 = vadd.f32 0.0, %v3656
    %v3658 = vpop.f32.mrf.mxu0
    %v3659 = vpop.f32.mrf.mxu0
    %v3660 = vadd.f32 0.0, %v3659
    %v3661 = vpop.f32.mrf.mxu0
    %3662 = vmatprep.mubr.bf16.mxu0 0
    %3663 = vmatmul.mubr.bf16.gmra.mxu0 %v838
    %v3664 = vpop.f32.mrf.mxu0
    %v3665 = vadd.f32 0.0, %v3664
    %v3666 = vpop.f32.mrf.mxu0
    %v3667 = vpop.f32.mrf.mxu0
    %v3668 = vadd.f32 0.0, %v3667
    %v3669 = vpop.f32.mrf.mxu0
    %3670 = vmatprep.mubr.bf16.mxu0 0
    %3671 = vmatmul.mubr.bf16.gmra.mxu0 %v847
    %v3672 = vpop.f32.mrf.mxu0
    %v3673 = vadd.f32 0.0, %v3672
    %v3674 = vpop.f32.mrf.mxu0
    %v3675 = vpop.f32.mrf.mxu0
    %v3676 = vadd.f32 0.0, %v3675
    %v3677 = vpop.f32.mrf.mxu0
    %3678 = vmatprep.mubr.bf16.mxu0 0
    %3679 = vmatmul.mubr.bf16.gmra.mxu0 %v856
    %v3680 = vpop.f32.mrf.mxu0
    %v3681 = vadd.f32 0.0, %v3680
    %v3682 = vpop.f32.mrf.mxu0
    %v3683 = vpop.f32.mrf.mxu0
    %v3684 = vadd.f32 0.0, %v3683
    %v3685 = vpop.f32.mrf.mxu0
    %3686 = vmatprep.mubr.bf16.mxu0 0
    %3687 = vmatmul.mubr.bf16.gmra.mxu0 %v865
    %v3688 = vpop.f32.mrf.mxu0
    %v3689 = vadd.f32 0.0, %v3688
    %v3690 = vpop.f32.mrf.mxu0
    %v3691 = vpop.f32.mrf.mxu0
    %v3692 = vadd.f32 0.0, %v3691
    %v3693 = vpop.f32.mrf.mxu0
    %3694 = vmatprep.mubr.bf16.mxu0 0
    %3695 = vmatmul.mubr.bf16.gmra.mxu0 %v874
    %v3696 = vpop.f32.mrf.mxu0
    %v3697 = vadd.f32 0.0, %v3696
    %v3698 = vpop.f32.mrf.mxu0
    %v3699 = vpop.f32.mrf.mxu0
    %v3700 = vadd.f32 0.0, %v3699
    %v3701 = vpop.f32.mrf.mxu0
    %3702 = vmatprep.mubr.bf16.mxu0 0
    %3703 = vmatmul.mubr.bf16.gmra.mxu0 %v883
    %v3704 = vpop.f32.mrf.mxu0
    %v3705 = vadd.f32 0.0, %v3704
    %v3706 = vpop.f32.mrf.mxu0
    %v3707 = vpop.f32.mrf.mxu0
    %v3708 = vadd.f32 0.0, %v3707
    %v3709 = vpop.f32.mrf.mxu0
    %3710 = vdwg.mxu0
    %v3711 = vld [vmem:[%s11] sm:$0x1]
    %v3713 = vlaneseq
    %v3714 = vshrl.u32 %v3713, 7
    %v3715 = vsub.s32 0, %v3714
    %v3716 = vrot.slane %v3711, %v3715
    %v3718 = vmul.f32 %v3649, %v3716
    %v3719 = vmul.f32 %v3652, %v3716
    %v3720 = vmul.f32 %v3657, %v3716
    %v3721 = vmul.f32 %v3660, %v3716
    %v3722 = vmul.f32 %v3665, %v3716
    %v3723 = vmul.f32 %v3668, %v3716
    %v3724 = vmul.f32 %v3673, %v3716
    %v3725 = vmul.f32 %v3676, %v3716
    %v3726 = vmul.f32 %v3681, %v3716
    %v3727 = vmul.f32 %v3684, %v3716
    %v3728 = vmul.f32 %v3689, %v3716
    %v3729 = vmul.f32 %v3692, %v3716
    %v3730 = vmul.f32 %v3697, %v3716
    %v3731 = vmul.f32 %v3700, %v3716
    %v3732 = vmul.f32 %v3705, %v3716
    %v3733 = vmul.f32 %v3708, %v3716
    %v3734 = vld [vmem:[%s12] sm:$0x1]
    %v3736 = vlaneseq
    %v3737 = vshrl.u32 %v3736, 7
    %v3738 = vsub.s32 0, %v3737
    %v3739 = vrot.slane %v3734, %v3738
    %v3741 = vadd.f32 %v3718, %v3739
    %v3742 = vadd.f32 %v3719, %v3739
    %v3743 = vadd.f32 %v3720, %v3739
    %v3744 = vadd.f32 %v3721, %v3739
    %v3745 = vadd.f32 %v3722, %v3739
    %v3746 = vadd.f32 %v3723, %v3739
    %v3747 = vadd.f32 %v3724, %v3739
    %v3748 = vadd.f32 %v3725, %v3739
    %v3749 = vadd.f32 %v3726, %v3739
    %v3750 = vadd.f32 %v3727, %v3739
    %v3751 = vadd.f32 %v3728, %v3739
    %v3752 = vadd.f32 %v3729, %v3739
    %v3753 = vadd.f32 %v3730, %v3739
    %v3754 = vadd.f32 %v3731, %v3739
    %v3755 = vadd.f32 %v3732, %v3739
    %v3756 = vadd.f32 %v3733, %v3739
    %v3757 = vadd.f32 %v3534, %v3741
    %v3758 = vadd.f32 %v3535, %v3742
    %v3759 = vadd.f32 %v3536, %v3743
    %v3760 = vadd.f32 %v3537, %v3744
    %v3761 = vadd.f32 %v3538, %v3745
    %v3762 = vadd.f32 %v3539, %v3746
    %v3763 = vadd.f32 %v3540, %v3747
    %v3764 = vadd.f32 %v3541, %v3748
    %v3765 = vadd.f32 %v3542, %v3749
    %v3766 = vadd.f32 %v3543, %v3750
    %v3767 = vadd.f32 %v3544, %v3751
    %v3768 = vadd.f32 %v3545, %v3752
    %v3769 = vadd.f32 %v3546, %v3753
    %v3770 = vadd.f32 %v3547, %v3754
    %v3771 = vadd.f32 %v3548, %v3755
    %v3772 = vadd.f32 %v3549, %v3756
    %v3773 = vmax.f32 %v3757, 0.0
    %v3774 = vmax.f32 %v3758, 0.0
    %v3775 = vmax.f32 %v3759, 0.0
    %v3776 = vmax.f32 %v3760, 0.0
    %v3777 = vmax.f32 %v3761, 0.0
    %v3778 = vmax.f32 %v3762, 0.0
    %v3779 = vmax.f32 %v3763, 0.0
    %v3780 = vmax.f32 %v3764, 0.0
    %v3781 = vmax.f32 %v3765, 0.0
    %v3782 = vmax.f32 %v3766, 0.0
    %v3783 = vmax.f32 %v3767, 0.0
    %v3784 = vmax.f32 %v3768, 0.0
    %v3785 = vmax.f32 %v3769, 0.0
    %v3786 = vmax.f32 %v3770, 0.0
    %v3787 = vmax.f32 %v3771, 0.0
    %v3788 = vmax.f32 %v3772, 0.0
    %3789 = vst [vmem:[#allocation5] sm:$0xff] %v3773
    %3790 = vst [vmem:[#allocation5 + $0x8] sm:$0xff] %v3774
    %3791 = vst [vmem:[#allocation5 + $0x10] sm:$0xff] %v3775
    %3792 = vst [vmem:[#allocation5 + $0x18] sm:$0xff] %v3776
    %3793 = vst [vmem:[#allocation5 + $0x20] sm:$0xff] %v3777
    %3794 = vst [vmem:[#allocation5 + $0x28] sm:$0xff] %v3778
    %3795 = vst [vmem:[#allocation5 + $0x30] sm:$0xff] %v3779
    %3796 = vst [vmem:[#allocation5 + $0x38] sm:$0xff] %v3780
    %3797 = vst [vmem:[#allocation5 + $0x40] sm:$0xff] %v3781
    %3798 = vst [vmem:[#allocation5 + $0x48] sm:$0xff] %v3782
    %3799 = vst [vmem:[#allocation5 + $0x50] sm:$0xff] %v3783
    %3800 = vst [vmem:[#allocation5 + $0x58] sm:$0xff] %v3784
    %3801 = vst [vmem:[#allocation5 + $0x60] sm:$0xff] %v3785
    %3802 = vst [vmem:[#allocation5 + $0x68] sm:$0xff] %v3786
    %3803 = vst [vmem:[#allocation5 + $0x70] sm:$0xff] %v3787
    %3804 = vst [vmem:[#allocation5 + $0x78] sm:$0xff] %v3788
    // Predicated region
    $region58: #{tpu_custom_call.1} parent=1 // pred_check
      _
    $region59: #{tpu_custom_call.1} parent=1 // pred_check_branch
      %3806 = sbr.rel (0) target = $region61
    $region60: #{tpu_custom_call.1} parent=1 // pred_region
      %s3808 = ssub.s32 2048, 2048
      %3809 = vsyncadd [#allocation4], %s3808
      %s3810 = sshll.u32 [#allocation5], 4
      %s3811 = int_to_ptr.vmem [resolvable:$true] %s3810
      %3816 = dma.vmem_to_hbm [thread:$0]  %s3811, 2048, %s13, [#allocation4], 128, 128, 8
    $region61: #{tpu_custom_call.1} parent=1 // pred_fallthru
      _
    // Predicated region
    $region62: #{tpu_custom_call.1} parent=1 // pred_check
      _
    $region63: #{tpu_custom_call.1} parent=1 // pred_check_branch
      %3818 = sbr.rel (0) target = $region65
    $region64: #{tpu_custom_call.1} parent=1 // pred_region
      %3819 = dma.done [#allocation4], 2048
    $region65: #{tpu_custom_call.1} parent=1 // pred_fallthru
      _
    %3820 = vsyncpa [#allocation3], 1
    %3821 = vsyncpa [#allocation4], 1

</llo_original>
